<compile_context>
chip_gen: v5e
topology: v5e:2x2
jax: 0.10.0
libtpu: 0.0.40
codegen_flags: <defaults>
</compile_context>

<pallas_src>
import functools

import jax
import jax.numpy as jnp
from jax import lax
from jax.experimental import pallas as pl
from jax.experimental.pallas import tpu as pltpu


# ----------------------------------------------------------------------------
# Tiling helpers
# ----------------------------------------------------------------------------
def _round_up(x, m):
    return ((x + m - 1) // m) * m


def _row_blocking(R, target=512):
    """Row tile (multiple of 16, <= target) and padded row count (multiple of tile)."""
    tr = min(target, _round_up(R, 16))
    return tr, _round_up(R, tr)


def _pick_time_chunk(T, max_chunk=128):
    """Largest time chunk <= max_chunk dividing T (amortizes ~600-cycle grid overhead)."""
    for tc in range(min(T, max_chunk), 0, -1):
        if T % tc == 0:
            return tc
    return 1


def _pad_rows(a, rows):
    if a.shape[0] == rows:
        return a
    return jnp.pad(a, ((0, rows - a.shape[0]),) + ((0, 0),) * (a.ndim - 1))


def _cparams(sem):
    return pltpu.CompilerParams(dimension_semantics=sem,
                                vmem_limit_bytes=32 * 1024 * 1024)


# ----------------------------------------------------------------------------
# Batched input-projection kernels (hoisted out of the recurrence).
# gi = x @ W_in + bias, where W_in packs both directions: columns [0:3H] are
# the forward-direction gates (r,z,n) and [3H:6H] the backward-direction ones.
# bias folds b_ih and, for the r/z gates, b_hh as well.  Two direction-major
# contiguous bf16 outputs (no strided DMA downstream).
# ----------------------------------------------------------------------------
def _proj1_kernel(x_ref, w_ref, bias_ref, gf_ref, gb_ref):
    acc = jnp.dot(x_ref[...], w_ref[...], preferred_element_type=jnp.float32)
    acc = acc + bias_ref[...]
    h3 = gf_ref.shape[1]
    gf_ref[...] = acc[:, :h3].astype(gf_ref.dtype)
    gb_ref[...] = acc[:, h3:].astype(gb_ref.dtype)


def _proj2_kernel(a_ref, b_ref, w_ref, bias_ref, gf_ref, gb_ref):
    # Concat([fwd, bwd]) happens in VMEM (lane-aligned), never in HBM.
    x = jnp.concatenate([a_ref[...], b_ref[...]], axis=-1)
    acc = jnp.dot(x, w_ref[...], preferred_element_type=jnp.float32)
    acc = acc + bias_ref[...]
    h3 = gf_ref.shape[1]
    gf_ref[...] = acc[:, :h3].astype(gf_ref.dtype)
    gb_ref[...] = acc[:, h3:].astype(gb_ref.dtype)


def input_projection(x_flat, w_in, bias):
    R, D = x_flat.shape
    G = w_in.shape[1]
    H3 = G // 2
    tr, Rp = _row_blocking(R)
    x_p = _pad_rows(x_flat, Rp)
    gi_f, gi_b = pl.pallas_call(
        _proj1_kernel,
        out_shape=(jax.ShapeDtypeStruct((Rp, H3), jnp.bfloat16),
                   jax.ShapeDtypeStruct((Rp, H3), jnp.bfloat16)),
        grid=(Rp // tr,),
        in_specs=[
            pl.BlockSpec((tr, D), lambda r: (r, 0)),
            pl.BlockSpec((D, G), lambda r: (0, 0)),
            pl.BlockSpec((1, G), lambda r: (0, 0)),
        ],
        out_specs=(pl.BlockSpec((tr, H3), lambda r: (r, 0)),
                   pl.BlockSpec((tr, H3), lambda r: (r, 0))),
        compiler_params=_cparams(("parallel",)),
    )(x_p, w_in, bias)
    return gi_f[:R], gi_b[:R]


def input_projection_pair(a_flat, b_flat, w_in, bias):
    R, H = a_flat.shape
    G = w_in.shape[1]
    H3 = G // 2
    tr, Rp = _row_blocking(R)
    a_p = _pad_rows(a_flat, Rp)
    b_p = _pad_rows(b_flat, Rp)
    gi_f, gi_b = pl.pallas_call(
        _proj2_kernel,
        out_shape=(jax.ShapeDtypeStruct((Rp, H3), jnp.bfloat16),
                   jax.ShapeDtypeStruct((Rp, H3), jnp.bfloat16)),
        grid=(Rp // tr,),
        in_specs=[
            pl.BlockSpec((tr, H), lambda r: (r, 0)),
            pl.BlockSpec((tr, H), lambda r: (r, 0)),
            pl.BlockSpec((2 * H, G), lambda r: (0, 0)),
            pl.BlockSpec((1, G), lambda r: (0, 0)),
        ],
        out_specs=(pl.BlockSpec((tr, H3), lambda r: (r, 0)),
                   pl.BlockSpec((tr, H3), lambda r: (r, 0))),
        compiler_params=_cparams(("parallel",)),
    )(a_p, b_p, w_in, bias)
    return gi_f[:R], gi_b[:R]


# ----------------------------------------------------------------------------
# Fused bidirectional GRU recurrence over time chunks.
# PyTorch GRU cell (gate order r, z, n), input projection + r/z recurrent
# biases already folded into gi:
#   r = sigmoid(gi_r + h W_hr)
#   z = sigmoid(gi_z + h W_hz)
#   n = tanh   (gi_n + r * (h W_hn + b_hn))
#   h' = n + z * (h - n)            (== (1-z)*n + z*h)
# ----------------------------------------------------------------------------
def _bigru_recurrence_kernel(gi_f_ref, gi_b_ref, whh_ref, bhn_f_ref, bhn_b_ref,
                             out_f_ref, out_b_ref, hf_ref, hb_ref):
    c = pl.program_id(0)

    @pl.when(c == 0)
    def _():
        hf_ref[...] = jnp.zeros_like(hf_ref)
        hb_ref[...] = jnp.zeros_like(hb_ref)

    Tc = gi_f_ref.shape[0]
    B, H = hf_ref.shape
    H3 = 3 * H

    whh = whh_ref[...]                                   # (2H, 6H) bf16 block-diagonal
    # Hoist bias broadcasts out of the time loop (no CSE of broadcast_in_dim).
    bhn_f = jnp.broadcast_to(bhn_f_ref[...], (B, H))
    bhn_b = jnp.broadcast_to(bhn_b_ref[...], (B, H))

    def cell(gi, gh, h_prev, bhn):
        gi = gi.astype(jnp.float32)
        r = jax.nn.sigmoid(gi[:, :H] + gh[:, :H])
        z = jax.nn.sigmoid(gi[:, H:2 * H] + gh[:, H:2 * H])
        n = jnp.tanh(gi[:, 2 * H:] + r * (gh[:, 2 * H:] + bhn))
        return n + z * (h_prev - n)

    def step(i, carry):
        h_f, h_b = carry
        j = Tc - 1 - i
        gi_f = gi_f_ref[i]          # fwd local time i   (global c*Tc + i)
        gi_b = gi_b_ref[j]          # bwd local time j   (global T-1 - (c*Tc + i))
        # One fused bf16 matmul per step: [h_f | h_b] @ blockdiag -> [gh_f | gh_b]
        h_cat = jnp.concatenate([h_f, h_b], axis=-1).astype(jnp.bfloat16)
        gh = jnp.dot(h_cat, whh, preferred_element_type=jnp.float32)      # (B, 6H)
        h_f = cell(gi_f, gh[:, :H3], h_f, bhn_f)
        h_b = cell(gi_b, gh[:, H3:], h_b, bhn_b)
        out_f_ref[i] = h_f.astype(out_f_ref.dtype)
        out_b_ref[j] = h_b.astype(out_b_ref.dtype)
        return h_f, h_b

    unroll = True if Tc <= 16 else 8
    h_f, h_b = lax.fori_loop(0, Tc, step, (hf_ref[...], hb_ref[...]), unroll=unroll)
    hf_ref[...] = h_f
    hb_ref[...] = h_b


def bigru_layer(gi_f, gi_b, whh, bhn_f, bhn_b):
    """gi_f/gi_b: (T, B, 3H) bf16. Returns fwd, bwd outputs (T, B, H) bf16."""
    T, B, H3 = gi_f.shape
    H = H3 // 3
    Tc = _pick_time_chunk(T)
    nc = T // Tc
    return pl.pallas_call(
        _bigru_recurrence_kernel,
        out_shape=(jax.ShapeDtypeStruct((T, B, H), jnp.bfloat16),
                   jax.ShapeDtypeStruct((T, B, H), jnp.bfloat16)),
        grid=(nc,),
        in_specs=[
            pl.BlockSpec((Tc, B, H3), lambda c: (c, 0, 0)),            # fwd gi
            pl.BlockSpec((Tc, B, H3), lambda c: (nc - 1 - c, 0, 0)),   # bwd gi
            pl.BlockSpec((2 * H, 6 * H), lambda c: (0, 0)),            # block-diag whh
            pl.BlockSpec((1, H), lambda c: (0, 0)),
            pl.BlockSpec((1, H), lambda c: (0, 0)),
        ],
        out_specs=(pl.BlockSpec((Tc, B, H), lambda c: (c, 0, 0)),
                   pl.BlockSpec((Tc, B, H), lambda c: (nc - 1 - c, 0, 0))),
        scratch_shapes=[pltpu.VMEM((B, H), jnp.float32),
                        pltpu.VMEM((B, H), jnp.float32)],
        compiler_params=_cparams(("arbitrary",)),
    )(gi_f, gi_b, whh, bhn_f, bhn_b)


# ----------------------------------------------------------------------------
# Fused head: fc1 -> fc2 -> softmax (no nonlinearity between, per the spec),
# row-tiled, class dim padded to 128 lanes (-1e30 bias on pads -> exact softmax).
# ----------------------------------------------------------------------------
def _head_kernel(a_ref, b_ref, w1a_ref, w1b_ref, b1_ref, w2_ref, b2_ref, o_ref):
    h = jnp.dot(a_ref[...], w1a_ref[...], preferred_element_type=jnp.float32)
    h = h + jnp.dot(b_ref[...], w1b_ref[...], preferred_element_type=jnp.float32)
    h = h + b1_ref[...]
    logits = jnp.dot(h.astype(jnp.bfloat16), w2_ref[...],
                     preferred_element_type=jnp.float32) + b2_ref[...]
    m = jnp.max(logits, axis=-1, keepdims=True)
    e = jnp.exp(logits - m)                    # padded classes (-1e30 bias) -> 0
    o_ref[...] = (e / jnp.sum(e, axis=-1, keepdims=True)).astype(o_ref.dtype)


def head_call(a_flat, b_flat, w1a, w1b, b1, w2p, b2p):
    R, H = a_flat.shape
    F1 = w1a.shape[1]
    Cp = w2p.shape[1]
    tr, Rp = _row_blocking(R)
    a_p = _pad_rows(a_flat, Rp)
    b_p = _pad_rows(b_flat, Rp)
    out = pl.pallas_call(
        _head_kernel,
        out_shape=jax.ShapeDtypeStruct((Rp, Cp), jnp.float32),
        grid=(Rp // tr,),
        in_specs=[
            pl.BlockSpec((tr, H), lambda r: (r, 0)),
            pl.BlockSpec((tr, H), lambda r: (r, 0)),
            pl.BlockSpec((H, F1), lambda r: (0, 0)),
            pl.BlockSpec((H, F1), lambda r: (0, 0)),
            pl.BlockSpec((1, F1), lambda r: (0, 0)),
            pl.BlockSpec((F1, Cp), lambda r: (0, 0)),
            pl.BlockSpec((1, Cp), lambda r: (0, 0)),
        ],
        out_specs=pl.BlockSpec((tr, Cp), lambda r: (r, 0)),
        compiler_params=_cparams(("parallel",)),
    )(a_p, b_p, w1a, w1b, b1, w2p, b2p)
    return out[:R]


# ----------------------------------------------------------------------------
# Parameter init (deterministic, PyTorch-style uniform(-1/sqrt(H), 1/sqrt(H)))
# and packing into the fused layouts used by the kernels.
# ----------------------------------------------------------------------------
def init_gru_raw(key, num_layers, input_size, hidden_size):
    scale = 1.0 / (hidden_size ** 0.5)
    layers = []
    for layer in range(num_layers):
        d_in = input_size if layer == 0 else 2 * hidden_size
        dirs = []
        for _direction in range(2):
            key, k1, k2, k3, k4 = jax.random.split(key, 5)
            w_ih = jax.random.uniform(k1, (d_in, 3 * hidden_size), jnp.float32, -scale, scale)
            w_hh = jax.random.uniform(k2, (hidden_size, 3 * hidden_size), jnp.float32, -scale, scale)
            b_ih = jax.random.uniform(k3, (3 * hidden_size,), jnp.float32, -scale, scale)
            b_hh = jax.random.uniform(k4, (3 * hidden_size,), jnp.float32, -scale, scale)
            dirs.append((w_ih, w_hh, b_ih, b_hh))
        layers.append(tuple(dirs))
    return key, layers


def init_linear(key, d_in, d_out):
    scale = 1.0 / (d_in ** 0.5)
    key, kw, kb = jax.random.split(key, 3)
    w = jax.random.uniform(kw, (d_in, d_out), jnp.float32, -scale, scale)
    b = jax.random.uniform(kb, (1, d_out), jnp.float32, -scale, scale)
    return key, (w, b)


def prepare_layer(dir_params, hidden_size):
    """Fold biases, pack both directions, bf16 matmul weights, block-diag whh."""
    H = hidden_size
    (wih_f, whh_f, bih_f, bhh_f), (wih_b, whh_b, bih_b, bhh_b) = dir_params

    def folded_bias(b_ih, b_hh):
        # r and z gates pre-add the recurrent bias; n keeps b_hn separate.
        return jnp.concatenate([b_ih[:2 * H] + b_hh[:2 * H], b_ih[2 * H:]])

    bias = jnp.concatenate([folded_bias(bih_f, bhh_f),
                            folded_bias(bih_b, bhh_b)]).reshape(1, 6 * H)
    w_in = jnp.concatenate([wih_f, wih_b], axis=1).astype(jnp.bfloat16)   # (D, 6H)

    whh_big = jnp.zeros((2 * H, 6 * H), jnp.float32)
    whh_big = whh_big.at[:H, :3 * H].set(whh_f).at[H:, 3 * H:].set(whh_b)

    return {
        "bias": bias.astype(jnp.float32),
        "w_in": w_in,
        "whh": whh_big.astype(jnp.bfloat16),
        "bhn_f": bhh_f[2 * H:].reshape(1, H).astype(jnp.float32),
        "bhn_b": bhh_b[2 * H:].reshape(1, H).astype(jnp.float32),
    }


def prepare_head(w1, b1, w2, b2, hidden_size, num_classes):
    H = hidden_size
    F1 = w1.shape[1]
    Cp = _round_up(max(num_classes, 1), 128)
    w2p = jnp.zeros((F1, Cp), jnp.float32).at[:, :num_classes].set(w2).astype(jnp.bfloat16)
    b2p = jnp.full((1, Cp), -1e30, jnp.float32).at[:, :num_classes].set(b2)
    return {"w1a": w1[:H].astype(jnp.bfloat16), "w1b": w1[H:].astype(jnp.bfloat16),
            "b1": b1, "w2p": w2p, "b2p": b2p}


# ----------------------------------------------------------------------------
# Full forward
# ----------------------------------------------------------------------------
@functools.partial(jax.jit, static_argnames=("num_classes",))
def stackedbigru_forward(x, layers, head, num_classes):
    # x: (seq, input_size, batch); PyTorch permutes to batch-first; identical
    # math computed seq-major: (T, B, D).
    x_tbd = jnp.transpose(x, (0, 2, 1))
    T, B, D = x_tbd.shape
    R = T * B
    H = layers[0]["bhn_f"].shape[1]

    gi_f, gi_b = input_projection(x_tbd.reshape(R, D).astype(jnp.bfloat16),
                                  layers[0]["w_in"], layers[0]["bias"])
    out_f, out_b = bigru_layer(gi_f.reshape(T, B, 3 * H), gi_b.reshape(T, B, 3 * H),
                               layers[0]["whh"], layers[0]["bhn_f"], layers[0]["bhn_b"])

    for layer in layers[1:]:
        # TODO(synk): nn.GRU inter-layer dropout (p=0.2) is train-time only;
        #             eval-mode forward semantics (identity) are reproduced.
        gi_f, gi_b = input_projection_pair(out_f.reshape(R, H), out_b.reshape(R, H),
                                           layer["w_in"], layer["bias"])
        out_f, out_b = bigru_layer(gi_f.reshape(T, B, 3 * H), gi_b.reshape(T, B, 3 * H),
                                   layer["whh"], layer["bhn_f"], layer["bhn_b"])

    probs = head_call(out_f.reshape(R, H), out_b.reshape(R, H),
                      head["w1a"], head["w1b"], head["b1"],
                      head["w2p"], head["b2p"])
    return probs[:, :num_classes].reshape(T, B, num_classes)


# ----------------------------------------------------------------------------
# Pure-JAX f32 reference (mirrors PyTorch nn.GRU eval-mode forward).
# ----------------------------------------------------------------------------
def _gru_dir_ref(x, params, reverse):
    w_ih, w_hh, b_ih, b_hh = params
    H = w_hh.shape[0]
    B = x.shape[1]

    def step(h, xt):
        gi = xt @ w_ih + b_ih
        gh = h @ w_hh + b_hh
        r = jax.nn.sigmoid(gi[:, :H] + gh[:, :H])
        z = jax.nn.sigmoid(gi[:, H:2 * H] + gh[:, H:2 * H])
        n = jnp.tanh(gi[:, 2 * H:] + r * gh[:, 2 * H:])
        h = (1.0 - z) * n + z * h
        return h, h

    xs = x[::-1] if reverse else x
    _, hs = lax.scan(step, jnp.zeros((B, H), jnp.float32), xs)
    return hs[::-1] if reverse else hs


def reference_forward(x, raw_layers, fc1, fc2):
    h = jnp.transpose(x, (0, 2, 1))   # (T, B, D)
    for fwd, bwd in raw_layers:
        h = jnp.concatenate([_gru_dir_ref(h, fwd, False),
                             _gru_dir_ref(h, bwd, True)], axis=-1)
    w1, b1 = fc1
    w2, b2 = fc2
    logits = (h @ w1 + b1) @ w2 + b2
    return jax.nn.softmax(logits, axis=-1)


if __name__ == "__main__":
    # Spec values: hidden_size=128, input_size=16, num_layers=2, num_classes=2.
    seq_len = 8
    batch = 2          # NOTE: latency-bound at B=2; pack sequences to B>=8 in prod.
    input_size = 16
    hidden_size = 128
    num_layers = 2
    num_classes = 2

    key = jax.random.PRNGKey(0)
    key, xkey = jax.random.split(key)
    x = jax.random.normal(xkey, (seq_len, input_size, batch), dtype=jnp.float32)

    key, gru1_raw = init_gru_raw(key, num_layers, input_size, hidden_size)
    key, gru2_raw = init_gru_raw(key, num_layers, 2 * hidden_size, hidden_size)
    raw_layers = list(gru1_raw) + list(gru2_raw)

    layers = [prepare_layer(raw, hidden_size) for raw in raw_layers]

    key, (w1, b1) = init_linear(key, 2 * hidden_size, 64)
    key, (w2, b2) = init_linear(key, 64, num_classes)
    head = prepare_head(w1, b1, w2, b2, hidden_size, num_classes)

    out = stackedbigru_forward(x, layers, head, num_classes=num_classes)
    out = jax.block_until_ready(out)

    assert out.shape == (seq_len, batch, num_classes), out.shape
    assert bool(jnp.all(jnp.isfinite(out)))
    row_sums = jnp.sum(out, axis=-1)
    assert bool(jnp.all(jnp.abs(row_sums - 1.0) < 1e-3)), "softmax rows must sum to 1"

    ref = reference_forward(x, raw_layers, (w1, b1), (w2, b2))
    max_err = float(jnp.max(jnp.abs(out - ref)))
    # bf16 weights/activations through 4 stacked biGRU layers vs f32 reference.
    assert max_err < 6e-2, f"mismatch vs f32 reference: {max_err}"

    print("KERNEL_OK")
</pallas_src>

<mosaic_0001>
module attributes {stable_mosaic.version = 11 : i64} {
  func.func @_proj1_kernel(%arg0: i32, %arg1: memref<16x16xbf16, #tpu.memory_space<vmem>>, %arg2: memref<16x768xbf16, #tpu.memory_space<vmem>>, %arg3: memref<1x768xf32, #tpu.memory_space<vmem>>, %arg4: memref<16x384xbf16, #tpu.memory_space<vmem>>, %arg5: memref<16x384xbf16, #tpu.memory_space<vmem>>) attributes {dimension_semantics = [#tpu.dimension_semantics<parallel>], iteration_bounds = array<i64: 1>, scalar_prefetch = 0 : i64, scratch_operands = 0 : i64, tpu.core_type = #tpu.core_type<tc>, window_params = [{transform_indices = @transform_0, window_bounds = array<i64: 16, 16>}, {pipeline_mode = #tpu.pipeline_mode<synchronous>, transform_indices = @transform_1, window_bounds = array<i64: 16, 768>}, {pipeline_mode = #tpu.pipeline_mode<synchronous>, transform_indices = @transform_2, window_bounds = array<i64: 1, 768>}, {transform_indices = @transform_3, window_bounds = array<i64: 16, 384>}, {transform_indices = @transform_4, window_bounds = array<i64: 16, 384>}]} {
    %c0 = arith.constant 0 : index
    %c0_0 = arith.constant 0 : index
    %0 = vector.load %arg1[%c0, %c0_0] : memref<16x16xbf16, #tpu.memory_space<vmem>>, vector<16x16xbf16>
    %c0_1 = arith.constant 0 : index
    %c0_2 = arith.constant 0 : index
    %1 = vector.load %arg2[%c0_1, %c0_2] : memref<16x768xbf16, #tpu.memory_space<vmem>>, vector<16x768xbf16>
    %cst = arith.constant dense<0.000000e+00> : vector<16x768xf32>
    %2 = tpu.matmul %0, %1, %cst {dimension_numbers = #tpu.dot_dimension_numbers<[1], [0], [0], [1], [0, 0, 1, 1], [], []>} : vector<16x16xbf16>, vector<16x768xbf16>, vector<16x768xf32> -> vector<16x768xf32>
    %c0_3 = arith.constant 0 : index
    %c0_4 = arith.constant 0 : index
    %3 = vector.load %arg3[%c0_3, %c0_4] : memref<1x768xf32, #tpu.memory_space<vmem>>, vector<1x768xf32>
    %4 = vector.broadcast %3 : vector<1x768xf32> to vector<16x768xf32>
    %5 = arith.addf %2, %4 : vector<16x768xf32>
    %6 = vector.extract_strided_slice %5 {offsets = [0, 0], sizes = [16, 384], strides = [1, 1]} : vector<16x768xf32> to vector<16x384xf32>
    %7 = arith.truncf %6 : vector<16x384xf32> to vector<16x384xbf16>
    %c0_5 = arith.constant 0 : index
    %c0_6 = arith.constant 0 : index
    %8 = vector.load %arg4[%c0_5, %c0_6] : memref<16x384xbf16, #tpu.memory_space<vmem>>, vector<16x384xbf16>
    tpu.vector_store %arg4[%c0_5, %c0_6], %7 {strides = array<i32>} : memref<16x384xbf16, #tpu.memory_space<vmem>>, vector<16x384xbf16>,
    %9 = vector.extract_strided_slice %5 {offsets = [0, 384], sizes = [16, 384], strides = [1, 1]} : vector<16x768xf32> to vector<16x384xf32>
    %10 = arith.truncf %9 : vector<16x384xf32> to vector<16x384xbf16>
    %c0_7 = arith.constant 0 : index
    %c0_8 = arith.constant 0 : index
    %11 = vector.load %arg5[%c0_7, %c0_8] : memref<16x384xbf16, #tpu.memory_space<vmem>>, vector<16x384xbf16>
    tpu.vector_store %arg5[%c0_7, %c0_8], %10 {strides = array<i32>} : memref<16x384xbf16, #tpu.memory_space<vmem>>, vector<16x384xbf16>,
    return
  }
  func.func @transform_0(%arg0: i32) -> (i32, i32) {
    %c0_i32 = arith.constant 0 : i32
    %c0_i32_0 = arith.constant 0 : i32
    return %arg0, %c0_i32 : i32, i32
  }
  func.func @transform_1(%arg0: i32) -> (i32, i32) {
    %c0_i32 = arith.constant 0 : i32
    %c0_i32_0 = arith.constant 0 : i32
    %c0_i32_1 = arith.constant 0 : i32
    return %c0_i32, %c0_i32_0 : i32, i32
  }
  func.func @transform_2(%arg0: i32) -> (i32, i32) {
    %c0_i32 = arith.constant 0 : i32
    %c0_i32_0 = arith.constant 0 : i32
    %c0_i32_1 = arith.constant 0 : i32
    return %c0_i32, %c0_i32_0 : i32, i32
  }
  func.func @transform_3(%arg0: i32) -> (i32, i32) {
    %c0_i32 = arith.constant 0 : i32
    %c0_i32_0 = arith.constant 0 : i32
    return %arg0, %c0_i32 : i32, i32
  }
  func.func @transform_4(%arg0: i32) -> (i32, i32) {
    %c0_i32 = arith.constant 0 : i32
    %c0_i32_0 = arith.constant 0 : i32
    return %arg0, %c0_i32 : i32, i32
  }
}

module attributes {stable_mosaic.version = 11 : i64} {
  func.func @_bigru_recurrence_kernel(%arg0: i32, %arg1: memref<8x2x384xbf16, #tpu.memory_space<vmem>>, %arg2: memref<8x2x384xbf16, #tpu.memory_space<vmem>>, %arg3: memref<256x768xbf16, #tpu.memory_space<vmem>>, %arg4: memref<1x128xf32, #tpu.memory_space<vmem>>, %arg5: memref<1x128xf32, #tpu.memory_space<vmem>>, %arg6: memref<8x2x128xbf16, #tpu.memory_space<vmem>>, %arg7: memref<8x2x128xbf16, #tpu.memory_space<vmem>>, %arg8: memref<2x128xf32, #tpu.memory_space<vmem>>, %arg9: memref<2x128xf32, #tpu.memory_space<vmem>>) attributes {dimension_semantics = [#tpu.dimension_semantics<arbitrary>], iteration_bounds = array<i64: 1>, scalar_prefetch = 0 : i64, scratch_operands = 2 : i64, tpu.core_type = #tpu.core_type<tc>, window_params = [{transform_indices = @transform_0, window_bounds = array<i64: 8, 2, 384>}, {transform_indices = @transform_1, window_bounds = array<i64: 8, 2, 384>}, {pipeline_mode = #tpu.pipeline_mode<synchronous>, transform_indices = @transform_2, window_bounds = array<i64: 256, 768>}, {pipeline_mode = #tpu.pipeline_mode<synchronous>, transform_indices = @transform_3, window_bounds = array<i64: 1, 128>}, {pipeline_mode = #tpu.pipeline_mode<synchronous>, transform_indices = @transform_4, window_bounds = array<i64: 1, 128>}, {transform_indices = @transform_5, window_bounds = array<i64: 8, 2, 128>}, {transform_indices = @transform_6, window_bounds = array<i64: 8, 2, 128>}]} {
    %c0_i32 = arith.constant 0 : i32
    %0 = arith.cmpi eq, %arg0, %c0_i32 : i32
    %1 = arith.extui %0 : i1 to i32
    %c0_i32_0 = arith.constant 0 : i32
    %2 = arith.cmpi ne, %1, %c0_i32_0 : i32
    scf.if %2 {
      %cst_126 = arith.constant 0.000000e+00 : f32
      %606 = vector.broadcast %cst_126 : f32 to vector<2x128xf32>
      %c0_127 = arith.constant 0 : index
      %c0_128 = arith.constant 0 : index
      %607 = vector.load %arg8[%c0_127, %c0_128] : memref<2x128xf32, #tpu.memory_space<vmem>>, vector<2x128xf32>
      tpu.vector_store %arg8[%c0_127, %c0_128], %606 {strides = array<i32>} : memref<2x128xf32, #tpu.memory_space<vmem>>, vector<2x128xf32>,
      %cst_129 = arith.constant 0.000000e+00 : f32
      %608 = vector.broadcast %cst_129 : f32 to vector<2x128xf32>
      %c0_130 = arith.constant 0 : index
      %c0_131 = arith.constant 0 : index
      %609 = vector.load %arg9[%c0_130, %c0_131] : memref<2x128xf32, #tpu.memory_space<vmem>>, vector<2x128xf32>
      tpu.vector_store %arg9[%c0_130, %c0_131], %608 {strides = array<i32>} : memref<2x128xf32, #tpu.memory_space<vmem>>, vector<2x128xf32>,
    } else {
    }
    %c0 = arith.constant 0 : index
    %c0_1 = arith.constant 0 : index
    %3 = vector.load %arg3[%c0, %c0_1] : memref<256x768xbf16, #tpu.memory_space<vmem>>, vector<256x768xbf16>
    %c0_2 = arith.constant 0 : index
    %c0_3 = arith.constant 0 : index
    %4 = vector.load %arg4[%c0_2, %c0_3] : memref<1x128xf32, #tpu.memory_space<vmem>>, vector<1x128xf32>
    %5 = vector.shape_cast %4 : vector<1x128xf32> to vector<1x128xf32>
    %6 = vector.broadcast %5 : vector<1x128xf32> to vector<2x128xf32>
    %c0_4 = arith.constant 0 : index
    %c0_5 = arith.constant 0 : index
    %7 = vector.load %arg5[%c0_4, %c0_5] : memref<1x128xf32, #tpu.memory_space<vmem>>, vector<1x128xf32>
    %8 = vector.shape_cast %7 : vector<1x128xf32> to vector<1x128xf32>
    %9 = vector.broadcast %8 : vector<1x128xf32> to vector<2x128xf32>
    %c0_6 = arith.constant 0 : index
    %c0_7 = arith.constant 0 : index
    %10 = vector.load %arg8[%c0_6, %c0_7] : memref<2x128xf32, #tpu.memory_space<vmem>>, vector<2x128xf32>
    %c0_8 = arith.constant 0 : index
    %c0_9 = arith.constant 0 : index
    %11 = vector.load %arg9[%c0_8, %c0_9] : memref<2x128xf32, #tpu.memory_space<vmem>>, vector<2x128xf32>
    %c0_i32_10 = arith.constant 0 : i32
    %c7_i32 = arith.constant 7 : i32
    %12 = arith.subi %c7_i32, %c0_i32_10 : i32
    %13 = arith.index_cast %c0_i32_10 : i32 to index
    %c0_11 = arith.constant 0 : index
    %c0_12 = arith.constant 0 : index
    %14 = vector.load %arg1[%13, %c0_11, %c0_12] : memref<8x2x384xbf16, #tpu.memory_space<vmem>>, vector<1x2x384xbf16>
    %15 = vector.shape_cast %14 : vector<1x2x384xbf16> to vector<2x384xbf16>
    %16 = arith.index_cast %12 : i32 to index
    %c0_13 = arith.constant 0 : index
    %c0_14 = arith.constant 0 : index
    %17 = vector.load %arg2[%16, %c0_13, %c0_14] : memref<8x2x384xbf16, #tpu.memory_space<vmem>>, vector<1x2x384xbf16>
    %18 = vector.shape_cast %17 : vector<1x2x384xbf16> to vector<2x384xbf16>
    %19 = tpu.concatenate %10, %11 in 1 : vector<2x128xf32>, vector<2x128xf32> -> vector<2x256xf32>
    %20 = arith.truncf %19 : vector<2x256xf32> to vector<2x256xbf16>
    %cst = arith.constant dense<0.000000e+00> : vector<2x768xf32>
    %21 = tpu.matmul %20, %3, %cst {dimension_numbers = #tpu.dot_dimension_numbers<[1], [0], [0], [1], [0, 0, 1, 1], [], []>} : vector<2x256xbf16>, vector<256x768xbf16>, vector<2x768xf32> -> vector<2x768xf32>
    %22 = vector.extract_strided_slice %21 {offsets = [0, 0], sizes = [2, 384], strides = [1, 1]} : vector<2x768xf32> to vector<2x384xf32>
    %23 = arith.extf %15 : vector<2x384xbf16> to vector<2x384xf32>
    %24 = vector.extract_strided_slice %23 {offsets = [0, 0], sizes = [2, 128], strides = [1, 1]} : vector<2x384xf32> to vector<2x128xf32>
    %25 = vector.extract_strided_slice %22 {offsets = [0, 0], sizes = [2, 128], strides = [1, 1]} : vector<2x384xf32> to vector<2x128xf32>
    %26 = arith.addf %24, %25 : vector<2x128xf32>
    %27 = arith.negf %26 : vector<2x128xf32>
    %28 = math.exp %27 : vector<2x128xf32>
    %cst_15 = arith.constant 1.000000e+00 : f32
    %29 = vector.broadcast %cst_15 : f32 to vector<2x128xf32>
    %30 = arith.addf %29, %28 : vector<2x128xf32>
    %31 = arith.divf %29, %30 : vector<2x128xf32>
    %32 = vector.extract_strided_slice %23 {offsets = [0, 128], sizes = [2, 128], strides = [1, 1]} : vector<2x384xf32> to vector<2x128xf32>
    %33 = vector.extract_strided_slice %22 {offsets = [0, 128], sizes = [2, 128], strides = [1, 1]} : vector<2x384xf32> to vector<2x128xf32>
    %34 = arith.addf %32, %33 : vector<2x128xf32>
    %35 = arith.negf %34 : vector<2x128xf32>
    %36 = math.exp %35 : vector<2x128xf32>
    %cst_16 = arith.constant 1.000000e+00 : f32
    %37 = vector.broadcast %cst_16 : f32 to vector<2x128xf32>
    %38 = arith.addf %37, %36 : vector<2x128xf32>
    %39 = arith.divf %37, %38 : vector<2x128xf32>
    %40 = vector.extract_strided_slice %23 {offsets = [0, 256], sizes = [2, 128], strides = [1, 1]} : vector<2x384xf32> to vector<2x128xf32>
    %41 = vector.extract_strided_slice %22 {offsets = [0, 256], sizes = [2, 128], strides = [1, 1]} : vector<2x384xf32> to vector<2x128xf32>
    %42 = arith.addf %41, %6 : vector<2x128xf32>
    %43 = arith.mulf %31, %42 : vector<2x128xf32>
    %44 = arith.addf %40, %43 : vector<2x128xf32>
    %45 = math.tanh %44 : vector<2x128xf32>
    %46 = arith.subf %10, %45 : vector<2x128xf32>
    %47 = arith.mulf %39, %46 : vector<2x128xf32>
    %48 = arith.addf %45, %47 : vector<2x128xf32>
    %49 = vector.extract_strided_slice %21 {offsets = [0, 384], sizes = [2, 384], strides = [1, 1]} : vector<2x768xf32> to vector<2x384xf32>
    %50 = arith.extf %18 : vector<2x384xbf16> to vector<2x384xf32>
    %51 = vector.extract_strided_slice %50 {offsets = [0, 0], sizes = [2, 128], strides = [1, 1]} : vector<2x384xf32> to vector<2x128xf32>
    %52 = vector.extract_strided_slice %49 {offsets = [0, 0], sizes = [2, 128], strides = [1, 1]} : vector<2x384xf32> to vector<2x128xf32>
    %53 = arith.addf %51, %52 : vector<2x128xf32>
    %54 = arith.negf %53 : vector<2x128xf32>
    %55 = math.exp %54 : vector<2x128xf32>
    %cst_17 = arith.constant 1.000000e+00 : f32
    %56 = vector.broadcast %cst_17 : f32 to vector<2x128xf32>
    %57 = arith.addf %56, %55 : vector<2x128xf32>
    %58 = arith.divf %56, %57 : vector<2x128xf32>
    %59 = vector.extract_strided_slice %50 {offsets = [0, 128], sizes = [2, 128], strides = [1, 1]} : vector<2x384xf32> to vector<2x128xf32>
    %60 = vector.extract_strided_slice %49 {offsets = [0, 128], sizes = [2, 128], strides = [1, 1]} : vector<2x384xf32> to vector<2x128xf32>
    %61 = arith.addf %59, %60 : vector<2x128xf32>
    %62 = arith.negf %61 : vector<2x128xf32>
    %63 = math.exp %62 : vector<2x128xf32>
    %cst_18 = arith.constant 1.000000e+00 : f32
    %64 = vector.broadcast %cst_18 : f32 to vector<2x128xf32>
    %65 = arith.addf %64, %63 : vector<2x128xf32>
    %66 = arith.divf %64, %65 : vector<2x128xf32>
    %67 = vector.extract_strided_slice %50 {offsets = [0, 256], sizes = [2, 128], strides = [1, 1]} : vector<2x384xf32> to vector<2x128xf32>
    %68 = vector.extract_strided_slice %49 {offsets = [0, 256], sizes = [2, 128], strides = [1, 1]} : vector<2x384xf32> to vector<2x128xf32>
    %69 = arith.addf %68, %9 : vector<2x128xf32>
    %70 = arith.mulf %58, %69 : vector<2x128xf32>
    %71 = arith.addf %67, %70 : vector<2x128xf32>
    %72 = math.tanh %71 : vector<2x128xf32>
    %73 = arith.subf %11, %72 : vector<2x128xf32>
    %74 = arith.mulf %66, %73 : vector<2x128xf32>
    %75 = arith.addf %72, %74 : vector<2x128xf32>
    %76 = arith.truncf %48 : vector<2x128xf32> to vector<2x128xbf16>
    %77 = arith.index_cast %c0_i32_10 : i32 to index
    %c0_19 = arith.constant 0 : index
    %c0_20 = arith.constant 0 : index
    %78 = vector.load %arg6[%77, %c0_19, %c0_20] : memref<8x2x128xbf16, #tpu.memory_space<vmem>>, vector<1x2x128xbf16>
    %79 = vector.shape_cast %78 : vector<1x2x128xbf16> to vector<2x128xbf16>
    %80 = vector.shape_cast %76 : vector<2x128xbf16> to vector<1x2x128xbf16>
    tpu.vector_store %arg6[%77, %c0_19, %c0_20], %80 {strides = array<i32>} : memref<8x2x128xbf16, #tpu.memory_space<vmem>>, vector<1x2x128xbf16>,
    %81 = arith.truncf %75 : vector<2x128xf32> to vector<2x128xbf16>
    %82 = arith.index_cast %12 : i32 to index
    %c0_21 = arith.constant 0 : index
    %c0_22 = arith.constant 0 : index
    %83 = vector.load %arg7[%82, %c0_21, %c0_22] : memref<8x2x128xbf16, #tpu.memory_space<vmem>>, vector<1x2x128xbf16>
    %84 = vector.shape_cast %83 : vector<1x2x128xbf16> to vector<2x128xbf16>
    %85 = vector.shape_cast %81 : vector<2x128xbf16> to vector<1x2x128xbf16>
    tpu.vector_store %arg7[%82, %c0_21, %c0_22], %85 {strides = array<i32>} : memref<8x2x128xbf16, #tpu.memory_space<vmem>>, vector<1x2x128xbf16>,
    %c1_i32 = arith.constant 1 : i32
    %c7_i32_23 = arith.constant 7 : i32
    %86 = arith.subi %c7_i32_23, %c1_i32 : i32
    %87 = arith.index_cast %c1_i32 : i32 to index
    %c0_24 = arith.constant 0 : index
    %c0_25 = arith.constant 0 : index
    %88 = vector.load %arg1[%87, %c0_24, %c0_25] : memref<8x2x384xbf16, #tpu.memory_space<vmem>>, vector<1x2x384xbf16>
    %89 = vector.shape_cast %88 : vector<1x2x384xbf16> to vector<2x384xbf16>
    %90 = arith.index_cast %86 : i32 to index
    %c0_26 = arith.constant 0 : index
    %c0_27 = arith.constant 0 : index
    %91 = vector.load %arg2[%90, %c0_26, %c0_27] : memref<8x2x384xbf16, #tpu.memory_space<vmem>>, vector<1x2x384xbf16>
    %92 = vector.shape_cast %91 : vector<1x2x384xbf16> to vector<2x384xbf16>
    %93 = tpu.concatenate %48, %75 in 1 : vector<2x128xf32>, vector<2x128xf32> -> vector<2x256xf32>
    %94 = arith.truncf %93 : vector<2x256xf32> to vector<2x256xbf16>
    %cst_28 = arith.constant dense<0.000000e+00> : vector<2x768xf32>
    %95 = tpu.matmul %94, %3, %cst_28 {dimension_numbers = #tpu.dot_dimension_numbers<[1], [0], [0], [1], [0, 0, 1, 1], [], []>} : vector<2x256xbf16>, vector<256x768xbf16>, vector<2x768xf32> -> vector<2x768xf32>
    %96 = vector.extract_strided_slice %95 {offsets = [0, 0], sizes = [2, 384], strides = [1, 1]} : vector<2x768xf32> to vector<2x384xf32>
    %97 = arith.extf %89 : vector<2x384xbf16> to vector<2x384xf32>
    %98 = vector.extract_strided_slice %97 {offsets = [0, 0], sizes = [2, 128], strides = [1, 1]} : vector<2x384xf32> to vector<2x128xf32>
    %99 = vector.extract_strided_slice %96 {offsets = [0, 0], sizes = [2, 128], strides = [1, 1]} : vector<2x384xf32> to vector<2x128xf32>
    %100 = arith.addf %98, %99 : vector<2x128xf32>
    %101 = arith.negf %100 : vector<2x128xf32>
    %102 = math.exp %101 : vector<2x128xf32>
    %cst_29 = arith.constant 1.000000e+00 : f32
    %103 = vector.broadcast %cst_29 : f32 to vector<2x128xf32>
    %104 = arith.addf %103, %102 : vector<2x128xf32>
    %105 = arith.divf %103, %104 : vector<2x128xf32>
    %106 = vector.extract_strided_slice %97 {offsets = [0, 128], sizes = [2, 128], strides = [1, 1]} : vector<2x384xf32> to vector<2x128xf32>
    %107 = vector.extract_strided_slice %96 {offsets = [0, 128], sizes = [2, 128], strides = [1, 1]} : vector<2x384xf32> to vector<2x128xf32>
    %108 = arith.addf %106, %107 : vector<2x128xf32>
    %109 = arith.negf %108 : vector<2x128xf32>
    %110 = math.exp %109 : vector<2x128xf32>
    %cst_30 = arith.constant 1.000000e+00 : f32
    %111 = vector.broadcast %cst_30 : f32 to vector<2x128xf32>
    %112 = arith.addf %111, %110 : vector<2x128xf32>
    %113 = arith.divf %111, %112 : vector<2x128xf32>
    %114 = vector.extract_strided_slice %97 {offsets = [0, 256], sizes = [2, 128], strides = [1, 1]} : vector<2x384xf32> to vector<2x128xf32>
    %115 = vector.extract_strided_slice %96 {offsets = [0, 256], sizes = [2, 128], strides = [1, 1]} : vector<2x384xf32> to vector<2x128xf32>
    %116 = arith.addf %115, %6 : vector<2x128xf32>
    %117 = arith.mulf %105, %116 : vector<2x128xf32>
    %118 = arith.addf %114, %117 : vector<2x128xf32>
    %119 = math.tanh %118 : vector<2x128xf32>
    %120 = arith.subf %48, %119 : vector<2x128xf32>
    %121 = arith.mulf %113, %120 : vector<2x128xf32>
    %122 = arith.addf %119, %121 : vector<2x128xf32>
    %123 = vector.extract_strided_slice %95 {offsets = [0, 384], sizes = [2, 384], strides = [1, 1]} : vector<2x768xf32> to vector<2x384xf32>
    %124 = arith.extf %92 : vector<2x384xbf16> to vector<2x384xf32>
    %125 = vector.extract_strided_slice %124 {offsets = [0, 0], sizes = [2, 128], strides = [1, 1]} : vector<2x384xf32> to vector<2x128xf32>
    %126 = vector.extract_strided_slice %123 {offsets = [0, 0], sizes = [2, 128], strides = [1, 1]} : vector<2x384xf32> to vector<2x128xf32>
    %127 = arith.addf %125, %126 : vector<2x128xf32>
    %128 = arith.negf %127 : vector<2x128xf32>
    %129 = math.exp %128 : vector<2x128xf32>
    %cst_31 = arith.constant 1.000000e+00 : f32
    %130 = vector.broadcast %cst_31 : f32 to vector<2x128xf32>
    %131 = arith.addf %130, %129 : vector<2x128xf32>
    %132 = arith.divf %130, %131 : vector<2x128xf32>
    %133 = vector.extract_strided_slice %124 {offsets = [0, 128], sizes = [2, 128], strides = [1, 1]} : vector<2x384xf32> to vector<2x128xf32>
    %134 = vector.extract_strided_slice %123 {offsets = [0, 128], sizes = [2, 128], strides = [1, 1]} : vector<2x384xf32> to vector<2x128xf32>
    %135 = arith.addf %133, %134 : vector<2x128xf32>
    %136 = arith.negf %135 : vector<2x128xf32>
    %137 = math.exp %136 : vector<2x128xf32>
    %cst_32 = arith.constant 1.000000e+00 : f32
    %138 = vector.broadcast %cst_32 : f32 to vector<2x128xf32>
    %139 = arith.addf %138, %137 : vector<2x128xf32>
    %140 = arith.divf %138, %139 : vector<2x128xf32>
    %141 = vector.extract_strided_slice %124 {offsets = [0, 256], sizes = [2, 128], strides = [1, 1]} : vector<2x384xf32> to vector<2x128xf32>
    %142 = vector.extract_strided_slice %123 {offsets = [0, 256], sizes = [2, 128], strides = [1, 1]} : vector<2x384xf32> to vector<2x128xf32>
    %143 = arith.addf %142, %9 : vector<2x128xf32>
    %144 = arith.mulf %132, %143 : vector<2x128xf32>
    %145 = arith.addf %141, %144 : vector<2x128xf32>
    %146 = math.tanh %145 : vector<2x128xf32>
    %147 = arith.subf %75, %146 : vector<2x128xf32>
    %148 = arith.mulf %140, %147 : vector<2x128xf32>
    %149 = arith.addf %146, %148 : vector<2x128xf32>
    %150 = arith.truncf %122 : vector<2x128xf32> to vector<2x128xbf16>
    %151 = arith.index_cast %c1_i32 : i32 to index
    %c0_33 = arith.constant 0 : index
    %c0_34 = arith.constant 0 : index
    %152 = vector.load %arg6[%151, %c0_33, %c0_34] : memref<8x2x128xbf16, #tpu.memory_space<vmem>>, vector<1x2x128xbf16>
    %153 = vector.shape_cast %152 : vector<1x2x128xbf16> to vector<2x128xbf16>
    %154 = vector.shape_cast %150 : vector<2x128xbf16> to vector<1x2x128xbf16>
    tpu.vector_store %arg6[%151, %c0_33, %c0_34], %154 {strides = array<i32>} : memref<8x2x128xbf16, #tpu.memory_space<vmem>>, vector<1x2x128xbf16>,
    %155 = arith.truncf %149 : vector<2x128xf32> to vector<2x128xbf16>
    %156 = arith.index_cast %86 : i32 to index
    %c0_35 = arith.constant 0 : index
    %c0_36 = arith.constant 0 : index
    %157 = vector.load %arg7[%156, %c0_35, %c0_36] : memref<8x2x128xbf16, #tpu.memory_space<vmem>>, vector<1x2x128xbf16>
    %158 = vector.shape_cast %157 : vector<1x2x128xbf16> to vector<2x128xbf16>
    %159 = vector.shape_cast %155 : vector<2x128xbf16> to vector<1x2x128xbf16>
    tpu.vector_store %arg7[%156, %c0_35, %c0_36], %159 {strides = array<i32>} : memref<8x2x128xbf16, #tpu.memory_space<vmem>>, vector<1x2x128xbf16>,
    %c2_i32 = arith.constant 2 : i32
    %c7_i32_37 = arith.constant 7 : i32
    %160 = arith.subi %c7_i32_37, %c2_i32 : i32
    %161 = arith.index_cast %c2_i32 : i32 to index
    %c0_38 = arith.constant 0 : index
    %c0_39 = arith.constant 0 : index
    %162 = vector.load %arg1[%161, %c0_38, %c0_39] : memref<8x2x384xbf16, #tpu.memory_space<vmem>>, vector<1x2x384xbf16>
    %163 = vector.shape_cast %162 : vector<1x2x384xbf16> to vector<2x384xbf16>
    %164 = arith.index_cast %160 : i32 to index
    %c0_40 = arith.constant 0 : index
    %c0_41 = arith.constant 0 : index
    %165 = vector.load %arg2[%164, %c0_40, %c0_41] : memref<8x2x384xbf16, #tpu.memory_space<vmem>>, vector<1x2x384xbf16>
    %166 = vector.shape_cast %165 : vector<1x2x384xbf16> to vector<2x384xbf16>
    %167 = tpu.concatenate %122, %149 in 1 : vector<2x128xf32>, vector<2x128xf32> -> vector<2x256xf32>
    %168 = arith.truncf %167 : vector<2x256xf32> to vector<2x256xbf16>
    %cst_42 = arith.constant dense<0.000000e+00> : vector<2x768xf32>
    %169 = tpu.matmul %168, %3, %cst_42 {dimension_numbers = #tpu.dot_dimension_numbers<[1], [0], [0], [1], [0, 0, 1, 1], [], []>} : vector<2x256xbf16>, vector<256x768xbf16>, vector<2x768xf32> -> vector<2x768xf32>
    %170 = vector.extract_strided_slice %169 {offsets = [0, 0], sizes = [2, 384], strides = [1, 1]} : vector<2x768xf32> to vector<2x384xf32>
    %171 = arith.extf %163 : vector<2x384xbf16> to vector<2x384xf32>
    %172 = vector.extract_strided_slice %171 {offsets = [0, 0], sizes = [2, 128], strides = [1, 1]} : vector<2x384xf32> to vector<2x128xf32>
    %173 = vector.extract_strided_slice %170 {offsets = [0, 0], sizes = [2, 128], strides = [1, 1]} : vector<2x384xf32> to vector<2x128xf32>
    %174 = arith.addf %172, %173 : vector<2x128xf32>
    %175 = arith.negf %174 : vector<2x128xf32>
    %176 = math.exp %175 : vector<2x128xf32>
    %cst_43 = arith.constant 1.000000e+00 : f32
    %177 = vector.broadcast %cst_43 : f32 to vector<2x128xf32>
    %178 = arith.addf %177, %176 : vector<2x128xf32>
    %179 = arith.divf %177, %178 : vector<2x128xf32>
    %180 = vector.extract_strided_slice %171 {offsets = [0, 128], sizes = [2, 128], strides = [1, 1]} : vector<2x384xf32> to vector<2x128xf32>
    %181 = vector.extract_strided_slice %170 {offsets = [0, 128], sizes = [2, 128], strides = [1, 1]} : vector<2x384xf32> to vector<2x128xf32>
    %182 = arith.addf %180, %181 : vector<2x128xf32>
    %183 = arith.negf %182 : vector<2x128xf32>
    %184 = math.exp %183 : vector<2x128xf32>
    %cst_44 = arith.constant 1.000000e+00 : f32
    %185 = vector.broadcast %cst_44 : f32 to vector<2x128xf32>
    %186 = arith.addf %185, %184 : vector<2x128xf32>
    %187 = arith.divf %185, %186 : vector<2x128xf32>
    %188 = vector.extract_strided_slice %171 {offsets = [0, 256], sizes = [2, 128], strides = [1, 1]} : vector<2x384xf32> to vector<2x128xf32>
    %189 = vector.extract_strided_slice %170 {offsets = [0, 256], sizes = [2, 128], strides = [1, 1]} : vector<2x384xf32> to vector<2x128xf32>
    %190 = arith.addf %189, %6 : vector<2x128xf32>
    %191 = arith.mulf %179, %190 : vector<2x128xf32>
    %192 = arith.addf %188, %191 : vector<2x128xf32>
    %193 = math.tanh %192 : vector<2x128xf32>
    %194 = arith.subf %122, %193 : vector<2x128xf32>
    %195 = arith.mulf %187, %194 : vector<2x128xf32>
    %196 = arith.addf %193, %195 : vector<2x128xf32>
    %197 = vector.extract_strided_slice %169 {offsets = [0, 384], sizes = [2, 384], strides = [1, 1]} : vector<2x768xf32> to vector<2x384xf32>
    %198 = arith.extf %166 : vector<2x384xbf16> to vector<2x384xf32>
    %199 = vector.extract_strided_slice %198 {offsets = [0, 0], sizes = [2, 128], strides = [1, 1]} : vector<2x384xf32> to vector<2x128xf32>
    %200 = vector.extract_strided_slice %197 {offsets = [0, 0], sizes = [2, 128], strides = [1, 1]} : vector<2x384xf32> to vector<2x128xf32>
    %201 = arith.addf %199, %200 : vector<2x128xf32>
    %202 = arith.negf %201 : vector<2x128xf32>
    %203 = math.exp %202 : vector<2x128xf32>
    %cst_45 = arith.constant 1.000000e+00 : f32
    %204 = vector.broadcast %cst_45 : f32 to vector<2x128xf32>
    %205 = arith.addf %204, %203 : vector<2x128xf32>
    %206 = arith.divf %204, %205 : vector<2x128xf32>
    %207 = vector.extract_strided_slice %198 {offsets = [0, 128], sizes = [2, 128], strides = [1, 1]} : vector<2x384xf32> to vector<2x128xf32>
    %208 = vector.extract_strided_slice %197 {offsets = [0, 128], sizes = [2, 128], strides = [1, 1]} : vector<2x384xf32> to vector<2x128xf32>
    %209 = arith.addf %207, %208 : vector<2x128xf32>
    %210 = arith.negf %209 : vector<2x128xf32>
    %211 = math.exp %210 : vector<2x128xf32>
    %cst_46 = arith.constant 1.000000e+00 : f32
    %212 = vector.broadcast %cst_46 : f32 to vector<2x128xf32>
    %213 = arith.addf %212, %211 : vector<2x128xf32>
    %214 = arith.divf %212, %213 : vector<2x128xf32>
    %215 = vector.extract_strided_slice %198 {offsets = [0, 256], sizes = [2, 128], strides = [1, 1]} : vector<2x384xf32> to vector<2x128xf32>
    %216 = vector.extract_strided_slice %197 {offsets = [0, 256], sizes = [2, 128], strides = [1, 1]} : vector<2x384xf32> to vector<2x128xf32>
    %217 = arith.addf %216, %9 : vector<2x128xf32>
    %218 = arith.mulf %206, %217 : vector<2x128xf32>
    %219 = arith.addf %215, %218 : vector<2x128xf32>
    %220 = math.tanh %219 : vector<2x128xf32>
    %221 = arith.subf %149, %220 : vector<2x128xf32>
    %222 = arith.mulf %214, %221 : vector<2x128xf32>
    %223 = arith.addf %220, %222 : vector<2x128xf32>
    %224 = arith.truncf %196 : vector<2x128xf32> to vector<2x128xbf16>
    %225 = arith.index_cast %c2_i32 : i32 to index
    %c0_47 = arith.constant 0 : index
    %c0_48 = arith.constant 0 : index
    %226 = vector.load %arg6[%225, %c0_47, %c0_48] : memref<8x2x128xbf16, #tpu.memory_space<vmem>>, vector<1x2x128xbf16>
    %227 = vector.shape_cast %226 : vector<1x2x128xbf16> to vector<2x128xbf16>
    %228 = vector.shape_cast %224 : vector<2x128xbf16> to vector<1x2x128xbf16>
    tpu.vector_store %arg6[%225, %c0_47, %c0_48], %228 {strides = array<i32>} : memref<8x2x128xbf16, #tpu.memory_space<vmem>>, vector<1x2x128xbf16>,
    %229 = arith.truncf %223 : vector<2x128xf32> to vector<2x128xbf16>
    %230 = arith.index_cast %160 : i32 to index
    %c0_49 = arith.constant 0 : index
    %c0_50 = arith.constant 0 : index
    %231 = vector.load %arg7[%230, %c0_49, %c0_50] : memref<8x2x128xbf16, #tpu.memory_space<vmem>>, vector<1x2x128xbf16>
    %232 = vector.shape_cast %231 : vector<1x2x128xbf16> to vector<2x128xbf16>
    %233 = vector.shape_cast %229 : vector<2x128xbf16> to vector<1x2x128xbf16>
    tpu.vector_store %arg7[%230, %c0_49, %c0_50], %233 {strides = array<i32>} : memref<8x2x128xbf16, #tpu.memory_space<vmem>>, vector<1x2x128xbf16>,
    %c3_i32 = arith.constant 3 : i32
    %c7_i32_51 = arith.constant 7 : i32
    %234 = arith.subi %c7_i32_51, %c3_i32 : i32
    %235 = arith.index_cast %c3_i32 : i32 to index
    %c0_52 = arith.constant 0 : index
    %c0_53 = arith.constant 0 : index
    %236 = vector.load %arg1[%235, %c0_52, %c0_53] : memref<8x2x384xbf16, #tpu.memory_space<vmem>>, vector<1x2x384xbf16>
    %237 = vector.shape_cast %236 : vector<1x2x384xbf16> to vector<2x384xbf16>
    %238 = arith.index_cast %234 : i32 to index
    %c0_54 = arith.constant 0 : index
    %c0_55 = arith.constant 0 : index
    %239 = vector.load %arg2[%238, %c0_54, %c0_55] : memref<8x2x384xbf16, #tpu.memory_space<vmem>>, vector<1x2x384xbf16>
    %240 = vector.shape_cast %239 : vector<1x2x384xbf16> to vector<2x384xbf16>
    %241 = tpu.concatenate %196, %223 in 1 : vector<2x128xf32>, vector<2x128xf32> -> vector<2x256xf32>
    %242 = arith.truncf %241 : vector<2x256xf32> to vector<2x256xbf16>
    %cst_56 = arith.constant dense<0.000000e+00> : vector<2x768xf32>
    %243 = tpu.matmul %242, %3, %cst_56 {dimension_numbers = #tpu.dot_dimension_numbers<[1], [0], [0], [1], [0, 0, 1, 1], [], []>} : vector<2x256xbf16>, vector<256x768xbf16>, vector<2x768xf32> -> vector<2x768xf32>
    %244 = vector.extract_strided_slice %243 {offsets = [0, 0], sizes = [2, 384], strides = [1, 1]} : vector<2x768xf32> to vector<2x384xf32>
    %245 = arith.extf %237 : vector<2x384xbf16> to vector<2x384xf32>
    %246 = vector.extract_strided_slice %245 {offsets = [0, 0], sizes = [2, 128], strides = [1, 1]} : vector<2x384xf32> to vector<2x128xf32>
    %247 = vector.extract_strided_slice %244 {offsets = [0, 0], sizes = [2, 128], strides = [1, 1]} : vector<2x384xf32> to vector<2x128xf32>
    %248 = arith.addf %246, %247 : vector<2x128xf32>
    %249 = arith.negf %248 : vector<2x128xf32>
    %250 = math.exp %249 : vector<2x128xf32>
    %cst_57 = arith.constant 1.000000e+00 : f32
    %251 = vector.broadcast %cst_57 : f32 to vector<2x128xf32>
    %252 = arith.addf %251, %250 : vector<2x128xf32>
    %253 = arith.divf %251, %252 : vector<2x128xf32>
    %254 = vector.extract_strided_slice %245 {offsets = [0, 128], sizes = [2, 128], strides = [1, 1]} : vector<2x384xf32> to vector<2x128xf32>
    %255 = vector.extract_strided_slice %244 {offsets = [0, 128], sizes = [2, 128], strides = [1, 1]} : vector<2x384xf32> to vector<2x128xf32>
    %256 = arith.addf %254, %255 : vector<2x128xf32>
    %257 = arith.negf %256 : vector<2x128xf32>
    %258 = math.exp %257 : vector<2x128xf32>
    %cst_58 = arith.constant 1.000000e+00 : f32
    %259 = vector.broadcast %cst_58 : f32 to vector<2x128xf32>
    %260 = arith.addf %259, %258 : vector<2x128xf32>
    %261 = arith.divf %259, %260 : vector<2x128xf32>
    %262 = vector.extract_strided_slice %245 {offsets = [0, 256], sizes = [2, 128], strides = [1, 1]} : vector<2x384xf32> to vector<2x128xf32>
    %263 = vector.extract_strided_slice %244 {offsets = [0, 256], sizes = [2, 128], strides = [1, 1]} : vector<2x384xf32> to vector<2x128xf32>
    %264 = arith.addf %263, %6 : vector<2x128xf32>
    %265 = arith.mulf %253, %264 : vector<2x128xf32>
    %266 = arith.addf %262, %265 : vector<2x128xf32>
    %267 = math.tanh %266 : vector<2x128xf32>
    %268 = arith.subf %196, %267 : vector<2x128xf32>
    %269 = arith.mulf %261, %268 : vector<2x128xf32>
    %270 = arith.addf %267, %269 : vector<2x128xf32>
    %271 = vector.extract_strided_slice %243 {offsets = [0, 384], sizes = [2, 384], strides = [1, 1]} : vector<2x768xf32> to vector<2x384xf32>
    %272 = arith.extf %240 : vector<2x384xbf16> to vector<2x384xf32>
    %273 = vector.extract_strided_slice %272 {offsets = [0, 0], sizes = [2, 128], strides = [1, 1]} : vector<2x384xf32> to vector<2x128xf32>
    %274 = vector.extract_strided_slice %271 {offsets = [0, 0], sizes = [2, 128], strides = [1, 1]} : vector<2x384xf32> to vector<2x128xf32>
    %275 = arith.addf %273, %274 : vector<2x128xf32>
    %276 = arith.negf %275 : vector<2x128xf32>
    %277 = math.exp %276 : vector<2x128xf32>
    %cst_59 = arith.constant 1.000000e+00 : f32
    %278 = vector.broadcast %cst_59 : f32 to vector<2x128xf32>
    %279 = arith.addf %278, %277 : vector<2x128xf32>
    %280 = arith.divf %278, %279 : vector<2x128xf32>
    %281 = vector.extract_strided_slice %272 {offsets = [0, 128], sizes = [2, 128], strides = [1, 1]} : vector<2x384xf32> to vector<2x128xf32>
    %282 = vector.extract_strided_slice %271 {offsets = [0, 128], sizes = [2, 128], strides = [1, 1]} : vector<2x384xf32> to vector<2x128xf32>
    %283 = arith.addf %281, %282 : vector<2x128xf32>
    %284 = arith.negf %283 : vector<2x128xf32>
    %285 = math.exp %284 : vector<2x128xf32>
    %cst_60 = arith.constant 1.000000e+00 : f32
    %286 = vector.broadcast %cst_60 : f32 to vector<2x128xf32>
    %287 = arith.addf %286, %285 : vector<2x128xf32>
    %288 = arith.divf %286, %287 : vector<2x128xf32>
    %289 = vector.extract_strided_slice %272 {offsets = [0, 256], sizes = [2, 128], strides = [1, 1]} : vector<2x384xf32> to vector<2x128xf32>
    %290 = vector.extract_strided_slice %271 {offsets = [0, 256], sizes = [2, 128], strides = [1, 1]} : vector<2x384xf32> to vector<2x128xf32>
    %291 = arith.addf %290, %9 : vector<2x128xf32>
    %292 = arith.mulf %280, %291 : vector<2x128xf32>
    %293 = arith.addf %289, %292 : vector<2x128xf32>
    %294 = math.tanh %293 : vector<2x128xf32>
    %295 = arith.subf %223, %294 : vector<2x128xf32>
    %296 = arith.mulf %288, %295 : vector<2x128xf32>
    %297 = arith.addf %294, %296 : vector<2x128xf32>
    %298 = arith.truncf %270 : vector<2x128xf32> to vector<2x128xbf16>
    %299 = arith.index_cast %c3_i32 : i32 to index
    %c0_61 = arith.constant 0 : index
    %c0_62 = arith.constant 0 : index
    %300 = vector.load %arg6[%299, %c0_61, %c0_62] : memref<8x2x128xbf16, #tpu.memory_space<vmem>>, vector<1x2x128xbf16>
    %301 = vector.shape_cast %300 : vector<1x2x128xbf16> to vector<2x128xbf16>
    %302 = vector.shape_cast %298 : vector<2x128xbf16> to vector<1x2x128xbf16>
    tpu.vector_store %arg6[%299, %c0_61, %c0_62], %302 {strides = array<i32>} : memref<8x2x128xbf16, #tpu.memory_space<vmem>>, vector<1x2x128xbf16>,
    %303 = arith.truncf %297 : vector<2x128xf32> to vector<2x128xbf16>
    %304 = arith.index_cast %234 : i32 to index
    %c0_63 = arith.constant 0 : index
    %c0_64 = arith.constant 0 : index
    %305 = vector.load %arg7[%304, %c0_63, %c0_64] : memref<8x2x128xbf16, #tpu.memory_space<vmem>>, vector<1x2x128xbf16>
    %306 = vector.shape_cast %305 : vector<1x2x128xbf16> to vector<2x128xbf16>
    %307 = vector.shape_cast %303 : vector<2x128xbf16> to vector<1x2x128xbf16>
    tpu.vector_store %arg7[%304, %c0_63, %c0_64], %307 {strides = array<i32>} : memref<8x2x128xbf16, #tpu.memory_space<vmem>>, vector<1x2x128xbf16>,
    %c4_i32 = arith.constant 4 : i32
    %c7_i32_65 = arith.constant 7 : i32
    %308 = arith.subi %c7_i32_65, %c4_i32 : i32
    %309 = arith.index_cast %c4_i32 : i32 to index
    %c0_66 = arith.constant 0 : index
    %c0_67 = arith.constant 0 : index
    %310 = vector.load %arg1[%309, %c0_66, %c0_67] : memref<8x2x384xbf16, #tpu.memory_space<vmem>>, vector<1x2x384xbf16>
    %311 = vector.shape_cast %310 : vector<1x2x384xbf16> to vector<2x384xbf16>
    %312 = arith.index_cast %308 : i32 to index
    %c0_68 = arith.constant 0 : index
    %c0_69 = arith.constant 0 : index
    %313 = vector.load %arg2[%312, %c0_68, %c0_69] : memref<8x2x384xbf16, #tpu.memory_space<vmem>>, vector<1x2x384xbf16>
    %314 = vector.shape_cast %313 : vector<1x2x384xbf16> to vector<2x384xbf16>
    %315 = tpu.concatenate %270, %297 in 1 : vector<2x128xf32>, vector<2x128xf32> -> vector<2x256xf32>
    %316 = arith.truncf %315 : vector<2x256xf32> to vector<2x256xbf16>
    %cst_70 = arith.constant dense<0.000000e+00> : vector<2x768xf32>
    %317 = tpu.matmul %316, %3, %cst_70 {dimension_numbers = #tpu.dot_dimension_numbers<[1], [0], [0], [1], [0, 0, 1, 1], [], []>} : vector<2x256xbf16>, vector<256x768xbf16>, vector<2x768xf32> -> vector<2x768xf32>
    %318 = vector.extract_strided_slice %317 {offsets = [0, 0], sizes = [2, 384], strides = [1, 1]} : vector<2x768xf32> to vector<2x384xf32>
    %319 = arith.extf %311 : vector<2x384xbf16> to vector<2x384xf32>
    %320 = vector.extract_strided_slice %319 {offsets = [0, 0], sizes = [2, 128], strides = [1, 1]} : vector<2x384xf32> to vector<2x128xf32>
    %321 = vector.extract_strided_slice %318 {offsets = [0, 0], sizes = [2, 128], strides = [1, 1]} : vector<2x384xf32> to vector<2x128xf32>
    %322 = arith.addf %320, %321 : vector<2x128xf32>
    %323 = arith.negf %322 : vector<2x128xf32>
    %324 = math.exp %323 : vector<2x128xf32>
    %cst_71 = arith.constant 1.000000e+00 : f32
    %325 = vector.broadcast %cst_71 : f32 to vector<2x128xf32>
    %326 = arith.addf %325, %324 : vector<2x128xf32>
    %327 = arith.divf %325, %326 : vector<2x128xf32>
    %328 = vector.extract_strided_slice %319 {offsets = [0, 128], sizes = [2, 128], strides = [1, 1]} : vector<2x384xf32> to vector<2x128xf32>
    %329 = vector.extract_strided_slice %318 {offsets = [0, 128], sizes = [2, 128], strides = [1, 1]} : vector<2x384xf32> to vector<2x128xf32>
    %330 = arith.addf %328, %329 : vector<2x128xf32>
    %331 = arith.negf %330 : vector<2x128xf32>
    %332 = math.exp %331 : vector<2x128xf32>
    %cst_72 = arith.constant 1.000000e+00 : f32
    %333 = vector.broadcast %cst_72 : f32 to vector<2x128xf32>
    %334 = arith.addf %333, %332 : vector<2x128xf32>
    %335 = arith.divf %333, %334 : vector<2x128xf32>
    %336 = vector.extract_strided_slice %319 {offsets = [0, 256], sizes = [2, 128], strides = [1, 1]} : vector<2x384xf32> to vector<2x128xf32>
    %337 = vector.extract_strided_slice %318 {offsets = [0, 256], sizes = [2, 128], strides = [1, 1]} : vector<2x384xf32> to vector<2x128xf32>
    %338 = arith.addf %337, %6 : vector<2x128xf32>
    %339 = arith.mulf %327, %338 : vector<2x128xf32>
    %340 = arith.addf %336, %339 : vector<2x128xf32>
    %341 = math.tanh %340 : vector<2x128xf32>
    %342 = arith.subf %270, %341 : vector<2x128xf32>
    %343 = arith.mulf %335, %342 : vector<2x128xf32>
    %344 = arith.addf %341, %343 : vector<2x128xf32>
    %345 = vector.extract_strided_slice %317 {offsets = [0, 384], sizes = [2, 384], strides = [1, 1]} : vector<2x768xf32> to vector<2x384xf32>
    %346 = arith.extf %314 : vector<2x384xbf16> to vector<2x384xf32>
    %347 = vector.extract_strided_slice %346 {offsets = [0, 0], sizes = [2, 128], strides = [1, 1]} : vector<2x384xf32> to vector<2x128xf32>
    %348 = vector.extract_strided_slice %345 {offsets = [0, 0], sizes = [2, 128], strides = [1, 1]} : vector<2x384xf32> to vector<2x128xf32>
    %349 = arith.addf %347, %348 : vector<2x128xf32>
    %350 = arith.negf %349 : vector<2x128xf32>
    %351 = math.exp %350 : vector<2x128xf32>
    %cst_73 = arith.constant 1.000000e+00 : f32
    %352 = vector.broadcast %cst_73 : f32 to vector<2x128xf32>
    %353 = arith.addf %352, %351 : vector<2x128xf32>
    %354 = arith.divf %352, %353 : vector<2x128xf32>
    %355 = vector.extract_strided_slice %346 {offsets = [0, 128], sizes = [2, 128], strides = [1, 1]} : vector<2x384xf32> to vector<2x128xf32>
    %356 = vector.extract_strided_slice %345 {offsets = [0, 128], sizes = [2, 128], strides = [1, 1]} : vector<2x384xf32> to vector<2x128xf32>
    %357 = arith.addf %355, %356 : vector<2x128xf32>
    %358 = arith.negf %357 : vector<2x128xf32>
    %359 = math.exp %358 : vector<2x128xf32>
    %cst_74 = arith.constant 1.000000e+00 : f32
    %360 = vector.broadcast %cst_74 : f32 to vector<2x128xf32>
    %361 = arith.addf %360, %359 : vector<2x128xf32>
    %362 = arith.divf %360, %361 : vector<2x128xf32>
    %363 = vector.extract_strided_slice %346 {offsets = [0, 256], sizes = [2, 128], strides = [1, 1]} : vector<2x384xf32> to vector<2x128xf32>
    %364 = vector.extract_strided_slice %345 {offsets = [0, 256], sizes = [2, 128], strides = [1, 1]} : vector<2x384xf32> to vector<2x128xf32>
    %365 = arith.addf %364, %9 : vector<2x128xf32>
    %366 = arith.mulf %354, %365 : vector<2x128xf32>
    %367 = arith.addf %363, %366 : vector<2x128xf32>
    %368 = math.tanh %367 : vector<2x128xf32>
    %369 = arith.subf %297, %368 : vector<2x128xf32>
    %370 = arith.mulf %362, %369 : vector<2x128xf32>
    %371 = arith.addf %368, %370 : vector<2x128xf32>
    %372 = arith.truncf %344 : vector<2x128xf32> to vector<2x128xbf16>
    %373 = arith.index_cast %c4_i32 : i32 to index
    %c0_75 = arith.constant 0 : index
    %c0_76 = arith.constant 0 : index
    %374 = vector.load %arg6[%373, %c0_75, %c0_76] : memref<8x2x128xbf16, #tpu.memory_space<vmem>>, vector<1x2x128xbf16>
    %375 = vector.shape_cast %374 : vector<1x2x128xbf16> to vector<2x128xbf16>
    %376 = vector.shape_cast %372 : vector<2x128xbf16> to vector<1x2x128xbf16>
    tpu.vector_store %arg6[%373, %c0_75, %c0_76], %376 {strides = array<i32>} : memref<8x2x128xbf16, #tpu.memory_space<vmem>>, vector<1x2x128xbf16>,
    %377 = arith.truncf %371 : vector<2x128xf32> to vector<2x128xbf16>
    %378 = arith.index_cast %308 : i32 to index
    %c0_77 = arith.constant 0 : index
    %c0_78 = arith.constant 0 : index
    %379 = vector.load %arg7[%378, %c0_77, %c0_78] : memref<8x2x128xbf16, #tpu.memory_space<vmem>>, vector<1x2x128xbf16>
    %380 = vector.shape_cast %379 : vector<1x2x128xbf16> to vector<2x128xbf16>
    %381 = vector.shape_cast %377 : vector<2x128xbf16> to vector<1x2x128xbf16>
    tpu.vector_store %arg7[%378, %c0_77, %c0_78], %381 {strides = array<i32>} : memref<8x2x128xbf16, #tpu.memory_space<vmem>>, vector<1x2x128xbf16>,
    %c5_i32 = arith.constant 5 : i32
    %c7_i32_79 = arith.constant 7 : i32
    %382 = arith.subi %c7_i32_79, %c5_i32 : i32
    %383 = arith.index_cast %c5_i32 : i32 to index
    %c0_80 = arith.constant 0 : index
    %c0_81 = arith.constant 0 : index
    %384 = vector.load %arg1[%383, %c0_80, %c0_81] : memref<8x2x384xbf16, #tpu.memory_space<vmem>>, vector<1x2x384xbf16>
    %385 = vector.shape_cast %384 : vector<1x2x384xbf16> to vector<2x384xbf16>
    %386 = arith.index_cast %382 : i32 to index
    %c0_82 = arith.constant 0 : index
    %c0_83 = arith.constant 0 : index
    %387 = vector.load %arg2[%386, %c0_82, %c0_83] : memref<8x2x384xbf16, #tpu.memory_space<vmem>>, vector<1x2x384xbf16>
    %388 = vector.shape_cast %387 : vector<1x2x384xbf16> to vector<2x384xbf16>
    %389 = tpu.concatenate %344, %371 in 1 : vector<2x128xf32>, vector<2x128xf32> -> vector<2x256xf32>
    %390 = arith.truncf %389 : vector<2x256xf32> to vector<2x256xbf16>
    %cst_84 = arith.constant dense<0.000000e+00> : vector<2x768xf32>
    %391 = tpu.matmul %390, %3, %cst_84 {dimension_numbers = #tpu.dot_dimension_numbers<[1], [0], [0], [1], [0, 0, 1, 1], [], []>} : vector<2x256xbf16>, vector<256x768xbf16>, vector<2x768xf32> -> vector<2x768xf32>
    %392 = vector.extract_strided_slice %391 {offsets = [0, 0], sizes = [2, 384], strides = [1, 1]} : vector<2x768xf32> to vector<2x384xf32>
    %393 = arith.extf %385 : vector<2x384xbf16> to vector<2x384xf32>
    %394 = vector.extract_strided_slice %393 {offsets = [0, 0], sizes = [2, 128], strides = [1, 1]} : vector<2x384xf32> to vector<2x128xf32>
    %395 = vector.extract_strided_slice %392 {offsets = [0, 0], sizes = [2, 128], strides = [1, 1]} : vector<2x384xf32> to vector<2x128xf32>
    %396 = arith.addf %394, %395 : vector<2x128xf32>
    %397 = arith.negf %396 : vector<2x128xf32>
    %398 = math.exp %397 : vector<2x128xf32>
    %cst_85 = arith.constant 1.000000e+00 : f32
    %399 = vector.broadcast %cst_85 : f32 to vector<2x128xf32>
    %400 = arith.addf %399, %398 : vector<2x128xf32>
    %401 = arith.divf %399, %400 : vector<2x128xf32>
    %402 = vector.extract_strided_slice %393 {offsets = [0, 128], sizes = [2, 128], strides = [1, 1]} : vector<2x384xf32> to vector<2x128xf32>
    %403 = vector.extract_strided_slice %392 {offsets = [0, 128], sizes = [2, 128], strides = [1, 1]} : vector<2x384xf32> to vector<2x128xf32>
    %404 = arith.addf %402, %403 : vector<2x128xf32>
    %405 = arith.negf %404 : vector<2x128xf32>
    %406 = math.exp %405 : vector<2x128xf32>
    %cst_86 = arith.constant 1.000000e+00 : f32
    %407 = vector.broadcast %cst_86 : f32 to vector<2x128xf32>
    %408 = arith.addf %407, %406 : vector<2x128xf32>
    %409 = arith.divf %407, %408 : vector<2x128xf32>
    %410 = vector.extract_strided_slice %393 {offsets = [0, 256], sizes = [2, 128], strides = [1, 1]} : vector<2x384xf32> to vector<2x128xf32>
    %411 = vector.extract_strided_slice %392 {offsets = [0, 256], sizes = [2, 128], strides = [1, 1]} : vector<2x384xf32> to vector<2x128xf32>
    %412 = arith.addf %411, %6 : vector<2x128xf32>
    %413 = arith.mulf %401, %412 : vector<2x128xf32>
    %414 = arith.addf %410, %413 : vector<2x128xf32>
    %415 = math.tanh %414 : vector<2x128xf32>
    %416 = arith.subf %344, %415 : vector<2x128xf32>
    %417 = arith.mulf %409, %416 : vector<2x128xf32>
    %418 = arith.addf %415, %417 : vector<2x128xf32>
    %419 = vector.extract_strided_slice %391 {offsets = [0, 384], sizes = [2, 384], strides = [1, 1]} : vector<2x768xf32> to vector<2x384xf32>
    %420 = arith.extf %388 : vector<2x384xbf16> to vector<2x384xf32>
    %421 = vector.extract_strided_slice %420 {offsets = [0, 0], sizes = [2, 128], strides = [1, 1]} : vector<2x384xf32> to vector<2x128xf32>
    %422 = vector.extract_strided_slice %419 {offsets = [0, 0], sizes = [2, 128], strides = [1, 1]} : vector<2x384xf32> to vector<2x128xf32>
    %423 = arith.addf %421, %422 : vector<2x128xf32>
    %424 = arith.negf %423 : vector<2x128xf32>
    %425 = math.exp %424 : vector<2x128xf32>
    %cst_87 = arith.constant 1.000000e+00 : f32
    %426 = vector.broadcast %cst_87 : f32 to vector<2x128xf32>
    %427 = arith.addf %426, %425 : vector<2x128xf32>
    %428 = arith.divf %426, %427 : vector<2x128xf32>
    %429 = vector.extract_strided_slice %420 {offsets = [0, 128], sizes = [2, 128], strides = [1, 1]} : vector<2x384xf32> to vector<2x128xf32>
    %430 = vector.extract_strided_slice %419 {offsets = [0, 128], sizes = [2, 128], strides = [1, 1]} : vector<2x384xf32> to vector<2x128xf32>
    %431 = arith.addf %429, %430 : vector<2x128xf32>
    %432 = arith.negf %431 : vector<2x128xf32>
    %433 = math.exp %432 : vector<2x128xf32>
    %cst_88 = arith.constant 1.000000e+00 : f32
    %434 = vector.broadcast %cst_88 : f32 to vector<2x128xf32>
    %435 = arith.addf %434, %433 : vector<2x128xf32>
    %436 = arith.divf %434, %435 : vector<2x128xf32>
    %437 = vector.extract_strided_slice %420 {offsets = [0, 256], sizes = [2, 128], strides = [1, 1]} : vector<2x384xf32> to vector<2x128xf32>
    %438 = vector.extract_strided_slice %419 {offsets = [0, 256], sizes = [2, 128], strides = [1, 1]} : vector<2x384xf32> to vector<2x128xf32>
    %439 = arith.addf %438, %9 : vector<2x128xf32>
    %440 = arith.mulf %428, %439 : vector<2x128xf32>
    %441 = arith.addf %437, %440 : vector<2x128xf32>
    %442 = math.tanh %441 : vector<2x128xf32>
    %443 = arith.subf %371, %442 : vector<2x128xf32>
    %444 = arith.mulf %436, %443 : vector<2x128xf32>
    %445 = arith.addf %442, %444 : vector<2x128xf32>
    %446 = arith.truncf %418 : vector<2x128xf32> to vector<2x128xbf16>
    %447 = arith.index_cast %c5_i32 : i32 to index
    %c0_89 = arith.constant 0 : index
    %c0_90 = arith.constant 0 : index
    %448 = vector.load %arg6[%447, %c0_89, %c0_90] : memref<8x2x128xbf16, #tpu.memory_space<vmem>>, vector<1x2x128xbf16>
    %449 = vector.shape_cast %448 : vector<1x2x128xbf16> to vector<2x128xbf16>
    %450 = vector.shape_cast %446 : vector<2x128xbf16> to vector<1x2x128xbf16>
    tpu.vector_store %arg6[%447, %c0_89, %c0_90], %450 {strides = array<i32>} : memref<8x2x128xbf16, #tpu.memory_space<vmem>>, vector<1x2x128xbf16>,
    %451 = arith.truncf %445 : vector<2x128xf32> to vector<2x128xbf16>
    %452 = arith.index_cast %382 : i32 to index
    %c0_91 = arith.constant 0 : index
    %c0_92 = arith.constant 0 : index
    %453 = vector.load %arg7[%452, %c0_91, %c0_92] : memref<8x2x128xbf16, #tpu.memory_space<vmem>>, vector<1x2x128xbf16>
    %454 = vector.shape_cast %453 : vector<1x2x128xbf16> to vector<2x128xbf16>
    %455 = vector.shape_cast %451 : vector<2x128xbf16> to vector<1x2x128xbf16>
    tpu.vector_store %arg7[%452, %c0_91, %c0_92], %455 {strides = array<i32>} : memref<8x2x128xbf16, #tpu.memory_space<vmem>>, vector<1x2x128xbf16>,
    %c6_i32 = arith.constant 6 : i32
    %c7_i32_93 = arith.constant 7 : i32
    %456 = arith.subi %c7_i32_93, %c6_i32 : i32
    %457 = arith.index_cast %c6_i32 : i32 to index
    %c0_94 = arith.constant 0 : index
    %c0_95 = arith.constant 0 : index
    %458 = vector.load %arg1[%457, %c0_94, %c0_95] : memref<8x2x384xbf16, #tpu.memory_space<vmem>>, vector<1x2x384xbf16>
    %459 = vector.shape_cast %458 : vector<1x2x384xbf16> to vector<2x384xbf16>
    %460 = arith.index_cast %456 : i32 to index
    %c0_96 = arith.constant 0 : index
    %c0_97 = arith.constant 0 : index
    %461 = vector.load %arg2[%460, %c0_96, %c0_97] : memref<8x2x384xbf16, #tpu.memory_space<vmem>>, vector<1x2x384xbf16>
    %462 = vector.shape_cast %461 : vector<1x2x384xbf16> to vector<2x384xbf16>
    %463 = tpu.concatenate %418, %445 in 1 : vector<2x128xf32>, vector<2x128xf32> -> vector<2x256xf32>
    %464 = arith.truncf %463 : vector<2x256xf32> to vector<2x256xbf16>
    %cst_98 = arith.constant dense<0.000000e+00> : vector<2x768xf32>
    %465 = tpu.matmul %464, %3, %cst_98 {dimension_numbers = #tpu.dot_dimension_numbers<[1], [0], [0], [1], [0, 0, 1, 1], [], []>} : vector<2x256xbf16>, vector<256x768xbf16>, vector<2x768xf32> -> vector<2x768xf32>
    %466 = vector.extract_strided_slice %465 {offsets = [0, 0], sizes = [2, 384], strides = [1, 1]} : vector<2x768xf32> to vector<2x384xf32>
    %467 = arith.extf %459 : vector<2x384xbf16> to vector<2x384xf32>
    %468 = vector.extract_strided_slice %467 {offsets = [0, 0], sizes = [2, 128], strides = [1, 1]} : vector<2x384xf32> to vector<2x128xf32>
    %469 = vector.extract_strided_slice %466 {offsets = [0, 0], sizes = [2, 128], strides = [1, 1]} : vector<2x384xf32> to vector<2x128xf32>
    %470 = arith.addf %468, %469 : vector<2x128xf32>
    %471 = arith.negf %470 : vector<2x128xf32>
    %472 = math.exp %471 : vector<2x128xf32>
    %cst_99 = arith.constant 1.000000e+00 : f32
    %473 = vector.broadcast %cst_99 : f32 to vector<2x128xf32>
    %474 = arith.addf %473, %472 : vector<2x128xf32>
    %475 = arith.divf %473, %474 : vector<2x128xf32>
    %476 = vector.extract_strided_slice %467 {offsets = [0, 128], sizes = [2, 128], strides = [1, 1]} : vector<2x384xf32> to vector<2x128xf32>
    %477 = vector.extract_strided_slice %466 {offsets = [0, 128], sizes = [2, 128], strides = [1, 1]} : vector<2x384xf32> to vector<2x128xf32>
    %478 = arith.addf %476, %477 : vector<2x128xf32>
    %479 = arith.negf %478 : vector<2x128xf32>
    %480 = math.exp %479 : vector<2x128xf32>
    %cst_100 = arith.constant 1.000000e+00 : f32
    %481 = vector.broadcast %cst_100 : f32 to vector<2x128xf32>
    %482 = arith.addf %481, %480 : vector<2x128xf32>
    %483 = arith.divf %481, %482 : vector<2x128xf32>
    %484 = vector.extract_strided_slice %467 {offsets = [0, 256], sizes = [2, 128], strides = [1, 1]} : vector<2x384xf32> to vector<2x128xf32>
    %485 = vector.extract_strided_slice %466 {offsets = [0, 256], sizes = [2, 128], strides = [1, 1]} : vector<2x384xf32> to vector<2x128xf32>
    %486 = arith.addf %485, %6 : vector<2x128xf32>
    %487 = arith.mulf %475, %486 : vector<2x128xf32>
    %488 = arith.addf %484, %487 : vector<2x128xf32>
    %489 = math.tanh %488 : vector<2x128xf32>
    %490 = arith.subf %418, %489 : vector<2x128xf32>
    %491 = arith.mulf %483, %490 : vector<2x128xf32>
    %492 = arith.addf %489, %491 : vector<2x128xf32>
    %493 = vector.extract_strided_slice %465 {offsets = [0, 384], sizes = [2, 384], strides = [1, 1]} : vector<2x768xf32> to vector<2x384xf32>
    %494 = arith.extf %462 : vector<2x384xbf16> to vector<2x384xf32>
    %495 = vector.extract_strided_slice %494 {offsets = [0, 0], sizes = [2, 128], strides = [1, 1]} : vector<2x384xf32> to vector<2x128xf32>
    %496 = vector.extract_strided_slice %493 {offsets = [0, 0], sizes = [2, 128], strides = [1, 1]} : vector<2x384xf32> to vector<2x128xf32>
    %497 = arith.addf %495, %496 : vector<2x128xf32>
    %498 = arith.negf %497 : vector<2x128xf32>
    %499 = math.exp %498 : vector<2x128xf32>
    %cst_101 = arith.constant 1.000000e+00 : f32
    %500 = vector.broadcast %cst_101 : f32 to vector<2x128xf32>
    %501 = arith.addf %500, %499 : vector<2x128xf32>
    %502 = arith.divf %500, %501 : vector<2x128xf32>
    %503 = vector.extract_strided_slice %494 {offsets = [0, 128], sizes = [2, 128], strides = [1, 1]} : vector<2x384xf32> to vector<2x128xf32>
    %504 = vector.extract_strided_slice %493 {offsets = [0, 128], sizes = [2, 128], strides = [1, 1]} : vector<2x384xf32> to vector<2x128xf32>
    %505 = arith.addf %503, %504 : vector<2x128xf32>
    %506 = arith.negf %505 : vector<2x128xf32>
    %507 = math.exp %506 : vector<2x128xf32>
    %cst_102 = arith.constant 1.000000e+00 : f32
    %508 = vector.broadcast %cst_102 : f32 to vector<2x128xf32>
    %509 = arith.addf %508, %507 : vector<2x128xf32>
    %510 = arith.divf %508, %509 : vector<2x128xf32>
    %511 = vector.extract_strided_slice %494 {offsets = [0, 256], sizes = [2, 128], strides = [1, 1]} : vector<2x384xf32> to vector<2x128xf32>
    %512 = vector.extract_strided_slice %493 {offsets = [0, 256], sizes = [2, 128], strides = [1, 1]} : vector<2x384xf32> to vector<2x128xf32>
    %513 = arith.addf %512, %9 : vector<2x128xf32>
    %514 = arith.mulf %502, %513 : vector<2x128xf32>
    %515 = arith.addf %511, %514 : vector<2x128xf32>
    %516 = math.tanh %515 : vector<2x128xf32>
    %517 = arith.subf %445, %516 : vector<2x128xf32>
    %518 = arith.mulf %510, %517 : vector<2x128xf32>
    %519 = arith.addf %516, %518 : vector<2x128xf32>
    %520 = arith.truncf %492 : vector<2x128xf32> to vector<2x128xbf16>
    %521 = arith.index_cast %c6_i32 : i32 to index
    %c0_103 = arith.constant 0 : index
    %c0_104 = arith.constant 0 : index
    %522 = vector.load %arg6[%521, %c0_103, %c0_104] : memref<8x2x128xbf16, #tpu.memory_space<vmem>>, vector<1x2x128xbf16>
    %523 = vector.shape_cast %522 : vector<1x2x128xbf16> to vector<2x128xbf16>
    %524 = vector.shape_cast %520 : vector<2x128xbf16> to vector<1x2x128xbf16>
    tpu.vector_store %arg6[%521, %c0_103, %c0_104], %524 {strides = array<i32>} : memref<8x2x128xbf16, #tpu.memory_space<vmem>>, vector<1x2x128xbf16>,
    %525 = arith.truncf %519 : vector<2x128xf32> to vector<2x128xbf16>
    %526 = arith.index_cast %456 : i32 to index
    %c0_105 = arith.constant 0 : index
    %c0_106 = arith.constant 0 : index
    %527 = vector.load %arg7[%526, %c0_105, %c0_106] : memref<8x2x128xbf16, #tpu.memory_space<vmem>>, vector<1x2x128xbf16>
    %528 = vector.shape_cast %527 : vector<1x2x128xbf16> to vector<2x128xbf16>
    %529 = vector.shape_cast %525 : vector<2x128xbf16> to vector<1x2x128xbf16>
    tpu.vector_store %arg7[%526, %c0_105, %c0_106], %529 {strides = array<i32>} : memref<8x2x128xbf16, #tpu.memory_space<vmem>>, vector<1x2x128xbf16>,
    %c7_i32_107 = arith.constant 7 : i32
    %c7_i32_108 = arith.constant 7 : i32
    %530 = arith.subi %c7_i32_108, %c7_i32_107 : i32
    %531 = arith.index_cast %c7_i32_107 : i32 to index
    %c0_109 = arith.constant 0 : index
    %c0_110 = arith.constant 0 : index
    %532 = vector.load %arg1[%531, %c0_109, %c0_110] : memref<8x2x384xbf16, #tpu.memory_space<vmem>>, vector<1x2x384xbf16>
    %533 = vector.shape_cast %532 : vector<1x2x384xbf16> to vector<2x384xbf16>
    %534 = arith.index_cast %530 : i32 to index
    %c0_111 = arith.constant 0 : index
    %c0_112 = arith.constant 0 : index
    %535 = vector.load %arg2[%534, %c0_111, %c0_112] : memref<8x2x384xbf16, #tpu.memory_space<vmem>>, vector<1x2x384xbf16>
    %536 = vector.shape_cast %535 : vector<1x2x384xbf16> to vector<2x384xbf16>
    %537 = tpu.concatenate %492, %519 in 1 : vector<2x128xf32>, vector<2x128xf32> -> vector<2x256xf32>
    %538 = arith.truncf %537 : vector<2x256xf32> to vector<2x256xbf16>
    %cst_113 = arith.constant dense<0.000000e+00> : vector<2x768xf32>
    %539 = tpu.matmul %538, %3, %cst_113 {dimension_numbers = #tpu.dot_dimension_numbers<[1], [0], [0], [1], [0, 0, 1, 1], [], []>} : vector<2x256xbf16>, vector<256x768xbf16>, vector<2x768xf32> -> vector<2x768xf32>
    %540 = vector.extract_strided_slice %539 {offsets = [0, 0], sizes = [2, 384], strides = [1, 1]} : vector<2x768xf32> to vector<2x384xf32>
    %541 = arith.extf %533 : vector<2x384xbf16> to vector<2x384xf32>
    %542 = vector.extract_strided_slice %541 {offsets = [0, 0], sizes = [2, 128], strides = [1, 1]} : vector<2x384xf32> to vector<2x128xf32>
    %543 = vector.extract_strided_slice %540 {offsets = [0, 0], sizes = [2, 128], strides = [1, 1]} : vector<2x384xf32> to vector<2x128xf32>
    %544 = arith.addf %542, %543 : vector<2x128xf32>
    %545 = arith.negf %544 : vector<2x128xf32>
    %546 = math.exp %545 : vector<2x128xf32>
    %cst_114 = arith.constant 1.000000e+00 : f32
    %547 = vector.broadcast %cst_114 : f32 to vector<2x128xf32>
    %548 = arith.addf %547, %546 : vector<2x128xf32>
    %549 = arith.divf %547, %548 : vector<2x128xf32>
    %550 = vector.extract_strided_slice %541 {offsets = [0, 128], sizes = [2, 128], strides = [1, 1]} : vector<2x384xf32> to vector<2x128xf32>
    %551 = vector.extract_strided_slice %540 {offsets = [0, 128], sizes = [2, 128], strides = [1, 1]} : vector<2x384xf32> to vector<2x128xf32>
    %552 = arith.addf %550, %551 : vector<2x128xf32>
    %553 = arith.negf %552 : vector<2x128xf32>
    %554 = math.exp %553 : vector<2x128xf32>
    %cst_115 = arith.constant 1.000000e+00 : f32
    %555 = vector.broadcast %cst_115 : f32 to vector<2x128xf32>
    %556 = arith.addf %555, %554 : vector<2x128xf32>
    %557 = arith.divf %555, %556 : vector<2x128xf32>
    %558 = vector.extract_strided_slice %541 {offsets = [0, 256], sizes = [2, 128], strides = [1, 1]} : vector<2x384xf32> to vector<2x128xf32>
    %559 = vector.extract_strided_slice %540 {offsets = [0, 256], sizes = [2, 128], strides = [1, 1]} : vector<2x384xf32> to vector<2x128xf32>
    %560 = arith.addf %559, %6 : vector<2x128xf32>
    %561 = arith.mulf %549, %560 : vector<2x128xf32>
    %562 = arith.addf %558, %561 : vector<2x128xf32>
    %563 = math.tanh %562 : vector<2x128xf32>
    %564 = arith.subf %492, %563 : vector<2x128xf32>
    %565 = arith.mulf %557, %564 : vector<2x128xf32>
    %566 = arith.addf %563, %565 : vector<2x128xf32>
    %567 = vector.extract_strided_slice %539 {offsets = [0, 384], sizes = [2, 384], strides = [1, 1]} : vector<2x768xf32> to vector<2x384xf32>
    %568 = arith.extf %536 : vector<2x384xbf16> to vector<2x384xf32>
    %569 = vector.extract_strided_slice %568 {offsets = [0, 0], sizes = [2, 128], strides = [1, 1]} : vector<2x384xf32> to vector<2x128xf32>
    %570 = vector.extract_strided_slice %567 {offsets = [0, 0], sizes = [2, 128], strides = [1, 1]} : vector<2x384xf32> to vector<2x128xf32>
    %571 = arith.addf %569, %570 : vector<2x128xf32>
    %572 = arith.negf %571 : vector<2x128xf32>
    %573 = math.exp %572 : vector<2x128xf32>
    %cst_116 = arith.constant 1.000000e+00 : f32
    %574 = vector.broadcast %cst_116 : f32 to vector<2x128xf32>
    %575 = arith.addf %574, %573 : vector<2x128xf32>
    %576 = arith.divf %574, %575 : vector<2x128xf32>
    %577 = vector.extract_strided_slice %568 {offsets = [0, 128], sizes = [2, 128], strides = [1, 1]} : vector<2x384xf32> to vector<2x128xf32>
    %578 = vector.extract_strided_slice %567 {offsets = [0, 128], sizes = [2, 128], strides = [1, 1]} : vector<2x384xf32> to vector<2x128xf32>
    %579 = arith.addf %577, %578 : vector<2x128xf32>
    %580 = arith.negf %579 : vector<2x128xf32>
    %581 = math.exp %580 : vector<2x128xf32>
    %cst_117 = arith.constant 1.000000e+00 : f32
    %582 = vector.broadcast %cst_117 : f32 to vector<2x128xf32>
    %583 = arith.addf %582, %581 : vector<2x128xf32>
    %584 = arith.divf %582, %583 : vector<2x128xf32>
    %585 = vector.extract_strided_slice %568 {offsets = [0, 256], sizes = [2, 128], strides = [1, 1]} : vector<2x384xf32> to vector<2x128xf32>
    %586 = vector.extract_strided_slice %567 {offsets = [0, 256], sizes = [2, 128], strides = [1, 1]} : vector<2x384xf32> to vector<2x128xf32>
    %587 = arith.addf %586, %9 : vector<2x128xf32>
    %588 = arith.mulf %576, %587 : vector<2x128xf32>
    %589 = arith.addf %585, %588 : vector<2x128xf32>
    %590 = math.tanh %589 : vector<2x128xf32>
    %591 = arith.subf %519, %590 : vector<2x128xf32>
    %592 = arith.mulf %584, %591 : vector<2x128xf32>
    %593 = arith.addf %590, %592 : vector<2x128xf32>
    %594 = arith.truncf %566 : vector<2x128xf32> to vector<2x128xbf16>
    %595 = arith.index_cast %c7_i32_107 : i32 to index
    %c0_118 = arith.constant 0 : index
    %c0_119 = arith.constant 0 : index
    %596 = vector.load %arg6[%595, %c0_118, %c0_119] : memref<8x2x128xbf16, #tpu.memory_space<vmem>>, vector<1x2x128xbf16>
    %597 = vector.shape_cast %596 : vector<1x2x128xbf16> to vector<2x128xbf16>
    %598 = vector.shape_cast %594 : vector<2x128xbf16> to vector<1x2x128xbf16>
    tpu.vector_store %arg6[%595, %c0_118, %c0_119], %598 {strides = array<i32>} : memref<8x2x128xbf16, #tpu.memory_space<vmem>>, vector<1x2x128xbf16>,
    %599 = arith.truncf %593 : vector<2x128xf32> to vector<2x128xbf16>
    %600 = arith.index_cast %530 : i32 to index
    %c0_120 = arith.constant 0 : index
    %c0_121 = arith.constant 0 : index
    %601 = vector.load %arg7[%600, %c0_120, %c0_121] : memref<8x2x128xbf16, #tpu.memory_space<vmem>>, vector<1x2x128xbf16>
    %602 = vector.shape_cast %601 : vector<1x2x128xbf16> to vector<2x128xbf16>
    %603 = vector.shape_cast %599 : vector<2x128xbf16> to vector<1x2x128xbf16>
    tpu.vector_store %arg7[%600, %c0_120, %c0_121], %603 {strides = array<i32>} : memref<8x2x128xbf16, #tpu.memory_space<vmem>>, vector<1x2x128xbf16>,
    %c8_i32 = arith.constant 8 : i32
    %c0_122 = arith.constant 0 : index
    %c0_123 = arith.constant 0 : index
    %604 = vector.load %arg8[%c0_122, %c0_123] : memref<2x128xf32, #tpu.memory_space<vmem>>, vector<2x128xf32>
    tpu.vector_store %arg8[%c0_122, %c0_123], %566 {strides = array<i32>} : memref<2x128xf32, #tpu.memory_space<vmem>>, vector<2x128xf32>,
    %c0_124 = arith.constant 0 : index
    %c0_125 = arith.constant 0 : index
    %605 = vector.load %arg9[%c0_124, %c0_125] : memref<2x128xf32, #tpu.memory_space<vmem>>, vector<2x128xf32>
    tpu.vector_store %arg9[%c0_124, %c0_125], %593 {strides = array<i32>} : memref<2x128xf32, #tpu.memory_space<vmem>>, vector<2x128xf32>,
    return
  }
  func.func @transform_0(%arg0: i32) -> (i32, i32, i32) {
    %c0_i32 = arith.constant 0 : i32
    %c0_i32_0 = arith.constant 0 : i32
    %c0_i32_1 = arith.constant 0 : i32
    return %arg0, %c0_i32, %c0_i32_0 : i32, i32, i32
  }
  func.func @transform_1(%arg0: i32) -> (i32, i32, i32) {
    %c0_i32 = arith.constant 0 : i32
    %0 = arith.subi %c0_i32, %arg0 : i32
    %c0_i32_0 = arith.constant 0 : i32
    %c0_i32_1 = arith.constant 0 : i32
    %c0_i32_2 = arith.constant 0 : i32
    return %0, %c0_i32_0, %c0_i32_1 : i32, i32, i32
  }
  func.func @transform_2(%arg0: i32) -> (i32, i32) {
    %c0_i32 = arith.constant 0 : i32
    %c0_i32_0 = arith.constant 0 : i32
    %c0_i32_1 = arith.constant 0 : i32
    return %c0_i32, %c0_i32_0 : i32, i32
  }
  func.func @transform_3(%arg0: i32) -> (i32, i32) {
    %c0_i32 = arith.constant 0 : i32
    %c0_i32_0 = arith.constant 0 : i32
    %c0_i32_1 = arith.constant 0 : i32
    return %c0_i32, %c0_i32_0 : i32, i32
  }
  func.func @transform_4(%arg0: i32) -> (i32, i32) {
    %c0_i32 = arith.constant 0 : i32
    %c0_i32_0 = arith.constant 0 : i32
    %c0_i32_1 = arith.constant 0 : i32
    return %c0_i32, %c0_i32_0 : i32, i32
  }
  func.func @transform_5(%arg0: i32) -> (i32, i32, i32) {
    %c0_i32 = arith.constant 0 : i32
    %c0_i32_0 = arith.constant 0 : i32
    %c0_i32_1 = arith.constant 0 : i32
    return %arg0, %c0_i32, %c0_i32_0 : i32, i32, i32
  }
  func.func @transform_6(%arg0: i32) -> (i32, i32, i32) {
    %c0_i32 = arith.constant 0 : i32
    %0 = arith.subi %c0_i32, %arg0 : i32
    %c0_i32_0 = arith.constant 0 : i32
    %c0_i32_1 = arith.constant 0 : i32
    %c0_i32_2 = arith.constant 0 : i32
    return %0, %c0_i32_0, %c0_i32_1 : i32, i32, i32
  }
}

module attributes {stable_mosaic.version = 11 : i64} {
  func.func @_head_kernel(%arg0: i32, %arg1: memref<16x128xbf16, #tpu.memory_space<vmem>>, %arg2: memref<16x128xbf16, #tpu.memory_space<vmem>>, %arg3: memref<128x64xbf16, #tpu.memory_space<vmem>>, %arg4: memref<128x64xbf16, #tpu.memory_space<vmem>>, %arg5: memref<1x64xf32, #tpu.memory_space<vmem>>, %arg6: memref<64x128xbf16, #tpu.memory_space<vmem>>, %arg7: memref<1x128xf32, #tpu.memory_space<vmem>>, %arg8: memref<16x128xf32, #tpu.memory_space<vmem>>) attributes {dimension_semantics = [#tpu.dimension_semantics<parallel>], iteration_bounds = array<i64: 1>, scalar_prefetch = 0 : i64, scratch_operands = 0 : i64, tpu.core_type = #tpu.core_type<tc>, window_params = [{transform_indices = @transform_0, window_bounds = array<i64: 16, 128>}, {transform_indices = @transform_1, window_bounds = array<i64: 16, 128>}, {pipeline_mode = #tpu.pipeline_mode<synchronous>, transform_indices = @transform_2, window_bounds = array<i64: 128, 64>}, {pipeline_mode = #tpu.pipeline_mode<synchronous>, transform_indices = @transform_3, window_bounds = array<i64: 128, 64>}, {pipeline_mode = #tpu.pipeline_mode<synchronous>, transform_indices = @transform_4, window_bounds = array<i64: 1, 64>}, {pipeline_mode = #tpu.pipeline_mode<synchronous>, transform_indices = @transform_5, window_bounds = array<i64: 64, 128>}, {pipeline_mode = #tpu.pipeline_mode<synchronous>, transform_indices = @transform_6, window_bounds = array<i64: 1, 128>}, {transform_indices = @transform_7, window_bounds = array<i64: 16, 128>}]} {
    %c0 = arith.constant 0 : index
    %c0_0 = arith.constant 0 : index
    %0 = vector.load %arg1[%c0, %c0_0] : memref<16x128xbf16, #tpu.memory_space<vmem>>, vector<16x128xbf16>
    %c0_1 = arith.constant 0 : index
    %c0_2 = arith.constant 0 : index
    %1 = vector.load %arg3[%c0_1, %c0_2] : memref<128x64xbf16, #tpu.memory_space<vmem>>, vector<128x64xbf16>
    %cst = arith.constant dense<0.000000e+00> : vector<16x64xf32>
    %2 = tpu.matmul %0, %1, %cst {dimension_numbers = #tpu.dot_dimension_numbers<[1], [0], [0], [1], [0, 0, 1, 1], [], []>} : vector<16x128xbf16>, vector<128x64xbf16>, vector<16x64xf32> -> vector<16x64xf32>
    %c0_3 = arith.constant 0 : index
    %c0_4 = arith.constant 0 : index
    %3 = vector.load %arg2[%c0_3, %c0_4] : memref<16x128xbf16, #tpu.memory_space<vmem>>, vector<16x128xbf16>
    %c0_5 = arith.constant 0 : index
    %c0_6 = arith.constant 0 : index
    %4 = vector.load %arg4[%c0_5, %c0_6] : memref<128x64xbf16, #tpu.memory_space<vmem>>, vector<128x64xbf16>
    %cst_7 = arith.constant dense<0.000000e+00> : vector<16x64xf32>
    %5 = tpu.matmul %3, %4, %cst_7 {dimension_numbers = #tpu.dot_dimension_numbers<[1], [0], [0], [1], [0, 0, 1, 1], [], []>} : vector<16x128xbf16>, vector<128x64xbf16>, vector<16x64xf32> -> vector<16x64xf32>
    %6 = arith.addf %2, %5 : vector<16x64xf32>
    %c0_8 = arith.constant 0 : index
    %c0_9 = arith.constant 0 : index
    %7 = vector.load %arg5[%c0_8, %c0_9] : memref<1x64xf32, #tpu.memory_space<vmem>>, vector<1x64xf32>
    %8 = vector.broadcast %7 : vector<1x64xf32> to vector<16x64xf32>
    %9 = arith.addf %6, %8 : vector<16x64xf32>
    %10 = arith.truncf %9 : vector<16x64xf32> to vector<16x64xbf16>
    %c0_10 = arith.constant 0 : index
    %c0_11 = arith.constant 0 : index
    %11 = vector.load %arg6[%c0_10, %c0_11] : memref<64x128xbf16, #tpu.memory_space<vmem>>, vector<64x128xbf16>
    %cst_12 = arith.constant dense<0.000000e+00> : vector<16x128xf32>
    %12 = tpu.matmul %10, %11, %cst_12 {dimension_numbers = #tpu.dot_dimension_numbers<[1], [0], [0], [1], [0, 0, 1, 1], [], []>} : vector<16x64xbf16>, vector<64x128xbf16>, vector<16x128xf32> -> vector<16x128xf32>
    %c0_13 = arith.constant 0 : index
    %c0_14 = arith.constant 0 : index
    %13 = vector.load %arg7[%c0_13, %c0_14] : memref<1x128xf32, #tpu.memory_space<vmem>>, vector<1x128xf32>
    %14 = vector.broadcast %13 : vector<1x128xf32> to vector<16x128xf32>
    %15 = arith.addf %12, %14 : vector<16x128xf32>
    %cst_15 = arith.constant dense<0xFF800000> : vector<16xf32>
    %16 = vector.multi_reduction <maximumf>, %15, %cst_15 [1] : vector<16x128xf32> to vector<16xf32>
    %17 = vector.shape_cast %16 : vector<16xf32> to vector<16x1xf32>
    %18 = vector.broadcast %17 : vector<16x1xf32> to vector<16x128xf32>
    %19 = arith.subf %15, %18 : vector<16x128xf32>
    %20 = math.exp %19 : vector<16x128xf32>
    %cst_16 = arith.constant dense<0.000000e+00> : vector<16xf32>
    %21 = vector.multi_reduction <add>, %20, %cst_16 [1] : vector<16x128xf32> to vector<16xf32>
    %22 = vector.shape_cast %21 : vector<16xf32> to vector<16x1xf32>
    %23 = vector.broadcast %22 : vector<16x1xf32> to vector<16x128xf32>
    %24 = arith.divf %20, %23 : vector<16x128xf32>
    %c0_17 = arith.constant 0 : index
    %c0_18 = arith.constant 0 : index
    %25 = vector.load %arg8[%c0_17, %c0_18] : memref<16x128xf32, #tpu.memory_space<vmem>>, vector<16x128xf32>
    tpu.vector_store %arg8[%c0_17, %c0_18], %24 {strides = array<i32>} : memref<16x128xf32, #tpu.memory_space<vmem>>, vector<16x128xf32>,
    return
  }
  func.func @transform_0(%arg0: i32) -> (i32, i32) {
    %c0_i32 = arith.constant 0 : i32
    %c0_i32_0 = arith.constant 0 : i32
    return %arg0, %c0_i32 : i32, i32
  }
  func.func @transform_1(%arg0: i32) -> (i32, i32) {
    %c0_i32 = arith.constant 0 : i32
    %c0_i32_0 = arith.constant 0 : i32
    return %arg0, %c0_i32 : i32, i32
  }
  func.func @transform_2(%arg0: i32) -> (i32, i32) {
    %c0_i32 = arith.constant 0 : i32
    %c0_i32_0 = arith.constant 0 : i32
    %c0_i32_1 = arith.constant 0 : i32
    return %c0_i32, %c0_i32_0 : i32, i32
  }
  func.func @transform_3(%arg0: i32) -> (i32, i32) {
    %c0_i32 = arith.constant 0 : i32
    %c0_i32_0 = arith.constant 0 : i32
    %c0_i32_1 = arith.constant 0 : i32
    return %c0_i32, %c0_i32_0 : i32, i32
  }
  func.func @transform_4(%arg0: i32) -> (i32, i32) {
    %c0_i32 = arith.constant 0 : i32
    %c0_i32_0 = arith.constant 0 : i32
    %c0_i32_1 = arith.constant 0 : i32
    return %c0_i32, %c0_i32_0 : i32, i32
  }
  func.func @transform_5(%arg0: i32) -> (i32, i32) {
    %c0_i32 = arith.constant 0 : i32
    %c0_i32_0 = arith.constant 0 : i32
    %c0_i32_1 = arith.constant 0 : i32
    return %c0_i32, %c0_i32_0 : i32, i32
  }
  func.func @transform_6(%arg0: i32) -> (i32, i32) {
    %c0_i32 = arith.constant 0 : i32
    %c0_i32_0 = arith.constant 0 : i32
    %c0_i32_1 = arith.constant 0 : i32
    return %c0_i32, %c0_i32_0 : i32, i32
  }
  func.func @transform_7(%arg0: i32) -> (i32, i32) {
    %c0_i32 = arith.constant 0 : i32
    %c0_i32_0 = arith.constant 0 : i32
    return %arg0, %c0_i32 : i32, i32
  }
}

module attributes {stable_mosaic.version = 11 : i64} {
  func.func @_proj2_kernel(%arg0: i32, %arg1: memref<16x128xbf16, #tpu.memory_space<vmem>>, %arg2: memref<16x128xbf16, #tpu.memory_space<vmem>>, %arg3: memref<256x768xbf16, #tpu.memory_space<vmem>>, %arg4: memref<1x768xf32, #tpu.memory_space<vmem>>, %arg5: memref<16x384xbf16, #tpu.memory_space<vmem>>, %arg6: memref<16x384xbf16, #tpu.memory_space<vmem>>) attributes {dimension_semantics = [#tpu.dimension_semantics<parallel>], iteration_bounds = array<i64: 1>, scalar_prefetch = 0 : i64, scratch_operands = 0 : i64, tpu.core_type = #tpu.core_type<tc>, window_params = [{transform_indices = @transform_0, window_bounds = array<i64: 16, 128>}, {transform_indices = @transform_1, window_bounds = array<i64: 16, 128>}, {pipeline_mode = #tpu.pipeline_mode<synchronous>, transform_indices = @transform_2, window_bounds = array<i64: 256, 768>}, {pipeline_mode = #tpu.pipeline_mode<synchronous>, transform_indices = @transform_3, window_bounds = array<i64: 1, 768>}, {transform_indices = @transform_4, window_bounds = array<i64: 16, 384>}, {transform_indices = @transform_5, window_bounds = array<i64: 16, 384>}]} {
    %c0 = arith.constant 0 : index
    %c0_0 = arith.constant 0 : index
    %0 = vector.load %arg1[%c0, %c0_0] : memref<16x128xbf16, #tpu.memory_space<vmem>>, vector<16x128xbf16>
    %c0_1 = arith.constant 0 : index
    %c0_2 = arith.constant 0 : index
    %1 = vector.load %arg2[%c0_1, %c0_2] : memref<16x128xbf16, #tpu.memory_space<vmem>>, vector<16x128xbf16>
    %2 = tpu.concatenate %0, %1 in 1 : vector<16x128xbf16>, vector<16x128xbf16> -> vector<16x256xbf16>
    %c0_3 = arith.constant 0 : index
    %c0_4 = arith.constant 0 : index
    %3 = vector.load %arg3[%c0_3, %c0_4] : memref<256x768xbf16, #tpu.memory_space<vmem>>, vector<256x768xbf16>
    %cst = arith.constant dense<0.000000e+00> : vector<16x768xf32>
    %4 = tpu.matmul %2, %3, %cst {dimension_numbers = #tpu.dot_dimension_numbers<[1], [0], [0], [1], [0, 0, 1, 1], [], []>} : vector<16x256xbf16>, vector<256x768xbf16>, vector<16x768xf32> -> vector<16x768xf32>
    %c0_5 = arith.constant 0 : index
    %c0_6 = arith.constant 0 : index
    %5 = vector.load %arg4[%c0_5, %c0_6] : memref<1x768xf32, #tpu.memory_space<vmem>>, vector<1x768xf32>
    %6 = vector.broadcast %5 : vector<1x768xf32> to vector<16x768xf32>
    %7 = arith.addf %4, %6 : vector<16x768xf32>
    %8 = vector.extract_strided_slice %7 {offsets = [0, 0], sizes = [16, 384], strides = [1, 1]} : vector<16x768xf32> to vector<16x384xf32>
    %9 = arith.truncf %8 : vector<16x384xf32> to vector<16x384xbf16>
    %c0_7 = arith.constant 0 : index
    %c0_8 = arith.constant 0 : index
    %10 = vector.load %arg5[%c0_7, %c0_8] : memref<16x384xbf16, #tpu.memory_space<vmem>>, vector<16x384xbf16>
    tpu.vector_store %arg5[%c0_7, %c0_8], %9 {strides = array<i32>} : memref<16x384xbf16, #tpu.memory_space<vmem>>, vector<16x384xbf16>,
    %11 = vector.extract_strided_slice %7 {offsets = [0, 384], sizes = [16, 384], strides = [1, 1]} : vector<16x768xf32> to vector<16x384xf32>
    %12 = arith.truncf %11 : vector<16x384xf32> to vector<16x384xbf16>
    %c0_9 = arith.constant 0 : index
    %c0_10 = arith.constant 0 : index
    %13 = vector.load %arg6[%c0_9, %c0_10] : memref<16x384xbf16, #tpu.memory_space<vmem>>, vector<16x384xbf16>
    tpu.vector_store %arg6[%c0_9, %c0_10], %12 {strides = array<i32>} : memref<16x384xbf16, #tpu.memory_space<vmem>>, vector<16x384xbf16>,
    return
  }
  func.func @transform_0(%arg0: i32) -> (i32, i32) {
    %c0_i32 = arith.constant 0 : i32
    %c0_i32_0 = arith.constant 0 : i32
    return %arg0, %c0_i32 : i32, i32
  }
  func.func @transform_1(%arg0: i32) -> (i32, i32) {
    %c0_i32 = arith.constant 0 : i32
    %c0_i32_0 = arith.constant 0 : i32
    return %arg0, %c0_i32 : i32, i32
  }
  func.func @transform_2(%arg0: i32) -> (i32, i32) {
    %c0_i32 = arith.constant 0 : i32
    %c0_i32_0 = arith.constant 0 : i32
    %c0_i32_1 = arith.constant 0 : i32
    return %c0_i32, %c0_i32_0 : i32, i32
  }
  func.func @transform_3(%arg0: i32) -> (i32, i32) {
    %c0_i32 = arith.constant 0 : i32
    %c0_i32_0 = arith.constant 0 : i32
    %c0_i32_1 = arith.constant 0 : i32
    return %c0_i32, %c0_i32_0 : i32, i32
  }
  func.func @transform_4(%arg0: i32) -> (i32, i32) {
    %c0_i32 = arith.constant 0 : i32
    %c0_i32_0 = arith.constant 0 : i32
    return %arg0, %c0_i32 : i32, i32
  }
  func.func @transform_5(%arg0: i32) -> (i32, i32) {
    %c0_i32 = arith.constant 0 : i32
    %c0_i32_0 = arith.constant 0 : i32
    return %arg0, %c0_i32 : i32, i32
  }
}

</mosaic_0001>

<llo_original>
// kernel: stackedbigru_forward.9
$region0: #{stackedbigru_forward.9}
  #allocation0 [shape = 'u32[]', space=smem, size = 0x4, offset = 0x4, fixed_abs, tag = 'smem constant byte address 0x4 - core index']
  #allocation1 [shape = 'u32[72,128]{1,0:T(1,128)}', space=vmem, size = 0x9000, scoped, tag = 'internal scratch']
  %s0 = inlined_call_operand.vmem [shape: bf16[16,16], index: 0, kind: input, shape index: {}]
  %s1 = inlined_call_operand.hbm [shape: bf16[16,768], index: 1, kind: input, shape index: {}]
  %s2 = inlined_call_operand.vmem [shape: f32[1,768], index: 2, kind: input, shape index: {}]
  %s3 = inlined_call_operand.vmem [shape: bf16[16,384], index: 3, kind: output, shape index: {0}]
  %s4 = inlined_call_operand.vmem [shape: bf16[16,384], index: 4, kind: output, shape index: {1}]
  %5 = xla_tuple %s3, %s4
  %s6 = sld [smem:[#allocation0]]
  $region34: #{stackedbigru_forward.9} parent=0
    _
  %s8 = ssub.s32 1, %s6
  %s9 = scalar_select 0, %s8, %s6
  $region1: #{stackedbigru_forward.9} parent=0
    #allocation2 [shape = 'u8[24576]{0}', space=vmem, size = 0x6000, scoped, tag = 'input window, operand 1, single buffered']
    #allocation3 [shape = 's32[1]{0}', space=sflag, size = 0x4, scoped, tag = 'scoped memory for stackedbigru_forward.9']
    %10 = vsyncpa [#allocation3], 0
    // Predicated region
    $region2: #{stackedbigru_forward.9} parent=1 // pred_check
      _
    $region3: #{stackedbigru_forward.9} parent=1 // pred_check_branch
      %12 = sbr.rel (0) target = $region5
    $region4: #{stackedbigru_forward.9} parent=1 // pred_region
      _
    $region5: #{stackedbigru_forward.9} parent=1 // pred_fallthru
      _
    // Predicated region
    $region6: #{stackedbigru_forward.9} parent=1 // pred_check
      _
    $region7: #{stackedbigru_forward.9} parent=1 // pred_check_branch
      %14 = sbr.rel (0) target = $region9
    $region8: #{stackedbigru_forward.9} parent=1 // pred_region
      %16 = vsyncadd [#allocation3], 0
      %s17 = sshll.u32 %s1, 4
      %s18 = int_to_ptr.hbm [resolvable:$true] %s17
      %s19 = sshll.u32 [#allocation2], 4
      %s20 = int_to_ptr.vmem [resolvable:$true] %s19
      %25 = dma.hbm_to_vmem [thread:$0]  %s18, 768, %s20, [#allocation3], 384, 384, 24
    $region9: #{stackedbigru_forward.9} parent=1 // pred_fallthru
      _
    // Predicated region
    $region10: #{stackedbigru_forward.9} parent=1 // pred_check
      _
    $region11: #{stackedbigru_forward.9} parent=1 // pred_check_branch
      %27 = sbr.rel (0) target = $region13
    $region12: #{stackedbigru_forward.9} parent=1 // pred_region
      _
    $region13: #{stackedbigru_forward.9} parent=1 // pred_fallthru
      _
    // Predicated region
    $region14: #{stackedbigru_forward.9} parent=1 // pred_check
      _
    $region15: #{stackedbigru_forward.9} parent=1 // pred_check_branch
      %29 = sbr.rel (0) target = $region17
    $region16: #{stackedbigru_forward.9} parent=1 // pred_region
      %31 = dma.done [#allocation3], 768
    $region17: #{stackedbigru_forward.9} parent=1 // pred_fallthru
      _
    %v33 = vld [vmem:[%s0] sm:$0xf]
    %v34 = vld [vmem:[%s0 + $0x4] sm:$0xf]
    %v35 = vld [vmem:[#allocation2] sm:$0xff]
    %v36 = vld [vmem:[#allocation2 + $0x8] sm:$0xff]
    %v37 = vld [vmem:[#allocation2 + $0x10] sm:$0xff]
    %v38 = vld [vmem:[#allocation2 + $0x18] sm:$0xff]
    %v39 = vld [vmem:[#allocation2 + $0x20] sm:$0xff]
    %v40 = vld [vmem:[#allocation2 + $0x28] sm:$0xff]
    %v41 = vld [vmem:[%s2] sm:$0x3f]
    %v43 = vperm.slane %v41, 0
    %v44 = vperm.slane %v41, 1
    %v45 = vperm.slane %v41, 2
    %v46 = vperm.slane %v41, 3
    %v47 = vperm.slane %v41, 4
    %v48 = vperm.slane %v41, 5
    %v57 = vunpack.c.l.b16 %v33
    %v58 = vunpack.c.l.b16 %v34
    %v59 = vpack.c.b16 %v58, %v57
    %v66 = vunpack.c.l.b16 %v35
    %v67 = vunpack.c.h.b16 %v35
    %v68 = vunpack.c.l.b16 %v36
    %v69 = vunpack.c.h.b16 %v36
    %v70 = vunpack.c.l.b16 %v37
    %v71 = vunpack.c.h.b16 %v37
    %v72 = vunpack.c.l.b16 %v38
    %v73 = vunpack.c.h.b16 %v38
    %v74 = vunpack.c.l.b16 %v39
    %v75 = vunpack.c.h.b16 %v39
    %v76 = vunpack.c.l.b16 %v40
    %v77 = vunpack.c.h.b16 %v40
    %v78 = vpack.c.b16 %v72, %v66
    %v79 = vpack.c.b16 %v73, %v67
    %v80 = vpack.c.b16 %v74, %v68
    %v81 = vpack.c.b16 %v75, %v69
    %v82 = vpack.c.b16 %v76, %v70
    %v83 = vpack.c.b16 %v77, %v71
    %vm90 = vcmask 130048
    %v92 = vsel %vm90, %v59, 0
    %94 = vmatpush.bf16.msra.mxu0 0
    %95 = vmatpush.bf16.msra.mxu0 0
    %96 = vmatpush.bf16.msra.mxu0 0
    %97 = vmatpush.bf16.msra.mxu0 0
    %98 = vmatpush.bf16.msra.mxu0 0
    %99 = vmatpush.bf16.msra.mxu0 0
    %100 = vmatpush.bf16.msra.mxu0 0
    %101 = vmatpush.bf16.msra.mxu0 %v78
    %102 = vmatmul.bf16.gmra.mxu0 %v92
    %v103 = vpop.f32.mrf.mxu0
    %v104 = vadd.f32 %v43, %v103
    %v105 = vpop.f32.mrf.mxu0
    %v106 = vadd.f32 %v43, %v105
    %107 = vdwg.mxu0
    %108 = vmatpush.bf16.msra.mxu0 0
    %109 = vmatpush.bf16.msra.mxu0 0
    %110 = vmatpush.bf16.msra.mxu0 0
    %111 = vmatpush.bf16.msra.mxu0 0
    %112 = vmatpush.bf16.msra.mxu0 0
    %113 = vmatpush.bf16.msra.mxu0 0
    %114 = vmatpush.bf16.msra.mxu0 0
    %115 = vmatpush.bf16.msra.mxu0 %v79
    %116 = vmatmul.bf16.gmra.mxu0 %v92
    %v117 = vpop.f32.mrf.mxu0
    %v118 = vadd.f32 %v44, %v117
    %v119 = vpop.f32.mrf.mxu0
    %v120 = vadd.f32 %v44, %v119
    %121 = vdwg.mxu0
    %122 = vmatpush.bf16.msra.mxu0 0
    %123 = vmatpush.bf16.msra.mxu0 0
    %124 = vmatpush.bf16.msra.mxu0 0
    %125 = vmatpush.bf16.msra.mxu0 0
    %126 = vmatpush.bf16.msra.mxu0 0
    %127 = vmatpush.bf16.msra.mxu0 0
    %128 = vmatpush.bf16.msra.mxu0 0
    %129 = vmatpush.bf16.msra.mxu0 %v80
    %130 = vmatmul.bf16.gmra.mxu0 %v92
    %v131 = vpop.f32.mrf.mxu0
    %v132 = vadd.f32 %v45, %v131
    %v133 = vpop.f32.mrf.mxu0
    %v134 = vadd.f32 %v45, %v133
    %135 = vdwg.mxu0
    %136 = vmatpush.bf16.msra.mxu0 0
    %137 = vmatpush.bf16.msra.mxu0 0
    %138 = vmatpush.bf16.msra.mxu0 0
    %139 = vmatpush.bf16.msra.mxu0 0
    %140 = vmatpush.bf16.msra.mxu0 0
    %141 = vmatpush.bf16.msra.mxu0 0
    %142 = vmatpush.bf16.msra.mxu0 0
    %143 = vmatpush.bf16.msra.mxu0 %v81
    %144 = vmatmul.bf16.gmra.mxu0 %v92
    %v145 = vpop.f32.mrf.mxu0
    %v146 = vadd.f32 %v46, %v145
    %v147 = vpop.f32.mrf.mxu0
    %v148 = vadd.f32 %v46, %v147
    %149 = vdwg.mxu0
    %150 = vmatpush.bf16.msra.mxu0 0
    %151 = vmatpush.bf16.msra.mxu0 0
    %152 = vmatpush.bf16.msra.mxu0 0
    %153 = vmatpush.bf16.msra.mxu0 0
    %154 = vmatpush.bf16.msra.mxu0 0
    %155 = vmatpush.bf16.msra.mxu0 0
    %156 = vmatpush.bf16.msra.mxu0 0
    %157 = vmatpush.bf16.msra.mxu0 %v82
    %158 = vmatmul.bf16.gmra.mxu0 %v92
    %v159 = vpop.f32.mrf.mxu0
    %v160 = vadd.f32 %v47, %v159
    %v161 = vpop.f32.mrf.mxu0
    %v162 = vadd.f32 %v47, %v161
    %163 = vdwg.mxu0
    %164 = vmatpush.bf16.msra.mxu0 0
    %165 = vmatpush.bf16.msra.mxu0 0
    %166 = vmatpush.bf16.msra.mxu0 0
    %167 = vmatpush.bf16.msra.mxu0 0
    %168 = vmatpush.bf16.msra.mxu0 0
    %169 = vmatpush.bf16.msra.mxu0 0
    %170 = vmatpush.bf16.msra.mxu0 0
    %171 = vmatpush.bf16.msra.mxu0 %v83
    %172 = vmatmul.bf16.gmra.mxu0 %v92
    %v173 = vpop.f32.mrf.mxu0
    %v174 = vadd.f32 %v48, %v173
    %v175 = vpop.f32.mrf.mxu0
    %v176 = vadd.f32 %v48, %v175
    %177 = vdwg.mxu0
    %v178 = vpack.c.bf16 %v118, %v104
    %v179 = vpack.c.bf16 %v132, %v132
    %v180 = vpack.c.bf16 %v120, %v106
    %v181 = vpack.c.bf16 %v134, %v134
    %182 = vst [vmem:[%s3] sm:$0xff] %v178
    %183 = vst [vmem:[%s3 + $0x8] sm:$0xf] %v179
    %184 = vst [vmem:[%s3 + $0xc] sm:$0xff] %v180
    %185 = vst [vmem:[%s3 + $0x14] sm:$0xf] %v181
    %v186 = vpack.c.bf16 %v160, %v146
    %v187 = vpack.c.bf16 %v174, %v174
    %v188 = vpack.c.bf16 %v162, %v148
    %v189 = vpack.c.bf16 %v176, %v176
    %190 = vst [vmem:[%s4] sm:$0xff] %v186
    %191 = vst [vmem:[%s4 + $0x8] sm:$0xf] %v187
    %192 = vst [vmem:[%s4 + $0xc] sm:$0xff] %v188
    %193 = vst [vmem:[%s4 + $0x14] sm:$0xf] %v189
    // Predicated region
    $region18: #{stackedbigru_forward.9} parent=1 // pred_check
      _
    $region19: #{stackedbigru_forward.9} parent=1 // pred_check_branch
      %195 = sbr.rel (0) target = $region21
    $region20: #{stackedbigru_forward.9} parent=1 // pred_region
      _
    $region21: #{stackedbigru_forward.9} parent=1 // pred_fallthru
      _
    // Predicated region
    $region22: #{stackedbigru_forward.9} parent=1 // pred_check
      _
    $region23: #{stackedbigru_forward.9} parent=1 // pred_check_branch
      %197 = sbr.rel (0) target = $region25
    $region24: #{stackedbigru_forward.9} parent=1 // pred_region
      _
    $region25: #{stackedbigru_forward.9} parent=1 // pred_fallthru
      _
    // Predicated region
    $region26: #{stackedbigru_forward.9} parent=1 // pred_check
      _
    $region27: #{stackedbigru_forward.9} parent=1 // pred_check_branch
      %199 = sbr.rel (0) target = $region29
    $region28: #{stackedbigru_forward.9} parent=1 // pred_region
      _
    $region29: #{stackedbigru_forward.9} parent=1 // pred_fallthru
      _
    // Predicated region
    $region30: #{stackedbigru_forward.9} parent=1 // pred_check
      _
    $region31: #{stackedbigru_forward.9} parent=1 // pred_check_branch
      %201 = sbr.rel (0) target = $region33
    $region32: #{stackedbigru_forward.9} parent=1 // pred_region
      _
    $region33: #{stackedbigru_forward.9} parent=1 // pred_fallthru
      _
    %202 = vsyncpa [#allocation3], 1

// kernel: stackedbigru_forward.17
$region0: #{stackedbigru_forward.17}
  #allocation0 [shape = 'u32[]', space=smem, size = 0x4, offset = 0x4, fixed_abs, tag = 'smem constant byte address 0x4 - core index']
  #allocation1 [shape = 'u32[72,128]{1,0:T(1,128)}', space=vmem, size = 0x9000, scoped, tag = 'internal scratch']
  %s0 = inlined_call_operand.vmem [shape: bf16[16,128], index: 0, kind: input, shape index: {}]
  %s1 = inlined_call_operand.vmem [shape: bf16[16,128], index: 1, kind: input, shape index: {}]
  %s2 = inlined_call_operand.vmem [shape: bf16[128,64], index: 2, kind: input, shape index: {}]
  %s3 = inlined_call_operand.vmem [shape: bf16[128,64], index: 3, kind: input, shape index: {}]
  %s4 = inlined_call_operand.vmem [shape: f32[1,64], index: 4, kind: input, shape index: {}]
  %s5 = inlined_call_operand.vmem [shape: bf16[64,128], index: 5, kind: input, shape index: {}]
  %s6 = inlined_call_operand.vmem [shape: f32[1,128], index: 6, kind: input, shape index: {}]
  %s7 = inlined_call_operand.vmem [shape: f32[16,128], index: 7, kind: output, shape index: {}]
  %s8 = sld [smem:[#allocation0]]
  $region38: #{stackedbigru_forward.17} parent=0
    _
  %s10 = ssub.s32 1, %s8
  %s11 = scalar_select 0, %s10, %s8
  // Predicated region
  $region2: #{stackedbigru_forward.17} parent=0 // pred_check
    _
  $region3: #{stackedbigru_forward.17} parent=0 // pred_check_branch
    %13 = sbr.rel (0) target = $region5
  $region4: #{stackedbigru_forward.17} parent=0 // pred_region
    _
  $region5: #{stackedbigru_forward.17} parent=0 // pred_fallthru
    _
  // Predicated region
  $region6: #{stackedbigru_forward.17} parent=0 // pred_check
    _
  $region7: #{stackedbigru_forward.17} parent=0 // pred_check_branch
    %15 = sbr.rel (0) target = $region9
  $region8: #{stackedbigru_forward.17} parent=0 // pred_region
    _
  $region9: #{stackedbigru_forward.17} parent=0 // pred_fallthru
    _
  // Predicated region
  $region10: #{stackedbigru_forward.17} parent=0 // pred_check
    _
  $region11: #{stackedbigru_forward.17} parent=0 // pred_check_branch
    %17 = sbr.rel (0) target = $region13
  $region12: #{stackedbigru_forward.17} parent=0 // pred_region
    _
  $region13: #{stackedbigru_forward.17} parent=0 // pred_fallthru
    _
  // Predicated region
  $region14: #{stackedbigru_forward.17} parent=0 // pred_check
    _
  $region15: #{stackedbigru_forward.17} parent=0 // pred_check_branch
    %19 = sbr.rel (0) target = $region17
  $region16: #{stackedbigru_forward.17} parent=0 // pred_region
    _
  $region17: #{stackedbigru_forward.17} parent=0 // pred_fallthru
    _
  // Predicated region
  $region18: #{stackedbigru_forward.17} parent=0 // pred_check
    _
  $region19: #{stackedbigru_forward.17} parent=0 // pred_check_branch
    %21 = sbr.rel (0) target = $region21
  $region20: #{stackedbigru_forward.17} parent=0 // pred_region
    _
  $region21: #{stackedbigru_forward.17} parent=0 // pred_fallthru
    _
  // Predicated region
  $region22: #{stackedbigru_forward.17} parent=0 // pred_check
    _
  $region23: #{stackedbigru_forward.17} parent=0 // pred_check_branch
    %23 = sbr.rel (0) target = $region25
  $region24: #{stackedbigru_forward.17} parent=0 // pred_region
    _
  $region25: #{stackedbigru_forward.17} parent=0 // pred_fallthru
    _
  // Predicated region
  $region26: #{stackedbigru_forward.17} parent=0 // pred_check
    _
  $region27: #{stackedbigru_forward.17} parent=0 // pred_check_branch
    %25 = sbr.rel (0) target = $region29
  $region28: #{stackedbigru_forward.17} parent=0 // pred_region
    _
  $region29: #{stackedbigru_forward.17} parent=0 // pred_fallthru
    _
  %v27 = vld [vmem:[%s0] sm:$0xf]
  %v28 = vld [vmem:[%s0 + $0x4] sm:$0xf]
  %v29 = vld [vmem:[%s2] sm:$0xf]
  %v30 = vld [vmem:[%s2 + $0x4] sm:$0xf]
  %v31 = vld [vmem:[%s2 + $0x8] sm:$0xf]
  %v32 = vld [vmem:[%s2 + $0xc] sm:$0xf]
  %v33 = vld [vmem:[%s2 + $0x10] sm:$0xf]
  %v34 = vld [vmem:[%s2 + $0x14] sm:$0xf]
  %v35 = vld [vmem:[%s2 + $0x18] sm:$0xf]
  %v36 = vld [vmem:[%s2 + $0x1c] sm:$0xf]
  %v37 = vld [vmem:[%s2 + $0x20] sm:$0xf]
  %v38 = vld [vmem:[%s2 + $0x24] sm:$0xf]
  %v39 = vld [vmem:[%s2 + $0x28] sm:$0xf]
  %v40 = vld [vmem:[%s2 + $0x2c] sm:$0xf]
  %v41 = vld [vmem:[%s2 + $0x30] sm:$0xf]
  %v42 = vld [vmem:[%s2 + $0x34] sm:$0xf]
  %v43 = vld [vmem:[%s2 + $0x38] sm:$0xf]
  %v44 = vld [vmem:[%s2 + $0x3c] sm:$0xf]
  %v45 = vld [vmem:[%s1] sm:$0xf]
  %v46 = vld [vmem:[%s1 + $0x4] sm:$0xf]
  %v47 = vld [vmem:[%s3] sm:$0xf]
  %v48 = vld [vmem:[%s3 + $0x4] sm:$0xf]
  %v49 = vld [vmem:[%s3 + $0x8] sm:$0xf]
  %v50 = vld [vmem:[%s3 + $0xc] sm:$0xf]
  %v51 = vld [vmem:[%s3 + $0x10] sm:$0xf]
  %v52 = vld [vmem:[%s3 + $0x14] sm:$0xf]
  %v53 = vld [vmem:[%s3 + $0x18] sm:$0xf]
  %v54 = vld [vmem:[%s3 + $0x1c] sm:$0xf]
  %v55 = vld [vmem:[%s3 + $0x20] sm:$0xf]
  %v56 = vld [vmem:[%s3 + $0x24] sm:$0xf]
  %v57 = vld [vmem:[%s3 + $0x28] sm:$0xf]
  %v58 = vld [vmem:[%s3 + $0x2c] sm:$0xf]
  %v59 = vld [vmem:[%s3 + $0x30] sm:$0xf]
  %v60 = vld [vmem:[%s3 + $0x34] sm:$0xf]
  %v61 = vld [vmem:[%s3 + $0x38] sm:$0xf]
  %v62 = vld [vmem:[%s3 + $0x3c] sm:$0xf]
  %v65 = vunpack.c.l.b16 %v45
  %v66 = vunpack.c.l.b16 %v46
  %v67 = vpack.c.b16 %v66, %v65
  %v85 = vunpack.c.l.b16 %v47
  %v86 = vunpack.c.l.b16 %v48
  %v87 = vunpack.c.l.b16 %v49
  %v88 = vunpack.c.l.b16 %v50
  %v89 = vunpack.c.l.b16 %v51
  %v90 = vunpack.c.l.b16 %v52
  %v91 = vunpack.c.l.b16 %v53
  %v92 = vunpack.c.l.b16 %v54
  %v93 = vunpack.c.l.b16 %v55
  %v94 = vunpack.c.l.b16 %v56
  %v95 = vunpack.c.l.b16 %v57
  %v96 = vunpack.c.l.b16 %v58
  %v97 = vunpack.c.l.b16 %v59
  %v98 = vunpack.c.l.b16 %v60
  %v99 = vunpack.c.l.b16 %v61
  %v100 = vunpack.c.l.b16 %v62
  %v101 = vpack.c.b16 %v86, %v85
  %v102 = vpack.c.b16 %v88, %v87
  %v103 = vpack.c.b16 %v90, %v89
  %v104 = vpack.c.b16 %v92, %v91
  %v105 = vpack.c.b16 %v94, %v93
  %v106 = vpack.c.b16 %v96, %v95
  %v107 = vpack.c.b16 %v98, %v97
  %v108 = vpack.c.b16 %v100, %v99
  %117 = vmatpush.bf16.msra.mxu0 %v108
  %118 = vmatpush.bf16.msra.mxu0 %v107
  %119 = vmatpush.bf16.msra.mxu0 %v106
  %120 = vmatpush.bf16.msra.mxu0 %v105
  %121 = vmatpush.bf16.msra.mxu0 %v104
  %122 = vmatpush.bf16.msra.mxu0 %v103
  %123 = vmatpush.bf16.msra.mxu0 %v102
  %124 = vmatpush.bf16.msra.mxu0 %v101
  %125 = vmatmul.bf16.gmra.mxu0 %v67
  %v126 = vpop.f32.mrf.mxu0
  %v127 = vadd.f32 0.0, %v126
  %v128 = vpop.f32.mrf.mxu0
  %v129 = vadd.f32 0.0, %v128
  %130 = vdwg.mxu0
  %v133 = vunpack.c.l.b16 %v27
  %v134 = vunpack.c.l.b16 %v28
  %v135 = vpack.c.b16 %v134, %v133
  %v153 = vunpack.c.l.b16 %v29
  %v154 = vunpack.c.l.b16 %v30
  %v155 = vunpack.c.l.b16 %v31
  %v156 = vunpack.c.l.b16 %v32
  %v157 = vunpack.c.l.b16 %v33
  %v158 = vunpack.c.l.b16 %v34
  %v159 = vunpack.c.l.b16 %v35
  %v160 = vunpack.c.l.b16 %v36
  %v161 = vunpack.c.l.b16 %v37
  %v162 = vunpack.c.l.b16 %v38
  %v163 = vunpack.c.l.b16 %v39
  %v164 = vunpack.c.l.b16 %v40
  %v165 = vunpack.c.l.b16 %v41
  %v166 = vunpack.c.l.b16 %v42
  %v167 = vunpack.c.l.b16 %v43
  %v168 = vunpack.c.l.b16 %v44
  %v169 = vpack.c.b16 %v154, %v153
  %v170 = vpack.c.b16 %v156, %v155
  %v171 = vpack.c.b16 %v158, %v157
  %v172 = vpack.c.b16 %v160, %v159
  %v173 = vpack.c.b16 %v162, %v161
  %v174 = vpack.c.b16 %v164, %v163
  %v175 = vpack.c.b16 %v166, %v165
  %v176 = vpack.c.b16 %v168, %v167
  %185 = vmatpush.bf16.msra.mxu0 %v176
  %186 = vmatpush.bf16.msra.mxu0 %v175
  %187 = vmatpush.bf16.msra.mxu0 %v174
  %188 = vmatpush.bf16.msra.mxu0 %v173
  %189 = vmatpush.bf16.msra.mxu0 %v172
  %190 = vmatpush.bf16.msra.mxu0 %v171
  %191 = vmatpush.bf16.msra.mxu0 %v170
  %192 = vmatpush.bf16.msra.mxu0 %v169
  %193 = vmatmul.bf16.gmra.mxu0 %v135
  %v194 = vpop.f32.mrf.mxu0
  %v195 = vadd.f32 %v127, %v194
  %v196 = vpop.f32.mrf.mxu0
  %v197 = vadd.f32 %v129, %v196
  %198 = vdwg.mxu0
  %v199 = vld [vmem:[%s4] sm:$0x1]
  %v201 = vperm.slane %v199, 0
  %v203 = vadd.f32 %v195, %v201
  %v204 = vadd.f32 %v197, %v201
  %v205 = vpack.c.bf16 %v204, %v203
  %v206 = vld [vmem:[%s5] sm:$0xf]
  %v207 = vld [vmem:[%s5 + $0x4] sm:$0xf]
  %v208 = vld [vmem:[%s5 + $0x8] sm:$0xf]
  %v209 = vld [vmem:[%s5 + $0xc] sm:$0xf]
  %v210 = vld [vmem:[%s5 + $0x10] sm:$0xf]
  %v211 = vld [vmem:[%s5 + $0x14] sm:$0xf]
  %v212 = vld [vmem:[%s5 + $0x18] sm:$0xf]
  %v213 = vld [vmem:[%s5 + $0x1c] sm:$0xf]
  %v214 = vld [vmem:[%s6] sm:$0x1]
  %v216 = vperm.slane %v214, 0
  %v226 = vunpack.c.l.b16 %v206
  %v227 = vunpack.c.l.b16 %v207
  %v228 = vunpack.c.l.b16 %v208
  %v229 = vunpack.c.l.b16 %v209
  %v230 = vunpack.c.l.b16 %v210
  %v231 = vunpack.c.l.b16 %v211
  %v232 = vunpack.c.l.b16 %v212
  %v233 = vunpack.c.l.b16 %v213
  %v234 = vpack.c.b16 %v227, %v226
  %v235 = vpack.c.b16 %v229, %v228
  %v236 = vpack.c.b16 %v231, %v230
  %v237 = vpack.c.b16 %v233, %v232
  %vm242 = vcmask 523264
  %v244 = vsel %vm242, %v205, 0
  %246 = vmatpush.bf16.msra.mxu0 0
  %247 = vmatpush.bf16.msra.mxu0 0
  %248 = vmatpush.bf16.msra.mxu0 0
  %249 = vmatpush.bf16.msra.mxu0 0
  %250 = vmatpush.bf16.msra.mxu0 %v237
  %251 = vmatpush.bf16.msra.mxu0 %v236
  %252 = vmatpush.bf16.msra.mxu0 %v235
  %253 = vmatpush.bf16.msra.mxu0 %v234
  %254 = vmatmul.bf16.gmra.mxu0 %v244
  %v255 = vpop.f32.mrf.mxu0
  %v256 = vadd.f32 %v216, %v255
  %v257 = vpop.f32.mrf.mxu0
  %v258 = vadd.f32 %v216, %v257
  %259 = vdwg.mxu0
  %260 = vmax.xlane.f32.xlu0 %v256
  %v261 = vpop.xlane.xlu0 %260
  %262 = vmax.xlane.f32.xlu0 %v258
  %v263 = vpop.xlane.xlu0 %262
  %v264 = vsub.f32 %v256, %v261
  %v265 = vsub.f32 %v258, %v263
  %v266 = vmul.f32 %v264, 1.442695
  %v267 = vpow.pop %v266
  %v268 = vmul.f32 %v265, 1.442695
  %v269 = vpow.pop %v268
  %270 = vadd.xlane.f32.xlu0 %v267
  %v271 = vpop.xlane.xlu0 %270
  %272 = vadd.xlane.f32.xlu0 %v269
  %v273 = vpop.xlane.xlu0 %272
  %v274 = vrcp.pop %v271
  %v275 = vmul.f32 %v271, %v274
  %v276 = vsub.f32 1.0, %v275
  %v277 = vmul.f32 %v274, %v276
  %v278 = vadd.f32 %v274, %v277
  %vm279 = vweird.f32 %v271
  %vm280 = vweird.f32 %v274
  %vm281 = vmor %vm279, %vm280
  %v282 = vsel %vm281, %v274, %v278
  %v283 = vand.u32 2147483647, %v271
  %vm284 = vcmp.eq.f32.partialorder %v283, 8.507059e+37
  %v285 = vand.u32 %v271, 2147483648
  %v286 = vor.u32 1.1754944e-38, %v285
  %v287 = vsel %vm284, %v286, %v282
  %v288 = vmul.f32 %v267, %v287
  %v289 = vrcp.pop %v273
  %v290 = vmul.f32 %v273, %v289
  %v291 = vsub.f32 1.0, %v290
  %v292 = vmul.f32 %v289, %v291
  %v293 = vadd.f32 %v289, %v292
  %vm294 = vweird.f32 %v273
  %vm295 = vweird.f32 %v289
  %vm296 = vmor %vm294, %vm295
  %v297 = vsel %vm296, %v289, %v293
  %v298 = vand.u32 2147483647, %v273
  %vm299 = vcmp.eq.f32.partialorder %v298, 8.507059e+37
  %v300 = vand.u32 %v273, 2147483648
  %v301 = vor.u32 1.1754944e-38, %v300
  %v302 = vsel %vm299, %v301, %v297
  %v303 = vmul.f32 %v269, %v302
  %304 = vst [vmem:[%s7] sm:$0xff] %v288
  %305 = vst [vmem:[%s7 + $0x8] sm:$0xff] %v303
  // Predicated region
  $region30: #{stackedbigru_forward.17} parent=0 // pred_check
    _
  $region31: #{stackedbigru_forward.17} parent=0 // pred_check_branch
    %307 = sbr.rel (0) target = $region33
  $region32: #{stackedbigru_forward.17} parent=0 // pred_region
    _
  $region33: #{stackedbigru_forward.17} parent=0 // pred_fallthru
    _
  // Predicated region
  $region34: #{stackedbigru_forward.17} parent=0 // pred_check
    _
  $region35: #{stackedbigru_forward.17} parent=0 // pred_check_branch
    %309 = sbr.rel (0) target = $region37
  $region36: #{stackedbigru_forward.17} parent=0 // pred_region
    _
  $region37: #{stackedbigru_forward.17} parent=0 // pred_fallthru
    _

// kernel: stackedbigru_forward.11
$region0: #{stackedbigru_forward.11}
  #allocation0 [shape = 'u32[]', space=smem, size = 0x4, offset = 0x4, fixed_abs, tag = 'smem constant byte address 0x4 - core index']
  #allocation1 [shape = 'u32[72,128]{1,0:T(1,128)}', space=vmem, size = 0x9000, scoped, tag = 'internal scratch']
  %s0 = inlined_call_operand.vmem [shape: bf16[16,128], index: 0, kind: input, shape index: {}]
  %s1 = inlined_call_operand.vmem [shape: bf16[16,128], index: 1, kind: input, shape index: {}]
  %s2 = inlined_call_operand.hbm [shape: bf16[256,768], index: 2, kind: input, shape index: {}]
  %s3 = inlined_call_operand.vmem [shape: f32[1,768], index: 3, kind: input, shape index: {}]
  %s4 = inlined_call_operand.vmem [shape: bf16[16,384], index: 4, kind: output, shape index: {0}]
  %s5 = inlined_call_operand.vmem [shape: bf16[16,384], index: 5, kind: output, shape index: {1}]
  %6 = xla_tuple %s4, %s5
  %s7 = sld [smem:[#allocation0]]
  $region38: #{stackedbigru_forward.11} parent=0
    _
  %s9 = ssub.s32 1, %s7
  %s10 = scalar_select 0, %s9, %s7
  $region1: #{stackedbigru_forward.11} parent=0
    #allocation2 [shape = 'u8[393216]{0}', space=vmem, size = 0x60000, scoped, tag = 'input window, operand 2, single buffered']
    #allocation3 [shape = 's32[1]{0}', space=sflag, size = 0x4, scoped, tag = 'scoped memory for stackedbigru_forward.11']
    %11 = vsyncpa [#allocation3], 0
    // Predicated region
    $region2: #{stackedbigru_forward.11} parent=1 // pred_check
      _
    $region3: #{stackedbigru_forward.11} parent=1 // pred_check_branch
      %13 = sbr.rel (0) target = $region5
    $region4: #{stackedbigru_forward.11} parent=1 // pred_region
      _
    $region5: #{stackedbigru_forward.11} parent=1 // pred_fallthru
      _
    // Predicated region
    $region6: #{stackedbigru_forward.11} parent=1 // pred_check
      _
    $region7: #{stackedbigru_forward.11} parent=1 // pred_check_branch
      %15 = sbr.rel (0) target = $region9
    $region8: #{stackedbigru_forward.11} parent=1 // pred_region
      _
    $region9: #{stackedbigru_forward.11} parent=1 // pred_fallthru
      _
    // Predicated region
    $region10: #{stackedbigru_forward.11} parent=1 // pred_check
      _
    $region11: #{stackedbigru_forward.11} parent=1 // pred_check_branch
      %17 = sbr.rel (0) target = $region13
    $region12: #{stackedbigru_forward.11} parent=1 // pred_region
      %19 = vsyncadd [#allocation3], 0
      %s20 = sshll.u32 %s2, 4
      %s21 = int_to_ptr.hbm [resolvable:$true] %s20
      %s22 = sshll.u32 [#allocation2], 4
      %s23 = int_to_ptr.vmem [resolvable:$true] %s22
      %28 = dma.hbm_to_vmem [thread:$0]  %s21, 12288, %s23, [#allocation3], 384, 384, 24
    $region13: #{stackedbigru_forward.11} parent=1 // pred_fallthru
      _
    // Predicated region
    $region14: #{stackedbigru_forward.11} parent=1 // pred_check
      _
    $region15: #{stackedbigru_forward.11} parent=1 // pred_check_branch
      %30 = sbr.rel (0) target = $region17
    $region16: #{stackedbigru_forward.11} parent=1 // pred_region
      _
    $region17: #{stackedbigru_forward.11} parent=1 // pred_fallthru
      _
    // Predicated region
    $region18: #{stackedbigru_forward.11} parent=1 // pred_check
      _
    $region19: #{stackedbigru_forward.11} parent=1 // pred_check_branch
      %32 = sbr.rel (0) target = $region21
    $region20: #{stackedbigru_forward.11} parent=1 // pred_region
      %34 = dma.done [#allocation3], 12288
    $region21: #{stackedbigru_forward.11} parent=1 // pred_fallthru
      _
    %v35 = vld [vmem:[%s0] sm:$0xf]
    %v36 = vld [vmem:[%s0 + $0x4] sm:$0xf]
    %v37 = vld [vmem:[%s1] sm:$0xf]
    %v38 = vld [vmem:[%s1 + $0x4] sm:$0xf]
    %v41 = vunpack.c.l.b16 %v35
    %v42 = vunpack.c.l.b16 %v36
    %v43 = vpack.c.b16 %v42, %v41
    %v47 = vunpack.c.l.b16 %v37
    %v48 = vunpack.c.l.b16 %v38
    %v49 = vpack.c.b16 %v48, %v47
    %v51 = vld [vmem:[#allocation2] sm:$0xff]
    %v52 = vld [vmem:[#allocation2 + $0x8] sm:$0xff]
    %v53 = vld [vmem:[#allocation2 + $0x10] sm:$0xff]
    %v54 = vld [vmem:[#allocation2 + $0x18] sm:$0xff]
    %v55 = vld [vmem:[#allocation2 + $0x20] sm:$0xff]
    %v56 = vld [vmem:[#allocation2 + $0x28] sm:$0xff]
    %v57 = vld [vmem:[#allocation2 + $0x30] sm:$0xff]
    %v58 = vld [vmem:[#allocation2 + $0x38] sm:$0xff]
    %v59 = vld [vmem:[#allocation2 + $0x40] sm:$0xff]
    %v60 = vld [vmem:[#allocation2 + $0x48] sm:$0xff]
    %v61 = vld [vmem:[#allocation2 + $0x50] sm:$0xff]
    %v62 = vld [vmem:[#allocation2 + $0x58] sm:$0xff]
    %v63 = vld [vmem:[#allocation2 + $0x60] sm:$0xff]
    %v64 = vld [vmem:[#allocation2 + $0x68] sm:$0xff]
    %v65 = vld [vmem:[#allocation2 + $0x70] sm:$0xff]
    %v66 = vld [vmem:[#allocation2 + $0x78] sm:$0xff]
    %v67 = vld [vmem:[#allocation2 + $0x80] sm:$0xff]
    %v68 = vld [vmem:[#allocation2 + $0x88] sm:$0xff]
    %v69 = vld [vmem:[#allocation2 + $0x90] sm:$0xff]
    %v70 = vld [vmem:[#allocation2 + $0x98] sm:$0xff]
    %v71 = vld [vmem:[#allocation2 + $0xa0] sm:$0xff]
    %v72 = vld [vmem:[#allocation2 + $0xa8] sm:$0xff]
    %v73 = vld [vmem:[#allocation2 + $0xb0] sm:$0xff]
    %v74 = vld [vmem:[#allocation2 + $0xb8] sm:$0xff]
    %v75 = vld [vmem:[#allocation2 + $0xc0] sm:$0xff]
    %v76 = vld [vmem:[#allocation2 + $0xc8] sm:$0xff]
    %v77 = vld [vmem:[#allocation2 + $0xd0] sm:$0xff]
    %v78 = vld [vmem:[#allocation2 + $0xd8] sm:$0xff]
    %v79 = vld [vmem:[#allocation2 + $0xe0] sm:$0xff]
    %v80 = vld [vmem:[#allocation2 + $0xe8] sm:$0xff]
    %v81 = vld [vmem:[#allocation2 + $0xf0] sm:$0xff]
    %v82 = vld [vmem:[#allocation2 + $0xf8] sm:$0xff]
    %v83 = vld [vmem:[#allocation2 + $0x100] sm:$0xff]
    %v84 = vld [vmem:[#allocation2 + $0x108] sm:$0xff]
    %v85 = vld [vmem:[#allocation2 + $0x110] sm:$0xff]
    %v86 = vld [vmem:[#allocation2 + $0x118] sm:$0xff]
    %v87 = vld [vmem:[#allocation2 + $0x120] sm:$0xff]
    %v88 = vld [vmem:[#allocation2 + $0x128] sm:$0xff]
    %v89 = vld [vmem:[#allocation2 + $0x130] sm:$0xff]
    %v90 = vld [vmem:[#allocation2 + $0x138] sm:$0xff]
    %v91 = vld [vmem:[#allocation2 + $0x140] sm:$0xff]
    %v92 = vld [vmem:[#allocation2 + $0x148] sm:$0xff]
    %v93 = vld [vmem:[#allocation2 + $0x150] sm:$0xff]
    %v94 = vld [vmem:[#allocation2 + $0x158] sm:$0xff]
    %v95 = vld [vmem:[#allocation2 + $0x160] sm:$0xff]
    %v96 = vld [vmem:[#allocation2 + $0x168] sm:$0xff]
    %v97 = vld [vmem:[#allocation2 + $0x170] sm:$0xff]
    %v98 = vld [vmem:[#allocation2 + $0x178] sm:$0xff]
    %v99 = vld [vmem:[#allocation2 + $0x180] sm:$0xff]
    %v100 = vld [vmem:[#allocation2 + $0x188] sm:$0xff]
    %v101 = vld [vmem:[#allocation2 + $0x190] sm:$0xff]
    %v102 = vld [vmem:[#allocation2 + $0x198] sm:$0xff]
    %v103 = vld [vmem:[#allocation2 + $0x1a0] sm:$0xff]
    %v104 = vld [vmem:[#allocation2 + $0x1a8] sm:$0xff]
    %v105 = vld [vmem:[#allocation2 + $0x1b0] sm:$0xff]
    %v106 = vld [vmem:[#allocation2 + $0x1b8] sm:$0xff]
    %v107 = vld [vmem:[#allocation2 + $0x1c0] sm:$0xff]
    %v108 = vld [vmem:[#allocation2 + $0x1c8] sm:$0xff]
    %v109 = vld [vmem:[#allocation2 + $0x1d0] sm:$0xff]
    %v110 = vld [vmem:[#allocation2 + $0x1d8] sm:$0xff]
    %v111 = vld [vmem:[#allocation2 + $0x1e0] sm:$0xff]
    %v112 = vld [vmem:[#allocation2 + $0x1e8] sm:$0xff]
    %v113 = vld [vmem:[#allocation2 + $0x1f0] sm:$0xff]
    %v114 = vld [vmem:[#allocation2 + $0x1f8] sm:$0xff]
    %v115 = vld [vmem:[#allocation2 + $0x200] sm:$0xff]
    %v116 = vld [vmem:[#allocation2 + $0x208] sm:$0xff]
    %v117 = vld [vmem:[#allocation2 + $0x210] sm:$0xff]
    %v118 = vld [vmem:[#allocation2 + $0x218] sm:$0xff]
    %v119 = vld [vmem:[#allocation2 + $0x220] sm:$0xff]
    %v120 = vld [vmem:[#allocation2 + $0x228] sm:$0xff]
    %v121 = vld [vmem:[#allocation2 + $0x230] sm:$0xff]
    %v122 = vld [vmem:[#allocation2 + $0x238] sm:$0xff]
    %v123 = vld [vmem:[#allocation2 + $0x240] sm:$0xff]
    %v124 = vld [vmem:[#allocation2 + $0x248] sm:$0xff]
    %v125 = vld [vmem:[#allocation2 + $0x250] sm:$0xff]
    %v126 = vld [vmem:[#allocation2 + $0x258] sm:$0xff]
    %v127 = vld [vmem:[#allocation2 + $0x260] sm:$0xff]
    %v128 = vld [vmem:[#allocation2 + $0x268] sm:$0xff]
    %v129 = vld [vmem:[#allocation2 + $0x270] sm:$0xff]
    %v130 = vld [vmem:[#allocation2 + $0x278] sm:$0xff]
    %v131 = vld [vmem:[#allocation2 + $0x280] sm:$0xff]
    %v132 = vld [vmem:[#allocation2 + $0x288] sm:$0xff]
    %v133 = vld [vmem:[#allocation2 + $0x290] sm:$0xff]
    %v134 = vld [vmem:[#allocation2 + $0x298] sm:$0xff]
    %v135 = vld [vmem:[#allocation2 + $0x2a0] sm:$0xff]
    %v136 = vld [vmem:[#allocation2 + $0x2a8] sm:$0xff]
    %v137 = vld [vmem:[#allocation2 + $0x2b0] sm:$0xff]
    %v138 = vld [vmem:[#allocation2 + $0x2b8] sm:$0xff]
    %v139 = vld [vmem:[#allocation2 + $0x2c0] sm:$0xff]
    %v140 = vld [vmem:[#allocation2 + $0x2c8] sm:$0xff]
    %v141 = vld [vmem:[#allocation2 + $0x2d0] sm:$0xff]
    %v142 = vld [vmem:[#allocation2 + $0x2d8] sm:$0xff]
    %v143 = vld [vmem:[#allocation2 + $0x2e0] sm:$0xff]
    %v144 = vld [vmem:[#allocation2 + $0x2e8] sm:$0xff]
    %v145 = vld [vmem:[#allocation2 + $0x2f0] sm:$0xff]
    %v146 = vld [vmem:[#allocation2 + $0x2f8] sm:$0xff]
    %v147 = vld [vmem:[%s3] sm:$0x3f]
    %v149 = vperm.slane %v147, 0
    %v150 = vperm.slane %v147, 1
    %v151 = vperm.slane %v147, 2
    %v152 = vperm.slane %v147, 3
    %v153 = vperm.slane %v147, 4
    %v154 = vperm.slane %v147, 5
    %v257 = vunpack.c.l.b16 %v51
    %v258 = vunpack.c.h.b16 %v51
    %v259 = vunpack.c.l.b16 %v52
    %v260 = vunpack.c.h.b16 %v52
    %v261 = vunpack.c.l.b16 %v53
    %v262 = vunpack.c.h.b16 %v53
    %v263 = vunpack.c.l.b16 %v54
    %v264 = vunpack.c.h.b16 %v54
    %v265 = vunpack.c.l.b16 %v55
    %v266 = vunpack.c.h.b16 %v55
    %v267 = vunpack.c.l.b16 %v56
    %v268 = vunpack.c.h.b16 %v56
    %v269 = vunpack.c.l.b16 %v57
    %v270 = vunpack.c.h.b16 %v57
    %v271 = vunpack.c.l.b16 %v58
    %v272 = vunpack.c.h.b16 %v58
    %v273 = vunpack.c.l.b16 %v59
    %v274 = vunpack.c.h.b16 %v59
    %v275 = vunpack.c.l.b16 %v60
    %v276 = vunpack.c.h.b16 %v60
    %v277 = vunpack.c.l.b16 %v61
    %v278 = vunpack.c.h.b16 %v61
    %v279 = vunpack.c.l.b16 %v62
    %v280 = vunpack.c.h.b16 %v62
    %v281 = vunpack.c.l.b16 %v63
    %v282 = vunpack.c.h.b16 %v63
    %v283 = vunpack.c.l.b16 %v64
    %v284 = vunpack.c.h.b16 %v64
    %v285 = vunpack.c.l.b16 %v65
    %v286 = vunpack.c.h.b16 %v65
    %v287 = vunpack.c.l.b16 %v66
    %v288 = vunpack.c.h.b16 %v66
    %v289 = vunpack.c.l.b16 %v67
    %v290 = vunpack.c.h.b16 %v67
    %v291 = vunpack.c.l.b16 %v68
    %v292 = vunpack.c.h.b16 %v68
    %v293 = vunpack.c.l.b16 %v69
    %v294 = vunpack.c.h.b16 %v69
    %v295 = vunpack.c.l.b16 %v70
    %v296 = vunpack.c.h.b16 %v70
    %v297 = vunpack.c.l.b16 %v71
    %v298 = vunpack.c.h.b16 %v71
    %v299 = vunpack.c.l.b16 %v72
    %v300 = vunpack.c.h.b16 %v72
    %v301 = vunpack.c.l.b16 %v73
    %v302 = vunpack.c.h.b16 %v73
    %v303 = vunpack.c.l.b16 %v74
    %v304 = vunpack.c.h.b16 %v74
    %v305 = vunpack.c.l.b16 %v75
    %v306 = vunpack.c.h.b16 %v75
    %v307 = vunpack.c.l.b16 %v76
    %v308 = vunpack.c.h.b16 %v76
    %v309 = vunpack.c.l.b16 %v77
    %v310 = vunpack.c.h.b16 %v77
    %v311 = vunpack.c.l.b16 %v78
    %v312 = vunpack.c.h.b16 %v78
    %v313 = vunpack.c.l.b16 %v79
    %v314 = vunpack.c.h.b16 %v79
    %v315 = vunpack.c.l.b16 %v80
    %v316 = vunpack.c.h.b16 %v80
    %v317 = vunpack.c.l.b16 %v81
    %v318 = vunpack.c.h.b16 %v81
    %v319 = vunpack.c.l.b16 %v82
    %v320 = vunpack.c.h.b16 %v82
    %v321 = vunpack.c.l.b16 %v83
    %v322 = vunpack.c.h.b16 %v83
    %v323 = vunpack.c.l.b16 %v84
    %v324 = vunpack.c.h.b16 %v84
    %v325 = vunpack.c.l.b16 %v85
    %v326 = vunpack.c.h.b16 %v85
    %v327 = vunpack.c.l.b16 %v86
    %v328 = vunpack.c.h.b16 %v86
    %v329 = vunpack.c.l.b16 %v87
    %v330 = vunpack.c.h.b16 %v87
    %v331 = vunpack.c.l.b16 %v88
    %v332 = vunpack.c.h.b16 %v88
    %v333 = vunpack.c.l.b16 %v89
    %v334 = vunpack.c.h.b16 %v89
    %v335 = vunpack.c.l.b16 %v90
    %v336 = vunpack.c.h.b16 %v90
    %v337 = vunpack.c.l.b16 %v91
    %v338 = vunpack.c.h.b16 %v91
    %v339 = vunpack.c.l.b16 %v92
    %v340 = vunpack.c.h.b16 %v92
    %v341 = vunpack.c.l.b16 %v93
    %v342 = vunpack.c.h.b16 %v93
    %v343 = vunpack.c.l.b16 %v94
    %v344 = vunpack.c.h.b16 %v94
    %v345 = vunpack.c.l.b16 %v95
    %v346 = vunpack.c.h.b16 %v95
    %v347 = vunpack.c.l.b16 %v96
    %v348 = vunpack.c.h.b16 %v96
    %v349 = vunpack.c.l.b16 %v97
    %v350 = vunpack.c.h.b16 %v97
    %v351 = vunpack.c.l.b16 %v98
    %v352 = vunpack.c.h.b16 %v98
    %v353 = vunpack.c.l.b16 %v99
    %v354 = vunpack.c.h.b16 %v99
    %v355 = vunpack.c.l.b16 %v100
    %v356 = vunpack.c.h.b16 %v100
    %v357 = vunpack.c.l.b16 %v101
    %v358 = vunpack.c.h.b16 %v101
    %v359 = vunpack.c.l.b16 %v102
    %v360 = vunpack.c.h.b16 %v102
    %v361 = vunpack.c.l.b16 %v103
    %v362 = vunpack.c.h.b16 %v103
    %v363 = vunpack.c.l.b16 %v104
    %v364 = vunpack.c.h.b16 %v104
    %v365 = vunpack.c.l.b16 %v105
    %v366 = vunpack.c.h.b16 %v105
    %v367 = vunpack.c.l.b16 %v106
    %v368 = vunpack.c.h.b16 %v106
    %v369 = vunpack.c.l.b16 %v107
    %v370 = vunpack.c.h.b16 %v107
    %v371 = vunpack.c.l.b16 %v108
    %v372 = vunpack.c.h.b16 %v108
    %v373 = vunpack.c.l.b16 %v109
    %v374 = vunpack.c.h.b16 %v109
    %v375 = vunpack.c.l.b16 %v110
    %v376 = vunpack.c.h.b16 %v110
    %v377 = vunpack.c.l.b16 %v111
    %v378 = vunpack.c.h.b16 %v111
    %v379 = vunpack.c.l.b16 %v112
    %v380 = vunpack.c.h.b16 %v112
    %v381 = vunpack.c.l.b16 %v113
    %v382 = vunpack.c.h.b16 %v113
    %v383 = vunpack.c.l.b16 %v114
    %v384 = vunpack.c.h.b16 %v114
    %v385 = vunpack.c.l.b16 %v115
    %v386 = vunpack.c.h.b16 %v115
    %v387 = vunpack.c.l.b16 %v116
    %v388 = vunpack.c.h.b16 %v116
    %v389 = vunpack.c.l.b16 %v117
    %v390 = vunpack.c.h.b16 %v117
    %v391 = vunpack.c.l.b16 %v118
    %v392 = vunpack.c.h.b16 %v118
    %v393 = vunpack.c.l.b16 %v119
    %v394 = vunpack.c.h.b16 %v119
    %v395 = vunpack.c.l.b16 %v120
    %v396 = vunpack.c.h.b16 %v120
    %v397 = vunpack.c.l.b16 %v121
    %v398 = vunpack.c.h.b16 %v121
    %v399 = vunpack.c.l.b16 %v122
    %v400 = vunpack.c.h.b16 %v122
    %v401 = vunpack.c.l.b16 %v123
    %v402 = vunpack.c.h.b16 %v123
    %v403 = vunpack.c.l.b16 %v124
    %v404 = vunpack.c.h.b16 %v124
    %v405 = vunpack.c.l.b16 %v125
    %v406 = vunpack.c.h.b16 %v125
    %v407 = vunpack.c.l.b16 %v126
    %v408 = vunpack.c.h.b16 %v126
    %v409 = vunpack.c.l.b16 %v127
    %v410 = vunpack.c.h.b16 %v127
    %v411 = vunpack.c.l.b16 %v128
    %v412 = vunpack.c.h.b16 %v128
    %v413 = vunpack.c.l.b16 %v129
    %v414 = vunpack.c.h.b16 %v129
    %v415 = vunpack.c.l.b16 %v130
    %v416 = vunpack.c.h.b16 %v130
    %v417 = vunpack.c.l.b16 %v131
    %v418 = vunpack.c.h.b16 %v131
    %v419 = vunpack.c.l.b16 %v132
    %v420 = vunpack.c.h.b16 %v132
    %v421 = vunpack.c.l.b16 %v133
    %v422 = vunpack.c.h.b16 %v133
    %v423 = vunpack.c.l.b16 %v134
    %v424 = vunpack.c.h.b16 %v134
    %v425 = vunpack.c.l.b16 %v135
    %v426 = vunpack.c.h.b16 %v135
    %v427 = vunpack.c.l.b16 %v136
    %v428 = vunpack.c.h.b16 %v136
    %v429 = vunpack.c.l.b16 %v137
    %v430 = vunpack.c.h.b16 %v137
    %v431 = vunpack.c.l.b16 %v138
    %v432 = vunpack.c.h.b16 %v138
    %v433 = vunpack.c.l.b16 %v139
    %v434 = vunpack.c.h.b16 %v139
    %v435 = vunpack.c.l.b16 %v140
    %v436 = vunpack.c.h.b16 %v140
    %v437 = vunpack.c.l.b16 %v141
    %v438 = vunpack.c.h.b16 %v141
    %v439 = vunpack.c.l.b16 %v142
    %v440 = vunpack.c.h.b16 %v142
    %v441 = vunpack.c.l.b16 %v143
    %v442 = vunpack.c.h.b16 %v143
    %v443 = vunpack.c.l.b16 %v144
    %v444 = vunpack.c.h.b16 %v144
    %v445 = vunpack.c.l.b16 %v145
    %v446 = vunpack.c.h.b16 %v145
    %v447 = vunpack.c.l.b16 %v146
    %v448 = vunpack.c.h.b16 %v146
    %v449 = vpack.c.b16 %v263, %v257
    %v450 = vpack.c.b16 %v264, %v258
    %v451 = vpack.c.b16 %v265, %v259
    %v452 = vpack.c.b16 %v266, %v260
    %v453 = vpack.c.b16 %v267, %v261
    %v454 = vpack.c.b16 %v268, %v262
    %v455 = vpack.c.b16 %v275, %v269
    %v456 = vpack.c.b16 %v276, %v270
    %v457 = vpack.c.b16 %v277, %v271
    %v458 = vpack.c.b16 %v278, %v272
    %v459 = vpack.c.b16 %v279, %v273
    %v460 = vpack.c.b16 %v280, %v274
    %v461 = vpack.c.b16 %v287, %v281
    %v462 = vpack.c.b16 %v288, %v282
    %v463 = vpack.c.b16 %v289, %v283
    %v464 = vpack.c.b16 %v290, %v284
    %v465 = vpack.c.b16 %v291, %v285
    %v466 = vpack.c.b16 %v292, %v286
    %v467 = vpack.c.b16 %v299, %v293
    %v468 = vpack.c.b16 %v300, %v294
    %v469 = vpack.c.b16 %v301, %v295
    %v470 = vpack.c.b16 %v302, %v296
    %v471 = vpack.c.b16 %v303, %v297
    %v472 = vpack.c.b16 %v304, %v298
    %v473 = vpack.c.b16 %v311, %v305
    %v474 = vpack.c.b16 %v312, %v306
    %v475 = vpack.c.b16 %v313, %v307
    %v476 = vpack.c.b16 %v314, %v308
    %v477 = vpack.c.b16 %v315, %v309
    %v478 = vpack.c.b16 %v316, %v310
    %v479 = vpack.c.b16 %v323, %v317
    %v480 = vpack.c.b16 %v324, %v318
    %v481 = vpack.c.b16 %v325, %v319
    %v482 = vpack.c.b16 %v326, %v320
    %v483 = vpack.c.b16 %v327, %v321
    %v484 = vpack.c.b16 %v328, %v322
    %v485 = vpack.c.b16 %v335, %v329
    %v486 = vpack.c.b16 %v336, %v330
    %v487 = vpack.c.b16 %v337, %v331
    %v488 = vpack.c.b16 %v338, %v332
    %v489 = vpack.c.b16 %v339, %v333
    %v490 = vpack.c.b16 %v340, %v334
    %v491 = vpack.c.b16 %v347, %v341
    %v492 = vpack.c.b16 %v348, %v342
    %v493 = vpack.c.b16 %v349, %v343
    %v494 = vpack.c.b16 %v350, %v344
    %v495 = vpack.c.b16 %v351, %v345
    %v496 = vpack.c.b16 %v352, %v346
    %v497 = vpack.c.b16 %v359, %v353
    %v498 = vpack.c.b16 %v360, %v354
    %v499 = vpack.c.b16 %v361, %v355
    %v500 = vpack.c.b16 %v362, %v356
    %v501 = vpack.c.b16 %v363, %v357
    %v502 = vpack.c.b16 %v364, %v358
    %v503 = vpack.c.b16 %v371, %v365
    %v504 = vpack.c.b16 %v372, %v366
    %v505 = vpack.c.b16 %v373, %v367
    %v506 = vpack.c.b16 %v374, %v368
    %v507 = vpack.c.b16 %v375, %v369
    %v508 = vpack.c.b16 %v376, %v370
    %v509 = vpack.c.b16 %v383, %v377
    %v510 = vpack.c.b16 %v384, %v378
    %v511 = vpack.c.b16 %v385, %v379
    %v512 = vpack.c.b16 %v386, %v380
    %v513 = vpack.c.b16 %v387, %v381
    %v514 = vpack.c.b16 %v388, %v382
    %v515 = vpack.c.b16 %v395, %v389
    %v516 = vpack.c.b16 %v396, %v390
    %v517 = vpack.c.b16 %v397, %v391
    %v518 = vpack.c.b16 %v398, %v392
    %v519 = vpack.c.b16 %v399, %v393
    %v520 = vpack.c.b16 %v400, %v394
    %v521 = vpack.c.b16 %v407, %v401
    %v522 = vpack.c.b16 %v408, %v402
    %v523 = vpack.c.b16 %v409, %v403
    %v524 = vpack.c.b16 %v410, %v404
    %v525 = vpack.c.b16 %v411, %v405
    %v526 = vpack.c.b16 %v412, %v406
    %v527 = vpack.c.b16 %v419, %v413
    %v528 = vpack.c.b16 %v420, %v414
    %v529 = vpack.c.b16 %v421, %v415
    %v530 = vpack.c.b16 %v422, %v416
    %v531 = vpack.c.b16 %v423, %v417
    %v532 = vpack.c.b16 %v424, %v418
    %v533 = vpack.c.b16 %v431, %v425
    %v534 = vpack.c.b16 %v432, %v426
    %v535 = vpack.c.b16 %v433, %v427
    %v536 = vpack.c.b16 %v434, %v428
    %v537 = vpack.c.b16 %v435, %v429
    %v538 = vpack.c.b16 %v436, %v430
    %v539 = vpack.c.b16 %v443, %v437
    %v540 = vpack.c.b16 %v444, %v438
    %v541 = vpack.c.b16 %v445, %v439
    %v542 = vpack.c.b16 %v446, %v440
    %v543 = vpack.c.b16 %v447, %v441
    %v544 = vpack.c.b16 %v448, %v442
    %641 = vmatpush.bf16.msra.mxu0 %v491
    %642 = vmatpush.bf16.msra.mxu0 %v485
    %643 = vmatpush.bf16.msra.mxu0 %v479
    %644 = vmatpush.bf16.msra.mxu0 %v473
    %645 = vmatpush.bf16.msra.mxu0 %v467
    %646 = vmatpush.bf16.msra.mxu0 %v461
    %647 = vmatpush.bf16.msra.mxu0 %v455
    %648 = vmatpush.bf16.msra.mxu0 %v449
    %649 = vmatmul.bf16.gmra.mxu0 %v43
    %v650 = vpop.f32.mrf.mxu0
    %v651 = vadd.f32 %v149, %v650
    %v652 = vpop.f32.mrf.mxu0
    %v653 = vadd.f32 %v149, %v652
    %654 = vdwg.mxu0
    %655 = vmatpush.bf16.msra.mxu0 %v539
    %656 = vmatpush.bf16.msra.mxu0 %v533
    %657 = vmatpush.bf16.msra.mxu0 %v527
    %658 = vmatpush.bf16.msra.mxu0 %v521
    %659 = vmatpush.bf16.msra.mxu0 %v515
    %660 = vmatpush.bf16.msra.mxu0 %v509
    %661 = vmatpush.bf16.msra.mxu0 %v503
    %662 = vmatpush.bf16.msra.mxu0 %v497
    %663 = vmatmul.bf16.gmra.mxu0 %v49
    %v664 = vpop.f32.mrf.mxu0
    %v665 = vadd.f32 %v651, %v664
    %v666 = vpop.f32.mrf.mxu0
    %v667 = vadd.f32 %v653, %v666
    %668 = vdwg.mxu0
    %669 = vmatpush.bf16.msra.mxu0 %v492
    %670 = vmatpush.bf16.msra.mxu0 %v486
    %671 = vmatpush.bf16.msra.mxu0 %v480
    %672 = vmatpush.bf16.msra.mxu0 %v474
    %673 = vmatpush.bf16.msra.mxu0 %v468
    %674 = vmatpush.bf16.msra.mxu0 %v462
    %675 = vmatpush.bf16.msra.mxu0 %v456
    %676 = vmatpush.bf16.msra.mxu0 %v450
    %677 = vmatmul.bf16.gmra.mxu0 %v43
    %v678 = vpop.f32.mrf.mxu0
    %v679 = vadd.f32 %v150, %v678
    %v680 = vpop.f32.mrf.mxu0
    %v681 = vadd.f32 %v150, %v680
    %682 = vdwg.mxu0
    %683 = vmatpush.bf16.msra.mxu0 %v540
    %684 = vmatpush.bf16.msra.mxu0 %v534
    %685 = vmatpush.bf16.msra.mxu0 %v528
    %686 = vmatpush.bf16.msra.mxu0 %v522
    %687 = vmatpush.bf16.msra.mxu0 %v516
    %688 = vmatpush.bf16.msra.mxu0 %v510
    %689 = vmatpush.bf16.msra.mxu0 %v504
    %690 = vmatpush.bf16.msra.mxu0 %v498
    %691 = vmatmul.bf16.gmra.mxu0 %v49
    %v692 = vpop.f32.mrf.mxu0
    %v693 = vadd.f32 %v679, %v692
    %v694 = vpop.f32.mrf.mxu0
    %v695 = vadd.f32 %v681, %v694
    %696 = vdwg.mxu0
    %697 = vmatpush.bf16.msra.mxu0 %v493
    %698 = vmatpush.bf16.msra.mxu0 %v487
    %699 = vmatpush.bf16.msra.mxu0 %v481
    %700 = vmatpush.bf16.msra.mxu0 %v475
    %701 = vmatpush.bf16.msra.mxu0 %v469
    %702 = vmatpush.bf16.msra.mxu0 %v463
    %703 = vmatpush.bf16.msra.mxu0 %v457
    %704 = vmatpush.bf16.msra.mxu0 %v451
    %705 = vmatmul.bf16.gmra.mxu0 %v43
    %v706 = vpop.f32.mrf.mxu0
    %v707 = vadd.f32 %v151, %v706
    %v708 = vpop.f32.mrf.mxu0
    %v709 = vadd.f32 %v151, %v708
    %710 = vdwg.mxu0
    %711 = vmatpush.bf16.msra.mxu0 %v541
    %712 = vmatpush.bf16.msra.mxu0 %v535
    %713 = vmatpush.bf16.msra.mxu0 %v529
    %714 = vmatpush.bf16.msra.mxu0 %v523
    %715 = vmatpush.bf16.msra.mxu0 %v517
    %716 = vmatpush.bf16.msra.mxu0 %v511
    %717 = vmatpush.bf16.msra.mxu0 %v505
    %718 = vmatpush.bf16.msra.mxu0 %v499
    %719 = vmatmul.bf16.gmra.mxu0 %v49
    %v720 = vpop.f32.mrf.mxu0
    %v721 = vadd.f32 %v707, %v720
    %v722 = vpop.f32.mrf.mxu0
    %v723 = vadd.f32 %v709, %v722
    %724 = vdwg.mxu0
    %725 = vmatpush.bf16.msra.mxu0 %v494
    %726 = vmatpush.bf16.msra.mxu0 %v488
    %727 = vmatpush.bf16.msra.mxu0 %v482
    %728 = vmatpush.bf16.msra.mxu0 %v476
    %729 = vmatpush.bf16.msra.mxu0 %v470
    %730 = vmatpush.bf16.msra.mxu0 %v464
    %731 = vmatpush.bf16.msra.mxu0 %v458
    %732 = vmatpush.bf16.msra.mxu0 %v452
    %733 = vmatmul.bf16.gmra.mxu0 %v43
    %v734 = vpop.f32.mrf.mxu0
    %v735 = vadd.f32 %v152, %v734
    %v736 = vpop.f32.mrf.mxu0
    %v737 = vadd.f32 %v152, %v736
    %738 = vdwg.mxu0
    %739 = vmatpush.bf16.msra.mxu0 %v542
    %740 = vmatpush.bf16.msra.mxu0 %v536
    %741 = vmatpush.bf16.msra.mxu0 %v530
    %742 = vmatpush.bf16.msra.mxu0 %v524
    %743 = vmatpush.bf16.msra.mxu0 %v518
    %744 = vmatpush.bf16.msra.mxu0 %v512
    %745 = vmatpush.bf16.msra.mxu0 %v506
    %746 = vmatpush.bf16.msra.mxu0 %v500
    %747 = vmatmul.bf16.gmra.mxu0 %v49
    %v748 = vpop.f32.mrf.mxu0
    %v749 = vadd.f32 %v735, %v748
    %v750 = vpop.f32.mrf.mxu0
    %v751 = vadd.f32 %v737, %v750
    %752 = vdwg.mxu0
    %753 = vmatpush.bf16.msra.mxu0 %v495
    %754 = vmatpush.bf16.msra.mxu0 %v489
    %755 = vmatpush.bf16.msra.mxu0 %v483
    %756 = vmatpush.bf16.msra.mxu0 %v477
    %757 = vmatpush.bf16.msra.mxu0 %v471
    %758 = vmatpush.bf16.msra.mxu0 %v465
    %759 = vmatpush.bf16.msra.mxu0 %v459
    %760 = vmatpush.bf16.msra.mxu0 %v453
    %761 = vmatmul.bf16.gmra.mxu0 %v43
    %v762 = vpop.f32.mrf.mxu0
    %v763 = vadd.f32 %v153, %v762
    %v764 = vpop.f32.mrf.mxu0
    %v765 = vadd.f32 %v153, %v764
    %766 = vdwg.mxu0
    %767 = vmatpush.bf16.msra.mxu0 %v543
    %768 = vmatpush.bf16.msra.mxu0 %v537
    %769 = vmatpush.bf16.msra.mxu0 %v531
    %770 = vmatpush.bf16.msra.mxu0 %v525
    %771 = vmatpush.bf16.msra.mxu0 %v519
    %772 = vmatpush.bf16.msra.mxu0 %v513
    %773 = vmatpush.bf16.msra.mxu0 %v507
    %774 = vmatpush.bf16.msra.mxu0 %v501
    %775 = vmatmul.bf16.gmra.mxu0 %v49
    %v776 = vpop.f32.mrf.mxu0
    %v777 = vadd.f32 %v763, %v776
    %v778 = vpop.f32.mrf.mxu0
    %v779 = vadd.f32 %v765, %v778
    %780 = vdwg.mxu0
    %781 = vmatpush.bf16.msra.mxu0 %v496
    %782 = vmatpush.bf16.msra.mxu0 %v490
    %783 = vmatpush.bf16.msra.mxu0 %v484
    %784 = vmatpush.bf16.msra.mxu0 %v478
    %785 = vmatpush.bf16.msra.mxu0 %v472
    %786 = vmatpush.bf16.msra.mxu0 %v466
    %787 = vmatpush.bf16.msra.mxu0 %v460
    %788 = vmatpush.bf16.msra.mxu0 %v454
    %789 = vmatmul.bf16.gmra.mxu0 %v43
    %v790 = vpop.f32.mrf.mxu0
    %v791 = vadd.f32 %v154, %v790
    %v792 = vpop.f32.mrf.mxu0
    %v793 = vadd.f32 %v154, %v792
    %794 = vdwg.mxu0
    %795 = vmatpush.bf16.msra.mxu0 %v544
    %796 = vmatpush.bf16.msra.mxu0 %v538
    %797 = vmatpush.bf16.msra.mxu0 %v532
    %798 = vmatpush.bf16.msra.mxu0 %v526
    %799 = vmatpush.bf16.msra.mxu0 %v520
    %800 = vmatpush.bf16.msra.mxu0 %v514
    %801 = vmatpush.bf16.msra.mxu0 %v508
    %802 = vmatpush.bf16.msra.mxu0 %v502
    %803 = vmatmul.bf16.gmra.mxu0 %v49
    %v804 = vpop.f32.mrf.mxu0
    %v805 = vadd.f32 %v791, %v804
    %v806 = vpop.f32.mrf.mxu0
    %v807 = vadd.f32 %v793, %v806
    %808 = vdwg.mxu0
    %v809 = vpack.c.bf16 %v693, %v665
    %v810 = vpack.c.bf16 %v721, %v721
    %v811 = vpack.c.bf16 %v695, %v667
    %v812 = vpack.c.bf16 %v723, %v723
    %813 = vst [vmem:[%s4] sm:$0xff] %v809
    %814 = vst [vmem:[%s4 + $0x8] sm:$0xf] %v810
    %815 = vst [vmem:[%s4 + $0xc] sm:$0xff] %v811
    %816 = vst [vmem:[%s4 + $0x14] sm:$0xf] %v812
    %v817 = vpack.c.bf16 %v777, %v749
    %v818 = vpack.c.bf16 %v805, %v805
    %v819 = vpack.c.bf16 %v779, %v751
    %v820 = vpack.c.bf16 %v807, %v807
    %821 = vst [vmem:[%s5] sm:$0xff] %v817
    %822 = vst [vmem:[%s5 + $0x8] sm:$0xf] %v818
    %823 = vst [vmem:[%s5 + $0xc] sm:$0xff] %v819
    %824 = vst [vmem:[%s5 + $0x14] sm:$0xf] %v820
    // Predicated region
    $region22: #{stackedbigru_forward.11} parent=1 // pred_check
      _
    $region23: #{stackedbigru_forward.11} parent=1 // pred_check_branch
      %826 = sbr.rel (0) target = $region25
    $region24: #{stackedbigru_forward.11} parent=1 // pred_region
      _
    $region25: #{stackedbigru_forward.11} parent=1 // pred_fallthru
      _
    // Predicated region
    $region26: #{stackedbigru_forward.11} parent=1 // pred_check
      _
    $region27: #{stackedbigru_forward.11} parent=1 // pred_check_branch
      %828 = sbr.rel (0) target = $region29
    $region28: #{stackedbigru_forward.11} parent=1 // pred_region
      _
    $region29: #{stackedbigru_forward.11} parent=1 // pred_fallthru
      _
    // Predicated region
    $region30: #{stackedbigru_forward.11} parent=1 // pred_check
      _
    $region31: #{stackedbigru_forward.11} parent=1 // pred_check_branch
      %830 = sbr.rel (0) target = $region33
    $region32: #{stackedbigru_forward.11} parent=1 // pred_region
      _
    $region33: #{stackedbigru_forward.11} parent=1 // pred_fallthru
      _
    // Predicated region
    $region34: #{stackedbigru_forward.11} parent=1 // pred_check
      _
    $region35: #{stackedbigru_forward.11} parent=1 // pred_check_branch
      %832 = sbr.rel (0) target = $region37
    $region36: #{stackedbigru_forward.11} parent=1 // pred_region
      _
    $region37: #{stackedbigru_forward.11} parent=1 // pred_fallthru
      _
    %833 = vsyncpa [#allocation3], 1

// kernel: stackedbigru_forward.10
$region0: #{stackedbigru_forward.10}
  #allocation0 [shape = 'u32[]', space=smem, size = 0x4, offset = 0x4, fixed_abs, tag = 'smem constant byte address 0x4 - core index']
  #allocation1 [shape = 'u32[72,128]{1,0:T(1,128)}', space=vmem, size = 0x9000, scoped, tag = 'internal scratch']
  #allocation2 [shape = 'f32[2,128]{1,0:T(2,128)}', space=vmem, size = 0x400, scoped, tag = 'scratch operand']
  #allocation3 [shape = 'f32[2,128]{1,0:T(2,128)}', space=vmem, size = 0x400, scoped, tag = 'scratch operand']
  %s0 = inlined_call_operand.vmem [shape: bf16[8,2,384], index: 0, kind: input, shape index: {}]
  %s1 = inlined_call_operand.vmem [shape: bf16[8,2,384], index: 1, kind: input, shape index: {}]
  %s2 = inlined_call_operand.hbm [shape: bf16[256,768], index: 2, kind: input, shape index: {}]
  %s3 = inlined_call_operand.vmem [shape: f32[1,128], index: 3, kind: input, shape index: {}]
  %s4 = inlined_call_operand.vmem [shape: f32[1,128], index: 4, kind: input, shape index: {}]
  %s5 = inlined_call_operand.vmem [shape: bf16[8,2,128], index: 5, kind: output, shape index: {0}]
  %s6 = inlined_call_operand.vmem [shape: bf16[8,2,128], index: 6, kind: output, shape index: {1}]
  %7 = xla_tuple %s5, %s6
  %s8 = sld [smem:[#allocation0]]
  $region46: #{stackedbigru_forward.10} parent=0
    _
  %s10 = ssub.s32 1, %s8
  %s11 = scalar_select 0, %s10, %s8
  $region1: #{stackedbigru_forward.10} parent=0
    #allocation4 [shape = 'u8[393216]{0}', space=vmem, size = 0x60000, scoped, tag = 'input window, operand 2, single buffered']
    #allocation5 [shape = 's32[1]{0}', space=sflag, size = 0x4, scoped, tag = 'scoped memory for stackedbigru_forward.10']
    %12 = vsyncpa [#allocation5], 0
    // Predicated region
    $region2: #{stackedbigru_forward.10} parent=1 // pred_check
      _
    $region3: #{stackedbigru_forward.10} parent=1 // pred_check_branch
      %14 = sbr.rel (0) target = $region5
    $region4: #{stackedbigru_forward.10} parent=1 // pred_region
      _
    $region5: #{stackedbigru_forward.10} parent=1 // pred_fallthru
      _
    // Predicated region
    $region6: #{stackedbigru_forward.10} parent=1 // pred_check
      _
    $region7: #{stackedbigru_forward.10} parent=1 // pred_check_branch
      %16 = sbr.rel (0) target = $region9
    $region8: #{stackedbigru_forward.10} parent=1 // pred_region
      %s17 = ssub.s32 0, 0
      %s18 = smul.u32 8, %s17
      %p19 = scmp.lt.s32.totalorder %s18, 7
      %s20 = scalar_select %p19, %s18, 7
      %s21 = smul.addr %s20, 3
      %s22 = scalar_lea.vmem %s1, %s21
      %s23 = ssub.s32 0, 0
      %s24 = smul.u32 8, %s23
    $region9: #{stackedbigru_forward.10} parent=1 // pred_fallthru
      _
    // Predicated region
    $region10: #{stackedbigru_forward.10} parent=1 // pred_check
      _
    $region11: #{stackedbigru_forward.10} parent=1 // pred_check_branch
      %26 = sbr.rel (0) target = $region13
    $region12: #{stackedbigru_forward.10} parent=1 // pred_region
      %28 = vsyncadd [#allocation5], 0
      %s29 = sshll.u32 %s2, 4
      %s30 = int_to_ptr.hbm [resolvable:$true] %s29
      %s31 = sshll.u32 [#allocation4], 4
      %s32 = int_to_ptr.vmem [resolvable:$true] %s31
      %37 = dma.hbm_to_vmem [thread:$0]  %s30, 12288, %s32, [#allocation5], 384, 384, 24
    $region13: #{stackedbigru_forward.10} parent=1 // pred_fallthru
      _
    // Predicated region
    $region14: #{stackedbigru_forward.10} parent=1 // pred_check
      _
    $region15: #{stackedbigru_forward.10} parent=1 // pred_check_branch
      %39 = sbr.rel (0) target = $region17
    $region16: #{stackedbigru_forward.10} parent=1 // pred_region
      _
    $region17: #{stackedbigru_forward.10} parent=1 // pred_fallthru
      _
    // Predicated region
    $region18: #{stackedbigru_forward.10} parent=1 // pred_check
      _
    $region19: #{stackedbigru_forward.10} parent=1 // pred_check_branch
      %41 = sbr.rel (0) target = $region21
    $region20: #{stackedbigru_forward.10} parent=1 // pred_region
      _
    $region21: #{stackedbigru_forward.10} parent=1 // pred_fallthru
      _
    // Predicated region
    $region22: #{stackedbigru_forward.10} parent=1 // pred_check
      _
    $region23: #{stackedbigru_forward.10} parent=1 // pred_check_branch
      %43 = sbr.rel (0) target = $region25
    $region24: #{stackedbigru_forward.10} parent=1 // pred_region
      %45 = dma.done [#allocation5], 12288
    $region25: #{stackedbigru_forward.10} parent=1 // pred_fallthru
      _
    %s46 = ssub.s32 0, 0
    %s47 = smul.u32 8, %s46
    %p48 = scmp.lt.s32.totalorder %s47, 7
    %s49 = scalar_select %p48, %s47, 7
    %s50 = smul.addr %s49, 3
    %s51 = scalar_lea.vmem %s1, %s50
    %s52 = ssub.s32 0, 0
    %s53 = smul.u32 8, %s52
    %p54 = scmp.lt.s32.totalorder %s53, 7
    %s55 = scalar_select %p54, %s53, 7
    %s56 = scalar_lea.vmem %s6, %s55
    %s57 = ssub.s32 0, 0
    %s58 = smul.u32 8, %s57
    %p59 = scmp.lt.s32.totalorder %s58, 7
    %s60 = scalar_select %p59, %s58, 7
    %s61 = smul.addr %s60, 3
    %s62 = scalar_lea.vmem %s1, %s61
    %s63 = ssub.s32 0, 0
    %s64 = smul.u32 8, %s63
    %s65 = ssub.s32 0, 0
    %s66 = smul.u32 8, %s65
    %p67 = scmp.lt.s32.totalorder %s66, 7
    %s68 = scalar_select %p67, %s66, 7
    %s69 = scalar_lea.vmem %s6, %s68
    %s70 = ssub.s32 0, 0
    %s71 = smul.u32 8, %s70
    %p72 = scmp.eq.s32.totalorder 0, 0
    // Predicated region
    $region26: #{stackedbigru_forward.10} parent=1 // pred_check
      %p73 = pneg %p72
    $region27: #{stackedbigru_forward.10} parent=1 // pred_check_branch
      %75 = sbr.rel (%p73) target = $region29
    $region28: #{stackedbigru_forward.10} parent=1 // pred_region
      %76 = vst [vmem:[#allocation2] sm:$0x3] 0.0
      %77 = vst [vmem:[#allocation3] sm:$0x3] 0.0
    $region29: #{stackedbigru_forward.10} parent=1 // pred_fallthru
      _
    %v78 = vld [vmem:[#allocation4] sm:$0xff]
    %v79 = vld [vmem:[#allocation4 + $0x8] sm:$0xff]
    %v80 = vld [vmem:[#allocation4 + $0x10] sm:$0xff]
    %v81 = vld [vmem:[#allocation4 + $0x18] sm:$0xff]
    %v82 = vld [vmem:[#allocation4 + $0x20] sm:$0xff]
    %v83 = vld [vmem:[#allocation4 + $0x28] sm:$0xff]
    %v84 = vld [vmem:[#allocation4 + $0x30] sm:$0xff]
    %v85 = vld [vmem:[#allocation4 + $0x38] sm:$0xff]
    %v86 = vld [vmem:[#allocation4 + $0x40] sm:$0xff]
    %v87 = vld [vmem:[#allocation4 + $0x48] sm:$0xff]
    %v88 = vld [vmem:[#allocation4 + $0x50] sm:$0xff]
    %v89 = vld [vmem:[#allocation4 + $0x58] sm:$0xff]
    %v90 = vld [vmem:[#allocation4 + $0x60] sm:$0xff]
    %v91 = vld [vmem:[#allocation4 + $0x68] sm:$0xff]
    %v92 = vld [vmem:[#allocation4 + $0x70] sm:$0xff]
    %v93 = vld [vmem:[#allocation4 + $0x78] sm:$0xff]
    %v94 = vld [vmem:[#allocation4 + $0x80] sm:$0xff]
    %v95 = vld [vmem:[#allocation4 + $0x88] sm:$0xff]
    %v96 = vld [vmem:[#allocation4 + $0x90] sm:$0xff]
    %v97 = vld [vmem:[#allocation4 + $0x98] sm:$0xff]
    %v98 = vld [vmem:[#allocation4 + $0xa0] sm:$0xff]
    %v99 = vld [vmem:[#allocation4 + $0xa8] sm:$0xff]
    %v100 = vld [vmem:[#allocation4 + $0xb0] sm:$0xff]
    %v101 = vld [vmem:[#allocation4 + $0xb8] sm:$0xff]
    %v102 = vld [vmem:[#allocation4 + $0xc0] sm:$0xff]
    %v103 = vld [vmem:[#allocation4 + $0xc8] sm:$0xff]
    %v104 = vld [vmem:[#allocation4 + $0xd0] sm:$0xff]
    %v105 = vld [vmem:[#allocation4 + $0xd8] sm:$0xff]
    %v106 = vld [vmem:[#allocation4 + $0xe0] sm:$0xff]
    %v107 = vld [vmem:[#allocation4 + $0xe8] sm:$0xff]
    %v108 = vld [vmem:[#allocation4 + $0xf0] sm:$0xff]
    %v109 = vld [vmem:[#allocation4 + $0xf8] sm:$0xff]
    %v110 = vld [vmem:[#allocation4 + $0x100] sm:$0xff]
    %v111 = vld [vmem:[#allocation4 + $0x108] sm:$0xff]
    %v112 = vld [vmem:[#allocation4 + $0x110] sm:$0xff]
    %v113 = vld [vmem:[#allocation4 + $0x118] sm:$0xff]
    %v114 = vld [vmem:[#allocation4 + $0x120] sm:$0xff]
    %v115 = vld [vmem:[#allocation4 + $0x128] sm:$0xff]
    %v116 = vld [vmem:[#allocation4 + $0x130] sm:$0xff]
    %v117 = vld [vmem:[#allocation4 + $0x138] sm:$0xff]
    %v118 = vld [vmem:[#allocation4 + $0x140] sm:$0xff]
    %v119 = vld [vmem:[#allocation4 + $0x148] sm:$0xff]
    %v120 = vld [vmem:[#allocation4 + $0x150] sm:$0xff]
    %v121 = vld [vmem:[#allocation4 + $0x158] sm:$0xff]
    %v122 = vld [vmem:[#allocation4 + $0x160] sm:$0xff]
    %v123 = vld [vmem:[#allocation4 + $0x168] sm:$0xff]
    %v124 = vld [vmem:[#allocation4 + $0x170] sm:$0xff]
    %v125 = vld [vmem:[#allocation4 + $0x178] sm:$0xff]
    %v126 = vld [vmem:[#allocation4 + $0x180] sm:$0xff]
    %v127 = vld [vmem:[#allocation4 + $0x188] sm:$0xff]
    %v128 = vld [vmem:[#allocation4 + $0x190] sm:$0xff]
    %v129 = vld [vmem:[#allocation4 + $0x198] sm:$0xff]
    %v130 = vld [vmem:[#allocation4 + $0x1a0] sm:$0xff]
    %v131 = vld [vmem:[#allocation4 + $0x1a8] sm:$0xff]
    %v132 = vld [vmem:[#allocation4 + $0x1b0] sm:$0xff]
    %v133 = vld [vmem:[#allocation4 + $0x1b8] sm:$0xff]
    %v134 = vld [vmem:[#allocation4 + $0x1c0] sm:$0xff]
    %v135 = vld [vmem:[#allocation4 + $0x1c8] sm:$0xff]
    %v136 = vld [vmem:[#allocation4 + $0x1d0] sm:$0xff]
    %v137 = vld [vmem:[#allocation4 + $0x1d8] sm:$0xff]
    %v138 = vld [vmem:[#allocation4 + $0x1e0] sm:$0xff]
    %v139 = vld [vmem:[#allocation4 + $0x1e8] sm:$0xff]
    %v140 = vld [vmem:[#allocation4 + $0x1f0] sm:$0xff]
    %v141 = vld [vmem:[#allocation4 + $0x1f8] sm:$0xff]
    %v142 = vld [vmem:[#allocation4 + $0x200] sm:$0xff]
    %v143 = vld [vmem:[#allocation4 + $0x208] sm:$0xff]
    %v144 = vld [vmem:[#allocation4 + $0x210] sm:$0xff]
    %v145 = vld [vmem:[#allocation4 + $0x218] sm:$0xff]
    %v146 = vld [vmem:[#allocation4 + $0x220] sm:$0xff]
    %v147 = vld [vmem:[#allocation4 + $0x228] sm:$0xff]
    %v148 = vld [vmem:[#allocation4 + $0x230] sm:$0xff]
    %v149 = vld [vmem:[#allocation4 + $0x238] sm:$0xff]
    %v150 = vld [vmem:[#allocation4 + $0x240] sm:$0xff]
    %v151 = vld [vmem:[#allocation4 + $0x248] sm:$0xff]
    %v152 = vld [vmem:[#allocation4 + $0x250] sm:$0xff]
    %v153 = vld [vmem:[#allocation4 + $0x258] sm:$0xff]
    %v154 = vld [vmem:[#allocation4 + $0x260] sm:$0xff]
    %v155 = vld [vmem:[#allocation4 + $0x268] sm:$0xff]
    %v156 = vld [vmem:[#allocation4 + $0x270] sm:$0xff]
    %v157 = vld [vmem:[#allocation4 + $0x278] sm:$0xff]
    %v158 = vld [vmem:[#allocation4 + $0x280] sm:$0xff]
    %v159 = vld [vmem:[#allocation4 + $0x288] sm:$0xff]
    %v160 = vld [vmem:[#allocation4 + $0x290] sm:$0xff]
    %v161 = vld [vmem:[#allocation4 + $0x298] sm:$0xff]
    %v162 = vld [vmem:[#allocation4 + $0x2a0] sm:$0xff]
    %v163 = vld [vmem:[#allocation4 + $0x2a8] sm:$0xff]
    %v164 = vld [vmem:[#allocation4 + $0x2b0] sm:$0xff]
    %v165 = vld [vmem:[#allocation4 + $0x2b8] sm:$0xff]
    %v166 = vld [vmem:[#allocation4 + $0x2c0] sm:$0xff]
    %v167 = vld [vmem:[#allocation4 + $0x2c8] sm:$0xff]
    %v168 = vld [vmem:[#allocation4 + $0x2d0] sm:$0xff]
    %v169 = vld [vmem:[#allocation4 + $0x2d8] sm:$0xff]
    %v170 = vld [vmem:[#allocation4 + $0x2e0] sm:$0xff]
    %v171 = vld [vmem:[#allocation4 + $0x2e8] sm:$0xff]
    %v172 = vld [vmem:[#allocation4 + $0x2f0] sm:$0xff]
    %v173 = vld [vmem:[#allocation4 + $0x2f8] sm:$0xff]
    %v174 = vld [vmem:[%s3] sm:$0x1]
    %v176 = vperm.slane %v174, 0
    %v178 = vld [vmem:[%s4] sm:$0x1]
    %v180 = vperm.slane %v178, 0
    %v182 = vld [vmem:[#allocation2] sm:$0x3]
    %v183 = vld [vmem:[#allocation3] sm:$0x3]
    %v184 = vld [vmem:[%s0] sm:$0x7]
    %s185 = scalar_lea.vmem %s62, 21
    %v186 = vld [vmem:[%s185] sm:$0x7]
    %v187 = vpack.c.bf16 %v182, %v182
    %v188 = vpack.c.bf16 %v183, %v183
    %v285 = vunpack.c.l.b16 %v78
    %v286 = vunpack.c.h.b16 %v78
    %v287 = vunpack.c.l.b16 %v79
    %v288 = vunpack.c.h.b16 %v79
    %v289 = vunpack.c.l.b16 %v80
    %v290 = vunpack.c.h.b16 %v80
    %v291 = vunpack.c.l.b16 %v81
    %v292 = vunpack.c.h.b16 %v81
    %v293 = vunpack.c.l.b16 %v82
    %v294 = vunpack.c.h.b16 %v82
    %v295 = vunpack.c.l.b16 %v83
    %v296 = vunpack.c.h.b16 %v83
    %v297 = vunpack.c.l.b16 %v84
    %v298 = vunpack.c.h.b16 %v84
    %v299 = vunpack.c.l.b16 %v85
    %v300 = vunpack.c.h.b16 %v85
    %v301 = vunpack.c.l.b16 %v86
    %v302 = vunpack.c.h.b16 %v86
    %v303 = vunpack.c.l.b16 %v87
    %v304 = vunpack.c.h.b16 %v87
    %v305 = vunpack.c.l.b16 %v88
    %v306 = vunpack.c.h.b16 %v88
    %v307 = vunpack.c.l.b16 %v89
    %v308 = vunpack.c.h.b16 %v89
    %v309 = vunpack.c.l.b16 %v90
    %v310 = vunpack.c.h.b16 %v90
    %v311 = vunpack.c.l.b16 %v91
    %v312 = vunpack.c.h.b16 %v91
    %v313 = vunpack.c.l.b16 %v92
    %v314 = vunpack.c.h.b16 %v92
    %v315 = vunpack.c.l.b16 %v93
    %v316 = vunpack.c.h.b16 %v93
    %v317 = vunpack.c.l.b16 %v94
    %v318 = vunpack.c.h.b16 %v94
    %v319 = vunpack.c.l.b16 %v95
    %v320 = vunpack.c.h.b16 %v95
    %v321 = vunpack.c.l.b16 %v96
    %v322 = vunpack.c.h.b16 %v96
    %v323 = vunpack.c.l.b16 %v97
    %v324 = vunpack.c.h.b16 %v97
    %v325 = vunpack.c.l.b16 %v98
    %v326 = vunpack.c.h.b16 %v98
    %v327 = vunpack.c.l.b16 %v99
    %v328 = vunpack.c.h.b16 %v99
    %v329 = vunpack.c.l.b16 %v100
    %v330 = vunpack.c.h.b16 %v100
    %v331 = vunpack.c.l.b16 %v101
    %v332 = vunpack.c.h.b16 %v101
    %v333 = vunpack.c.l.b16 %v102
    %v334 = vunpack.c.h.b16 %v102
    %v335 = vunpack.c.l.b16 %v103
    %v336 = vunpack.c.h.b16 %v103
    %v337 = vunpack.c.l.b16 %v104
    %v338 = vunpack.c.h.b16 %v104
    %v339 = vunpack.c.l.b16 %v105
    %v340 = vunpack.c.h.b16 %v105
    %v341 = vunpack.c.l.b16 %v106
    %v342 = vunpack.c.h.b16 %v106
    %v343 = vunpack.c.l.b16 %v107
    %v344 = vunpack.c.h.b16 %v107
    %v345 = vunpack.c.l.b16 %v108
    %v346 = vunpack.c.h.b16 %v108
    %v347 = vunpack.c.l.b16 %v109
    %v348 = vunpack.c.h.b16 %v109
    %v349 = vunpack.c.l.b16 %v110
    %v350 = vunpack.c.h.b16 %v110
    %v351 = vunpack.c.l.b16 %v111
    %v352 = vunpack.c.h.b16 %v111
    %v353 = vunpack.c.l.b16 %v112
    %v354 = vunpack.c.h.b16 %v112
    %v355 = vunpack.c.l.b16 %v113
    %v356 = vunpack.c.h.b16 %v113
    %v357 = vunpack.c.l.b16 %v114
    %v358 = vunpack.c.h.b16 %v114
    %v359 = vunpack.c.l.b16 %v115
    %v360 = vunpack.c.h.b16 %v115
    %v361 = vunpack.c.l.b16 %v116
    %v362 = vunpack.c.h.b16 %v116
    %v363 = vunpack.c.l.b16 %v117
    %v364 = vunpack.c.h.b16 %v117
    %v365 = vunpack.c.l.b16 %v118
    %v366 = vunpack.c.h.b16 %v118
    %v367 = vunpack.c.l.b16 %v119
    %v368 = vunpack.c.h.b16 %v119
    %v369 = vunpack.c.l.b16 %v120
    %v370 = vunpack.c.h.b16 %v120
    %v371 = vunpack.c.l.b16 %v121
    %v372 = vunpack.c.h.b16 %v121
    %v373 = vunpack.c.l.b16 %v122
    %v374 = vunpack.c.h.b16 %v122
    %v375 = vunpack.c.l.b16 %v123
    %v376 = vunpack.c.h.b16 %v123
    %v377 = vunpack.c.l.b16 %v124
    %v378 = vunpack.c.h.b16 %v124
    %v379 = vunpack.c.l.b16 %v125
    %v380 = vunpack.c.h.b16 %v125
    %v381 = vunpack.c.l.b16 %v126
    %v382 = vunpack.c.h.b16 %v126
    %v383 = vunpack.c.l.b16 %v127
    %v384 = vunpack.c.h.b16 %v127
    %v385 = vunpack.c.l.b16 %v128
    %v386 = vunpack.c.h.b16 %v128
    %v387 = vunpack.c.l.b16 %v129
    %v388 = vunpack.c.h.b16 %v129
    %v389 = vunpack.c.l.b16 %v130
    %v390 = vunpack.c.h.b16 %v130
    %v391 = vunpack.c.l.b16 %v131
    %v392 = vunpack.c.h.b16 %v131
    %v393 = vunpack.c.l.b16 %v132
    %v394 = vunpack.c.h.b16 %v132
    %v395 = vunpack.c.l.b16 %v133
    %v396 = vunpack.c.h.b16 %v133
    %v397 = vunpack.c.l.b16 %v134
    %v398 = vunpack.c.h.b16 %v134
    %v399 = vunpack.c.l.b16 %v135
    %v400 = vunpack.c.h.b16 %v135
    %v401 = vunpack.c.l.b16 %v136
    %v402 = vunpack.c.h.b16 %v136
    %v403 = vunpack.c.l.b16 %v137
    %v404 = vunpack.c.h.b16 %v137
    %v405 = vunpack.c.l.b16 %v138
    %v406 = vunpack.c.h.b16 %v138
    %v407 = vunpack.c.l.b16 %v139
    %v408 = vunpack.c.h.b16 %v139
    %v409 = vunpack.c.l.b16 %v140
    %v410 = vunpack.c.h.b16 %v140
    %v411 = vunpack.c.l.b16 %v141
    %v412 = vunpack.c.h.b16 %v141
    %v413 = vunpack.c.l.b16 %v142
    %v414 = vunpack.c.h.b16 %v142
    %v415 = vunpack.c.l.b16 %v143
    %v416 = vunpack.c.h.b16 %v143
    %v417 = vunpack.c.l.b16 %v144
    %v418 = vunpack.c.h.b16 %v144
    %v419 = vunpack.c.l.b16 %v145
    %v420 = vunpack.c.h.b16 %v145
    %v421 = vunpack.c.l.b16 %v146
    %v422 = vunpack.c.h.b16 %v146
    %v423 = vunpack.c.l.b16 %v147
    %v424 = vunpack.c.h.b16 %v147
    %v425 = vunpack.c.l.b16 %v148
    %v426 = vunpack.c.h.b16 %v148
    %v427 = vunpack.c.l.b16 %v149
    %v428 = vunpack.c.h.b16 %v149
    %v429 = vunpack.c.l.b16 %v150
    %v430 = vunpack.c.h.b16 %v150
    %v431 = vunpack.c.l.b16 %v151
    %v432 = vunpack.c.h.b16 %v151
    %v433 = vunpack.c.l.b16 %v152
    %v434 = vunpack.c.h.b16 %v152
    %v435 = vunpack.c.l.b16 %v153
    %v436 = vunpack.c.h.b16 %v153
    %v437 = vunpack.c.l.b16 %v154
    %v438 = vunpack.c.h.b16 %v154
    %v439 = vunpack.c.l.b16 %v155
    %v440 = vunpack.c.h.b16 %v155
    %v441 = vunpack.c.l.b16 %v156
    %v442 = vunpack.c.h.b16 %v156
    %v443 = vunpack.c.l.b16 %v157
    %v444 = vunpack.c.h.b16 %v157
    %v445 = vunpack.c.l.b16 %v158
    %v446 = vunpack.c.h.b16 %v158
    %v447 = vunpack.c.l.b16 %v159
    %v448 = vunpack.c.h.b16 %v159
    %v449 = vunpack.c.l.b16 %v160
    %v450 = vunpack.c.h.b16 %v160
    %v451 = vunpack.c.l.b16 %v161
    %v452 = vunpack.c.h.b16 %v161
    %v453 = vunpack.c.l.b16 %v162
    %v454 = vunpack.c.h.b16 %v162
    %v455 = vunpack.c.l.b16 %v163
    %v456 = vunpack.c.h.b16 %v163
    %v457 = vunpack.c.l.b16 %v164
    %v458 = vunpack.c.h.b16 %v164
    %v459 = vunpack.c.l.b16 %v165
    %v460 = vunpack.c.h.b16 %v165
    %v461 = vunpack.c.l.b16 %v166
    %v462 = vunpack.c.h.b16 %v166
    %v463 = vunpack.c.l.b16 %v167
    %v464 = vunpack.c.h.b16 %v167
    %v465 = vunpack.c.l.b16 %v168
    %v466 = vunpack.c.h.b16 %v168
    %v467 = vunpack.c.l.b16 %v169
    %v468 = vunpack.c.h.b16 %v169
    %v469 = vunpack.c.l.b16 %v170
    %v470 = vunpack.c.h.b16 %v170
    %v471 = vunpack.c.l.b16 %v171
    %v472 = vunpack.c.h.b16 %v171
    %v473 = vunpack.c.l.b16 %v172
    %v474 = vunpack.c.h.b16 %v172
    %v475 = vunpack.c.l.b16 %v173
    %v476 = vunpack.c.h.b16 %v173
    %v477 = vpack.c.b16 %v291, %v285
    %v478 = vpack.c.b16 %v292, %v286
    %v479 = vpack.c.b16 %v293, %v287
    %v480 = vpack.c.b16 %v294, %v288
    %v481 = vpack.c.b16 %v295, %v289
    %v482 = vpack.c.b16 %v296, %v290
    %v483 = vpack.c.b16 %v303, %v297
    %v484 = vpack.c.b16 %v304, %v298
    %v485 = vpack.c.b16 %v305, %v299
    %v486 = vpack.c.b16 %v306, %v300
    %v487 = vpack.c.b16 %v307, %v301
    %v488 = vpack.c.b16 %v308, %v302
    %v489 = vpack.c.b16 %v315, %v309
    %v490 = vpack.c.b16 %v316, %v310
    %v491 = vpack.c.b16 %v317, %v311
    %v492 = vpack.c.b16 %v318, %v312
    %v493 = vpack.c.b16 %v319, %v313
    %v494 = vpack.c.b16 %v320, %v314
    %v495 = vpack.c.b16 %v327, %v321
    %v496 = vpack.c.b16 %v328, %v322
    %v497 = vpack.c.b16 %v329, %v323
    %v498 = vpack.c.b16 %v330, %v324
    %v499 = vpack.c.b16 %v331, %v325
    %v500 = vpack.c.b16 %v332, %v326
    %v501 = vpack.c.b16 %v339, %v333
    %v502 = vpack.c.b16 %v340, %v334
    %v503 = vpack.c.b16 %v341, %v335
    %v504 = vpack.c.b16 %v342, %v336
    %v505 = vpack.c.b16 %v343, %v337
    %v506 = vpack.c.b16 %v344, %v338
    %v507 = vpack.c.b16 %v351, %v345
    %v508 = vpack.c.b16 %v352, %v346
    %v509 = vpack.c.b16 %v353, %v347
    %v510 = vpack.c.b16 %v354, %v348
    %v511 = vpack.c.b16 %v355, %v349
    %v512 = vpack.c.b16 %v356, %v350
    %v513 = vpack.c.b16 %v363, %v357
    %v514 = vpack.c.b16 %v364, %v358
    %v515 = vpack.c.b16 %v365, %v359
    %v516 = vpack.c.b16 %v366, %v360
    %v517 = vpack.c.b16 %v367, %v361
    %v518 = vpack.c.b16 %v368, %v362
    %v519 = vpack.c.b16 %v375, %v369
    %v520 = vpack.c.b16 %v376, %v370
    %v521 = vpack.c.b16 %v377, %v371
    %v522 = vpack.c.b16 %v378, %v372
    %v523 = vpack.c.b16 %v379, %v373
    %v524 = vpack.c.b16 %v380, %v374
    %v525 = vpack.c.b16 %v387, %v381
    %v526 = vpack.c.b16 %v388, %v382
    %v527 = vpack.c.b16 %v389, %v383
    %v528 = vpack.c.b16 %v390, %v384
    %v529 = vpack.c.b16 %v391, %v385
    %v530 = vpack.c.b16 %v392, %v386
    %v531 = vpack.c.b16 %v399, %v393
    %v532 = vpack.c.b16 %v400, %v394
    %v533 = vpack.c.b16 %v401, %v395
    %v534 = vpack.c.b16 %v402, %v396
    %v535 = vpack.c.b16 %v403, %v397
    %v536 = vpack.c.b16 %v404, %v398
    %v537 = vpack.c.b16 %v411, %v405
    %v538 = vpack.c.b16 %v412, %v406
    %v539 = vpack.c.b16 %v413, %v407
    %v540 = vpack.c.b16 %v414, %v408
    %v541 = vpack.c.b16 %v415, %v409
    %v542 = vpack.c.b16 %v416, %v410
    %v543 = vpack.c.b16 %v423, %v417
    %v544 = vpack.c.b16 %v424, %v418
    %v545 = vpack.c.b16 %v425, %v419
    %v546 = vpack.c.b16 %v426, %v420
    %v547 = vpack.c.b16 %v427, %v421
    %v548 = vpack.c.b16 %v428, %v422
    %v549 = vpack.c.b16 %v435, %v429
    %v550 = vpack.c.b16 %v436, %v430
    %v551 = vpack.c.b16 %v437, %v431
    %v552 = vpack.c.b16 %v438, %v432
    %v553 = vpack.c.b16 %v439, %v433
    %v554 = vpack.c.b16 %v440, %v434
    %v555 = vpack.c.b16 %v447, %v441
    %v556 = vpack.c.b16 %v448, %v442
    %v557 = vpack.c.b16 %v449, %v443
    %v558 = vpack.c.b16 %v450, %v444
    %v559 = vpack.c.b16 %v451, %v445
    %v560 = vpack.c.b16 %v452, %v446
    %v561 = vpack.c.b16 %v459, %v453
    %v562 = vpack.c.b16 %v460, %v454
    %v563 = vpack.c.b16 %v461, %v455
    %v564 = vpack.c.b16 %v462, %v456
    %v565 = vpack.c.b16 %v463, %v457
    %v566 = vpack.c.b16 %v464, %v458
    %v567 = vpack.c.b16 %v471, %v465
    %v568 = vpack.c.b16 %v472, %v466
    %v569 = vpack.c.b16 %v473, %v467
    %v570 = vpack.c.b16 %v474, %v468
    %v571 = vpack.c.b16 %v475, %v469
    %v572 = vpack.c.b16 %v476, %v470
    %669 = vmatpush.bf16.msra.mxu0 %v519
    %670 = vmatpush.bf16.msra.mxu0 %v513
    %671 = vmatpush.bf16.msra.mxu0 %v507
    %672 = vmatpush.bf16.msra.mxu0 %v501
    %673 = vmatpush.bf16.msra.mxu0 %v495
    %674 = vmatpush.bf16.msra.mxu0 %v489
    %675 = vmatpush.bf16.msra.mxu0 %v483
    %676 = vmatpush.bf16.msra.mxu0 %v477
    %677 = vmatmul.bf16.gmra.mxu0 %v187
    %v678 = vpop.f32.mrf.mxu0
    %v679 = vadd.f32 0.0, %v678
    %v680 = vpop.f32.mrf.mxu0
    %681 = vdwg.mxu0
    %682 = vmatpush.bf16.msra.mxu0 %v567
    %683 = vmatpush.bf16.msra.mxu0 %v561
    %684 = vmatpush.bf16.msra.mxu0 %v555
    %685 = vmatpush.bf16.msra.mxu0 %v549
    %686 = vmatpush.bf16.msra.mxu0 %v543
    %687 = vmatpush.bf16.msra.mxu0 %v537
    %688 = vmatpush.bf16.msra.mxu0 %v531
    %689 = vmatpush.bf16.msra.mxu0 %v525
    %690 = vmatmul.bf16.gmra.mxu0 %v188
    %v691 = vpop.f32.mrf.mxu0
    %v692 = vadd.f32 %v679, %v691
    %v693 = vpop.f32.mrf.mxu0
    %694 = vdwg.mxu0
    %695 = vmatpush.bf16.msra.mxu0 %v520
    %696 = vmatpush.bf16.msra.mxu0 %v514
    %697 = vmatpush.bf16.msra.mxu0 %v508
    %698 = vmatpush.bf16.msra.mxu0 %v502
    %699 = vmatpush.bf16.msra.mxu0 %v496
    %700 = vmatpush.bf16.msra.mxu0 %v490
    %701 = vmatpush.bf16.msra.mxu0 %v484
    %702 = vmatpush.bf16.msra.mxu0 %v478
    %703 = vmatmul.bf16.gmra.mxu0 %v187
    %v704 = vpop.f32.mrf.mxu0
    %v705 = vadd.f32 0.0, %v704
    %v706 = vpop.f32.mrf.mxu0
    %707 = vdwg.mxu0
    %708 = vmatpush.bf16.msra.mxu0 %v568
    %709 = vmatpush.bf16.msra.mxu0 %v562
    %710 = vmatpush.bf16.msra.mxu0 %v556
    %711 = vmatpush.bf16.msra.mxu0 %v550
    %712 = vmatpush.bf16.msra.mxu0 %v544
    %713 = vmatpush.bf16.msra.mxu0 %v538
    %714 = vmatpush.bf16.msra.mxu0 %v532
    %715 = vmatpush.bf16.msra.mxu0 %v526
    %716 = vmatmul.bf16.gmra.mxu0 %v188
    %v717 = vpop.f32.mrf.mxu0
    %v718 = vadd.f32 %v705, %v717
    %v719 = vpop.f32.mrf.mxu0
    %720 = vdwg.mxu0
    %721 = vmatpush.bf16.msra.mxu0 %v521
    %722 = vmatpush.bf16.msra.mxu0 %v515
    %723 = vmatpush.bf16.msra.mxu0 %v509
    %724 = vmatpush.bf16.msra.mxu0 %v503
    %725 = vmatpush.bf16.msra.mxu0 %v497
    %726 = vmatpush.bf16.msra.mxu0 %v491
    %727 = vmatpush.bf16.msra.mxu0 %v485
    %728 = vmatpush.bf16.msra.mxu0 %v479
    %729 = vmatmul.bf16.gmra.mxu0 %v187
    %v730 = vpop.f32.mrf.mxu0
    %v731 = vadd.f32 0.0, %v730
    %v732 = vpop.f32.mrf.mxu0
    %733 = vdwg.mxu0
    %734 = vmatpush.bf16.msra.mxu0 %v569
    %735 = vmatpush.bf16.msra.mxu0 %v563
    %736 = vmatpush.bf16.msra.mxu0 %v557
    %737 = vmatpush.bf16.msra.mxu0 %v551
    %738 = vmatpush.bf16.msra.mxu0 %v545
    %739 = vmatpush.bf16.msra.mxu0 %v539
    %740 = vmatpush.bf16.msra.mxu0 %v533
    %741 = vmatpush.bf16.msra.mxu0 %v527
    %742 = vmatmul.bf16.gmra.mxu0 %v188
    %v743 = vpop.f32.mrf.mxu0
    %v744 = vadd.f32 %v731, %v743
    %v745 = vpop.f32.mrf.mxu0
    %746 = vdwg.mxu0
    %747 = vmatpush.bf16.msra.mxu0 %v522
    %748 = vmatpush.bf16.msra.mxu0 %v516
    %749 = vmatpush.bf16.msra.mxu0 %v510
    %750 = vmatpush.bf16.msra.mxu0 %v504
    %751 = vmatpush.bf16.msra.mxu0 %v498
    %752 = vmatpush.bf16.msra.mxu0 %v492
    %753 = vmatpush.bf16.msra.mxu0 %v486
    %754 = vmatpush.bf16.msra.mxu0 %v480
    %755 = vmatmul.bf16.gmra.mxu0 %v187
    %v756 = vpop.f32.mrf.mxu0
    %v757 = vadd.f32 0.0, %v756
    %v758 = vpop.f32.mrf.mxu0
    %759 = vdwg.mxu0
    %760 = vmatpush.bf16.msra.mxu0 %v570
    %761 = vmatpush.bf16.msra.mxu0 %v564
    %762 = vmatpush.bf16.msra.mxu0 %v558
    %763 = vmatpush.bf16.msra.mxu0 %v552
    %764 = vmatpush.bf16.msra.mxu0 %v546
    %765 = vmatpush.bf16.msra.mxu0 %v540
    %766 = vmatpush.bf16.msra.mxu0 %v534
    %767 = vmatpush.bf16.msra.mxu0 %v528
    %768 = vmatmul.bf16.gmra.mxu0 %v188
    %v769 = vpop.f32.mrf.mxu0
    %v770 = vadd.f32 %v757, %v769
    %v771 = vpop.f32.mrf.mxu0
    %772 = vdwg.mxu0
    %773 = vmatpush.bf16.msra.mxu0 %v523
    %774 = vmatpush.bf16.msra.mxu0 %v517
    %775 = vmatpush.bf16.msra.mxu0 %v511
    %776 = vmatpush.bf16.msra.mxu0 %v505
    %777 = vmatpush.bf16.msra.mxu0 %v499
    %778 = vmatpush.bf16.msra.mxu0 %v493
    %779 = vmatpush.bf16.msra.mxu0 %v487
    %780 = vmatpush.bf16.msra.mxu0 %v481
    %781 = vmatmul.bf16.gmra.mxu0 %v187
    %v782 = vpop.f32.mrf.mxu0
    %v783 = vadd.f32 0.0, %v782
    %v784 = vpop.f32.mrf.mxu0
    %785 = vdwg.mxu0
    %786 = vmatpush.bf16.msra.mxu0 %v571
    %787 = vmatpush.bf16.msra.mxu0 %v565
    %788 = vmatpush.bf16.msra.mxu0 %v559
    %789 = vmatpush.bf16.msra.mxu0 %v553
    %790 = vmatpush.bf16.msra.mxu0 %v547
    %791 = vmatpush.bf16.msra.mxu0 %v541
    %792 = vmatpush.bf16.msra.mxu0 %v535
    %793 = vmatpush.bf16.msra.mxu0 %v529
    %794 = vmatmul.bf16.gmra.mxu0 %v188
    %v795 = vpop.f32.mrf.mxu0
    %v796 = vadd.f32 %v783, %v795
    %v797 = vpop.f32.mrf.mxu0
    %798 = vdwg.mxu0
    %799 = vmatpush.bf16.msra.mxu0 %v524
    %800 = vmatpush.bf16.msra.mxu0 %v518
    %801 = vmatpush.bf16.msra.mxu0 %v512
    %802 = vmatpush.bf16.msra.mxu0 %v506
    %803 = vmatpush.bf16.msra.mxu0 %v500
    %804 = vmatpush.bf16.msra.mxu0 %v494
    %805 = vmatpush.bf16.msra.mxu0 %v488
    %806 = vmatpush.bf16.msra.mxu0 %v482
    %807 = vmatmul.bf16.gmra.mxu0 %v187
    %v808 = vpop.f32.mrf.mxu0
    %v809 = vadd.f32 0.0, %v808
    %v810 = vpop.f32.mrf.mxu0
    %811 = vdwg.mxu0
    %812 = vmatpush.bf16.msra.mxu0 %v572
    %813 = vmatpush.bf16.msra.mxu0 %v566
    %814 = vmatpush.bf16.msra.mxu0 %v560
    %815 = vmatpush.bf16.msra.mxu0 %v554
    %816 = vmatpush.bf16.msra.mxu0 %v548
    %817 = vmatpush.bf16.msra.mxu0 %v542
    %818 = vmatpush.bf16.msra.mxu0 %v536
    %819 = vmatpush.bf16.msra.mxu0 %v530
    %820 = vmatmul.bf16.gmra.mxu0 %v188
    %v821 = vpop.f32.mrf.mxu0
    %v822 = vadd.f32 %v809, %v821
    %v823 = vpop.f32.mrf.mxu0
    %824 = vdwg.mxu0
    %v825 = vunpack.c.l.bf16 %v184
    %v826 = vadd.f32 %v825, %v692
    %v827 = vxor.u32 %v826, 2147483648
    %v828 = vmul.f32 %v827, 1.442695
    %v829 = vpow.pop %v828
    %v830 = vadd.f32 %v829, 1.0
    %v831 = vrcp.pop %v830
    %v832 = vmul.f32 %v830, %v831
    %v833 = vsub.f32 1.0, %v832
    %v834 = vmul.f32 %v831, %v833
    %v835 = vadd.f32 %v831, %v834
    %vm836 = vweird.f32 %v830
    %vm837 = vweird.f32 %v831
    %vm838 = vmor %vm836, %vm837
    %v839 = vsel %vm838, %v831, %v835
    %v840 = vand.u32 2147483647, %v830
    %vm841 = vcmp.eq.f32.partialorder %v840, 8.507059e+37
    %v842 = vand.u32 %v830, 2147483648
    %v843 = vor.u32 1.1754944e-38, %v842
    %v844 = vsel %vm841, %v843, %v839
    %v845 = vmul.f32 1.0, %v844
    %v847 = vrot.slane %v825, 2
    %v849 = vadd.f32 %v847, %v718
    %v850 = vxor.u32 %v849, 2147483648
    %v851 = vmul.f32 %v850, 1.442695
    %v852 = vpow.pop %v851
    %v853 = vadd.f32 %v852, 1.0
    %v854 = vrcp.pop %v853
    %v855 = vmul.f32 %v853, %v854
    %v856 = vsub.f32 1.0, %v855
    %v857 = vmul.f32 %v854, %v856
    %v858 = vadd.f32 %v854, %v857
    %vm859 = vweird.f32 %v853
    %vm860 = vweird.f32 %v854
    %vm861 = vmor %vm859, %vm860
    %v862 = vsel %vm861, %v854, %v858
    %v863 = vand.u32 2147483647, %v853
    %vm864 = vcmp.eq.f32.partialorder %v863, 8.507059e+37
    %v865 = vand.u32 %v853, 2147483648
    %v866 = vor.u32 1.1754944e-38, %v865
    %v867 = vsel %vm864, %v866, %v862
    %v868 = vmul.f32 1.0, %v867
    %v869 = vadd.f32 %v744, %v176
    %v870 = vmul.f32 %v845, %v869
    %v871 = vrot.slane %v825, 4
    %v873 = vadd.f32 %v871, %v870
    %v874 = vtanh.pop %v873
    %v875 = vsub.f32 %v182, %v874
    %v876 = vmul.f32 %v868, %v875
    %v877 = vadd.f32 %v874, %v876
    %v878 = vunpack.c.l.bf16 %v186
    %v879 = vadd.f32 %v878, %v770
    %v880 = vxor.u32 %v879, 2147483648
    %v881 = vmul.f32 %v880, 1.442695
    %v882 = vpow.pop %v881
    %v883 = vadd.f32 %v882, 1.0
    %v884 = vrcp.pop %v883
    %v885 = vmul.f32 %v883, %v884
    %v886 = vsub.f32 1.0, %v885
    %v887 = vmul.f32 %v884, %v886
    %v888 = vadd.f32 %v884, %v887
    %vm889 = vweird.f32 %v883
    %vm890 = vweird.f32 %v884
    %vm891 = vmor %vm889, %vm890
    %v892 = vsel %vm891, %v884, %v888
    %v893 = vand.u32 2147483647, %v883
    %vm894 = vcmp.eq.f32.partialorder %v893, 8.507059e+37
    %v895 = vand.u32 %v883, 2147483648
    %v896 = vor.u32 1.1754944e-38, %v895
    %v897 = vsel %vm894, %v896, %v892
    %v898 = vmul.f32 1.0, %v897
    %v900 = vrot.slane %v878, 2
    %v902 = vadd.f32 %v900, %v796
    %v903 = vxor.u32 %v902, 2147483648
    %v904 = vmul.f32 %v903, 1.442695
    %v905 = vpow.pop %v904
    %v906 = vadd.f32 %v905, 1.0
    %v907 = vrcp.pop %v906
    %v908 = vmul.f32 %v906, %v907
    %v909 = vsub.f32 1.0, %v908
    %v910 = vmul.f32 %v907, %v909
    %v911 = vadd.f32 %v907, %v910
    %vm912 = vweird.f32 %v906
    %vm913 = vweird.f32 %v907
    %vm914 = vmor %vm912, %vm913
    %v915 = vsel %vm914, %v907, %v911
    %v916 = vand.u32 2147483647, %v906
    %vm917 = vcmp.eq.f32.partialorder %v916, 8.507059e+37
    %v918 = vand.u32 %v906, 2147483648
    %v919 = vor.u32 1.1754944e-38, %v918
    %v920 = vsel %vm917, %v919, %v915
    %v921 = vmul.f32 1.0, %v920
    %v922 = vadd.f32 %v822, %v180
    %v923 = vmul.f32 %v898, %v922
    %v924 = vrot.slane %v878, 4
    %v926 = vadd.f32 %v924, %v923
    %v927 = vtanh.pop %v926
    %v928 = vsub.f32 %v183, %v927
    %v929 = vmul.f32 %v921, %v928
    %v930 = vadd.f32 %v927, %v929
    %v931 = vpack.c.bf16 %v877, %v877
    %932 = vst [vmem:[%s5] sm:$0x1] %v931
    %v933 = vpack.c.bf16 %v930, %v930
    %s934 = scalar_lea.vmem %s69, 7
    %935 = vst [vmem:[%s934] sm:$0x1] %v933
    %s936 = scalar_lea.vmem %s0, 3
    %v937 = vld [vmem:[%s936] sm:$0x7]
    %s938 = scalar_lea.vmem %s62, 18
    %v939 = vld [vmem:[%s938] sm:$0x7]
    %940 = vmatpush.bf16.msra.mxu0 %v519
    %941 = vmatpush.bf16.msra.mxu0 %v513
    %942 = vmatpush.bf16.msra.mxu0 %v507
    %943 = vmatpush.bf16.msra.mxu0 %v501
    %944 = vmatpush.bf16.msra.mxu0 %v495
    %945 = vmatpush.bf16.msra.mxu0 %v489
    %946 = vmatpush.bf16.msra.mxu0 %v483
    %947 = vmatpush.bf16.msra.mxu0 %v477
    %948 = vmatmul.bf16.gmra.mxu0 %v931
    %v949 = vpop.f32.mrf.mxu0
    %v950 = vadd.f32 0.0, %v949
    %v951 = vpop.f32.mrf.mxu0
    %952 = vdwg.mxu0
    %953 = vmatpush.bf16.msra.mxu0 %v567
    %954 = vmatpush.bf16.msra.mxu0 %v561
    %955 = vmatpush.bf16.msra.mxu0 %v555
    %956 = vmatpush.bf16.msra.mxu0 %v549
    %957 = vmatpush.bf16.msra.mxu0 %v543
    %958 = vmatpush.bf16.msra.mxu0 %v537
    %959 = vmatpush.bf16.msra.mxu0 %v531
    %960 = vmatpush.bf16.msra.mxu0 %v525
    %961 = vmatmul.bf16.gmra.mxu0 %v933
    %v962 = vpop.f32.mrf.mxu0
    %v963 = vadd.f32 %v950, %v962
    %v964 = vpop.f32.mrf.mxu0
    %965 = vdwg.mxu0
    %966 = vmatpush.bf16.msra.mxu0 %v520
    %967 = vmatpush.bf16.msra.mxu0 %v514
    %968 = vmatpush.bf16.msra.mxu0 %v508
    %969 = vmatpush.bf16.msra.mxu0 %v502
    %970 = vmatpush.bf16.msra.mxu0 %v496
    %971 = vmatpush.bf16.msra.mxu0 %v490
    %972 = vmatpush.bf16.msra.mxu0 %v484
    %973 = vmatpush.bf16.msra.mxu0 %v478
    %974 = vmatmul.bf16.gmra.mxu0 %v931
    %v975 = vpop.f32.mrf.mxu0
    %v976 = vadd.f32 0.0, %v975
    %v977 = vpop.f32.mrf.mxu0
    %978 = vdwg.mxu0
    %979 = vmatpush.bf16.msra.mxu0 %v568
    %980 = vmatpush.bf16.msra.mxu0 %v562
    %981 = vmatpush.bf16.msra.mxu0 %v556
    %982 = vmatpush.bf16.msra.mxu0 %v550
    %983 = vmatpush.bf16.msra.mxu0 %v544
    %984 = vmatpush.bf16.msra.mxu0 %v538
    %985 = vmatpush.bf16.msra.mxu0 %v532
    %986 = vmatpush.bf16.msra.mxu0 %v526
    %987 = vmatmul.bf16.gmra.mxu0 %v933
    %v988 = vpop.f32.mrf.mxu0
    %v989 = vadd.f32 %v976, %v988
    %v990 = vpop.f32.mrf.mxu0
    %991 = vdwg.mxu0
    %992 = vmatpush.bf16.msra.mxu0 %v521
    %993 = vmatpush.bf16.msra.mxu0 %v515
    %994 = vmatpush.bf16.msra.mxu0 %v509
    %995 = vmatpush.bf16.msra.mxu0 %v503
    %996 = vmatpush.bf16.msra.mxu0 %v497
    %997 = vmatpush.bf16.msra.mxu0 %v491
    %998 = vmatpush.bf16.msra.mxu0 %v485
    %999 = vmatpush.bf16.msra.mxu0 %v479
    %1000 = vmatmul.bf16.gmra.mxu0 %v931
    %v1001 = vpop.f32.mrf.mxu0
    %v1002 = vadd.f32 0.0, %v1001
    %v1003 = vpop.f32.mrf.mxu0
    %1004 = vdwg.mxu0
    %1005 = vmatpush.bf16.msra.mxu0 %v569
    %1006 = vmatpush.bf16.msra.mxu0 %v563
    %1007 = vmatpush.bf16.msra.mxu0 %v557
    %1008 = vmatpush.bf16.msra.mxu0 %v551
    %1009 = vmatpush.bf16.msra.mxu0 %v545
    %1010 = vmatpush.bf16.msra.mxu0 %v539
    %1011 = vmatpush.bf16.msra.mxu0 %v533
    %1012 = vmatpush.bf16.msra.mxu0 %v527
    %1013 = vmatmul.bf16.gmra.mxu0 %v933
    %v1014 = vpop.f32.mrf.mxu0
    %v1015 = vadd.f32 %v1002, %v1014
    %v1016 = vpop.f32.mrf.mxu0
    %1017 = vdwg.mxu0
    %1018 = vmatpush.bf16.msra.mxu0 %v522
    %1019 = vmatpush.bf16.msra.mxu0 %v516
    %1020 = vmatpush.bf16.msra.mxu0 %v510
    %1021 = vmatpush.bf16.msra.mxu0 %v504
    %1022 = vmatpush.bf16.msra.mxu0 %v498
    %1023 = vmatpush.bf16.msra.mxu0 %v492
    %1024 = vmatpush.bf16.msra.mxu0 %v486
    %1025 = vmatpush.bf16.msra.mxu0 %v480
    %1026 = vmatmul.bf16.gmra.mxu0 %v931
    %v1027 = vpop.f32.mrf.mxu0
    %v1028 = vadd.f32 0.0, %v1027
    %v1029 = vpop.f32.mrf.mxu0
    %1030 = vdwg.mxu0
    %1031 = vmatpush.bf16.msra.mxu0 %v570
    %1032 = vmatpush.bf16.msra.mxu0 %v564
    %1033 = vmatpush.bf16.msra.mxu0 %v558
    %1034 = vmatpush.bf16.msra.mxu0 %v552
    %1035 = vmatpush.bf16.msra.mxu0 %v546
    %1036 = vmatpush.bf16.msra.mxu0 %v540
    %1037 = vmatpush.bf16.msra.mxu0 %v534
    %1038 = vmatpush.bf16.msra.mxu0 %v528
    %1039 = vmatmul.bf16.gmra.mxu0 %v933
    %v1040 = vpop.f32.mrf.mxu0
    %v1041 = vadd.f32 %v1028, %v1040
    %v1042 = vpop.f32.mrf.mxu0
    %1043 = vdwg.mxu0
    %1044 = vmatpush.bf16.msra.mxu0 %v523
    %1045 = vmatpush.bf16.msra.mxu0 %v517
    %1046 = vmatpush.bf16.msra.mxu0 %v511
    %1047 = vmatpush.bf16.msra.mxu0 %v505
    %1048 = vmatpush.bf16.msra.mxu0 %v499
    %1049 = vmatpush.bf16.msra.mxu0 %v493
    %1050 = vmatpush.bf16.msra.mxu0 %v487
    %1051 = vmatpush.bf16.msra.mxu0 %v481
    %1052 = vmatmul.bf16.gmra.mxu0 %v931
    %v1053 = vpop.f32.mrf.mxu0
    %v1054 = vadd.f32 0.0, %v1053
    %v1055 = vpop.f32.mrf.mxu0
    %1056 = vdwg.mxu0
    %1057 = vmatpush.bf16.msra.mxu0 %v571
    %1058 = vmatpush.bf16.msra.mxu0 %v565
    %1059 = vmatpush.bf16.msra.mxu0 %v559
    %1060 = vmatpush.bf16.msra.mxu0 %v553
    %1061 = vmatpush.bf16.msra.mxu0 %v547
    %1062 = vmatpush.bf16.msra.mxu0 %v541
    %1063 = vmatpush.bf16.msra.mxu0 %v535
    %1064 = vmatpush.bf16.msra.mxu0 %v529
    %1065 = vmatmul.bf16.gmra.mxu0 %v933
    %v1066 = vpop.f32.mrf.mxu0
    %v1067 = vadd.f32 %v1054, %v1066
    %v1068 = vpop.f32.mrf.mxu0
    %1069 = vdwg.mxu0
    %1070 = vmatpush.bf16.msra.mxu0 %v524
    %1071 = vmatpush.bf16.msra.mxu0 %v518
    %1072 = vmatpush.bf16.msra.mxu0 %v512
    %1073 = vmatpush.bf16.msra.mxu0 %v506
    %1074 = vmatpush.bf16.msra.mxu0 %v500
    %1075 = vmatpush.bf16.msra.mxu0 %v494
    %1076 = vmatpush.bf16.msra.mxu0 %v488
    %1077 = vmatpush.bf16.msra.mxu0 %v482
    %1078 = vmatmul.bf16.gmra.mxu0 %v931
    %v1079 = vpop.f32.mrf.mxu0
    %v1080 = vadd.f32 0.0, %v1079
    %v1081 = vpop.f32.mrf.mxu0
    %1082 = vdwg.mxu0
    %1083 = vmatpush.bf16.msra.mxu0 %v572
    %1084 = vmatpush.bf16.msra.mxu0 %v566
    %1085 = vmatpush.bf16.msra.mxu0 %v560
    %1086 = vmatpush.bf16.msra.mxu0 %v554
    %1087 = vmatpush.bf16.msra.mxu0 %v548
    %1088 = vmatpush.bf16.msra.mxu0 %v542
    %1089 = vmatpush.bf16.msra.mxu0 %v536
    %1090 = vmatpush.bf16.msra.mxu0 %v530
    %1091 = vmatmul.bf16.gmra.mxu0 %v933
    %v1092 = vpop.f32.mrf.mxu0
    %v1093 = vadd.f32 %v1080, %v1092
    %v1094 = vpop.f32.mrf.mxu0
    %1095 = vdwg.mxu0
    %v1096 = vunpack.c.l.bf16 %v937
    %v1097 = vadd.f32 %v1096, %v963
    %v1098 = vxor.u32 %v1097, 2147483648
    %v1099 = vmul.f32 %v1098, 1.442695
    %v1100 = vpow.pop %v1099
    %v1101 = vadd.f32 %v1100, 1.0
    %v1102 = vrcp.pop %v1101
    %v1103 = vmul.f32 %v1101, %v1102
    %v1104 = vsub.f32 1.0, %v1103
    %v1105 = vmul.f32 %v1102, %v1104
    %v1106 = vadd.f32 %v1102, %v1105
    %vm1107 = vweird.f32 %v1101
    %vm1108 = vweird.f32 %v1102
    %vm1109 = vmor %vm1107, %vm1108
    %v1110 = vsel %vm1109, %v1102, %v1106
    %v1111 = vand.u32 2147483647, %v1101
    %vm1112 = vcmp.eq.f32.partialorder %v1111, 8.507059e+37
    %v1113 = vand.u32 %v1101, 2147483648
    %v1114 = vor.u32 1.1754944e-38, %v1113
    %v1115 = vsel %vm1112, %v1114, %v1110
    %v1116 = vmul.f32 1.0, %v1115
    %v1118 = vrot.slane %v1096, 2
    %v1120 = vadd.f32 %v1118, %v989
    %v1121 = vxor.u32 %v1120, 2147483648
    %v1122 = vmul.f32 %v1121, 1.442695
    %v1123 = vpow.pop %v1122
    %v1124 = vadd.f32 %v1123, 1.0
    %v1125 = vrcp.pop %v1124
    %v1126 = vmul.f32 %v1124, %v1125
    %v1127 = vsub.f32 1.0, %v1126
    %v1128 = vmul.f32 %v1125, %v1127
    %v1129 = vadd.f32 %v1125, %v1128
    %vm1130 = vweird.f32 %v1124
    %vm1131 = vweird.f32 %v1125
    %vm1132 = vmor %vm1130, %vm1131
    %v1133 = vsel %vm1132, %v1125, %v1129
    %v1134 = vand.u32 2147483647, %v1124
    %vm1135 = vcmp.eq.f32.partialorder %v1134, 8.507059e+37
    %v1136 = vand.u32 %v1124, 2147483648
    %v1137 = vor.u32 1.1754944e-38, %v1136
    %v1138 = vsel %vm1135, %v1137, %v1133
    %v1139 = vmul.f32 1.0, %v1138
    %v1140 = vadd.f32 %v1015, %v176
    %v1141 = vmul.f32 %v1116, %v1140
    %v1142 = vrot.slane %v1096, 4
    %v1144 = vadd.f32 %v1142, %v1141
    %v1145 = vtanh.pop %v1144
    %v1146 = vsub.f32 %v877, %v1145
    %v1147 = vmul.f32 %v1139, %v1146
    %v1148 = vadd.f32 %v1145, %v1147
    %v1149 = vunpack.c.l.bf16 %v939
    %v1150 = vadd.f32 %v1149, %v1041
    %v1151 = vxor.u32 %v1150, 2147483648
    %v1152 = vmul.f32 %v1151, 1.442695
    %v1153 = vpow.pop %v1152
    %v1154 = vadd.f32 %v1153, 1.0
    %v1155 = vrcp.pop %v1154
    %v1156 = vmul.f32 %v1154, %v1155
    %v1157 = vsub.f32 1.0, %v1156
    %v1158 = vmul.f32 %v1155, %v1157
    %v1159 = vadd.f32 %v1155, %v1158
    %vm1160 = vweird.f32 %v1154
    %vm1161 = vweird.f32 %v1155
    %vm1162 = vmor %vm1160, %vm1161
    %v1163 = vsel %vm1162, %v1155, %v1159
    %v1164 = vand.u32 2147483647, %v1154
    %vm1165 = vcmp.eq.f32.partialorder %v1164, 8.507059e+37
    %v1166 = vand.u32 %v1154, 2147483648
    %v1167 = vor.u32 1.1754944e-38, %v1166
    %v1168 = vsel %vm1165, %v1167, %v1163
    %v1169 = vmul.f32 1.0, %v1168
    %v1171 = vrot.slane %v1149, 2
    %v1173 = vadd.f32 %v1171, %v1067
    %v1174 = vxor.u32 %v1173, 2147483648
    %v1175 = vmul.f32 %v1174, 1.442695
    %v1176 = vpow.pop %v1175
    %v1177 = vadd.f32 %v1176, 1.0
    %v1178 = vrcp.pop %v1177
    %v1179 = vmul.f32 %v1177, %v1178
    %v1180 = vsub.f32 1.0, %v1179
    %v1181 = vmul.f32 %v1178, %v1180
    %v1182 = vadd.f32 %v1178, %v1181
    %vm1183 = vweird.f32 %v1177
    %vm1184 = vweird.f32 %v1178
    %vm1185 = vmor %vm1183, %vm1184
    %v1186 = vsel %vm1185, %v1178, %v1182
    %v1187 = vand.u32 2147483647, %v1177
    %vm1188 = vcmp.eq.f32.partialorder %v1187, 8.507059e+37
    %v1189 = vand.u32 %v1177, 2147483648
    %v1190 = vor.u32 1.1754944e-38, %v1189
    %v1191 = vsel %vm1188, %v1190, %v1186
    %v1192 = vmul.f32 1.0, %v1191
    %v1193 = vadd.f32 %v1093, %v180
    %v1194 = vmul.f32 %v1169, %v1193
    %v1195 = vrot.slane %v1149, 4
    %v1197 = vadd.f32 %v1195, %v1194
    %v1198 = vtanh.pop %v1197
    %v1199 = vsub.f32 %v930, %v1198
    %v1200 = vmul.f32 %v1192, %v1199
    %v1201 = vadd.f32 %v1198, %v1200
    %v1202 = vpack.c.bf16 %v1148, %v1148
    %s1203 = scalar_lea.vmem %s5, 1
    %1204 = vst [vmem:[%s1203] sm:$0x1] %v1202
    %v1205 = vpack.c.bf16 %v1201, %v1201
    %s1206 = scalar_lea.vmem %s69, 6
    %1207 = vst [vmem:[%s1206] sm:$0x1] %v1205
    %s1208 = scalar_lea.vmem %s0, 6
    %v1209 = vld [vmem:[%s1208] sm:$0x7]
    %s1210 = scalar_lea.vmem %s62, 15
    %v1211 = vld [vmem:[%s1210] sm:$0x7]
    %1212 = vmatpush.bf16.msra.mxu0 %v519
    %1213 = vmatpush.bf16.msra.mxu0 %v513
    %1214 = vmatpush.bf16.msra.mxu0 %v507
    %1215 = vmatpush.bf16.msra.mxu0 %v501
    %1216 = vmatpush.bf16.msra.mxu0 %v495
    %1217 = vmatpush.bf16.msra.mxu0 %v489
    %1218 = vmatpush.bf16.msra.mxu0 %v483
    %1219 = vmatpush.bf16.msra.mxu0 %v477
    %1220 = vmatmul.bf16.gmra.mxu0 %v1202
    %v1221 = vpop.f32.mrf.mxu0
    %v1222 = vadd.f32 0.0, %v1221
    %v1223 = vpop.f32.mrf.mxu0
    %1224 = vdwg.mxu0
    %1225 = vmatpush.bf16.msra.mxu0 %v567
    %1226 = vmatpush.bf16.msra.mxu0 %v561
    %1227 = vmatpush.bf16.msra.mxu0 %v555
    %1228 = vmatpush.bf16.msra.mxu0 %v549
    %1229 = vmatpush.bf16.msra.mxu0 %v543
    %1230 = vmatpush.bf16.msra.mxu0 %v537
    %1231 = vmatpush.bf16.msra.mxu0 %v531
    %1232 = vmatpush.bf16.msra.mxu0 %v525
    %1233 = vmatmul.bf16.gmra.mxu0 %v1205
    %v1234 = vpop.f32.mrf.mxu0
    %v1235 = vadd.f32 %v1222, %v1234
    %v1236 = vpop.f32.mrf.mxu0
    %1237 = vdwg.mxu0
    %1238 = vmatpush.bf16.msra.mxu0 %v520
    %1239 = vmatpush.bf16.msra.mxu0 %v514
    %1240 = vmatpush.bf16.msra.mxu0 %v508
    %1241 = vmatpush.bf16.msra.mxu0 %v502
    %1242 = vmatpush.bf16.msra.mxu0 %v496
    %1243 = vmatpush.bf16.msra.mxu0 %v490
    %1244 = vmatpush.bf16.msra.mxu0 %v484
    %1245 = vmatpush.bf16.msra.mxu0 %v478
    %1246 = vmatmul.bf16.gmra.mxu0 %v1202
    %v1247 = vpop.f32.mrf.mxu0
    %v1248 = vadd.f32 0.0, %v1247
    %v1249 = vpop.f32.mrf.mxu0
    %1250 = vdwg.mxu0
    %1251 = vmatpush.bf16.msra.mxu0 %v568
    %1252 = vmatpush.bf16.msra.mxu0 %v562
    %1253 = vmatpush.bf16.msra.mxu0 %v556
    %1254 = vmatpush.bf16.msra.mxu0 %v550
    %1255 = vmatpush.bf16.msra.mxu0 %v544
    %1256 = vmatpush.bf16.msra.mxu0 %v538
    %1257 = vmatpush.bf16.msra.mxu0 %v532
    %1258 = vmatpush.bf16.msra.mxu0 %v526
    %1259 = vmatmul.bf16.gmra.mxu0 %v1205
    %v1260 = vpop.f32.mrf.mxu0
    %v1261 = vadd.f32 %v1248, %v1260
    %v1262 = vpop.f32.mrf.mxu0
    %1263 = vdwg.mxu0
    %1264 = vmatpush.bf16.msra.mxu0 %v521
    %1265 = vmatpush.bf16.msra.mxu0 %v515
    %1266 = vmatpush.bf16.msra.mxu0 %v509
    %1267 = vmatpush.bf16.msra.mxu0 %v503
    %1268 = vmatpush.bf16.msra.mxu0 %v497
    %1269 = vmatpush.bf16.msra.mxu0 %v491
    %1270 = vmatpush.bf16.msra.mxu0 %v485
    %1271 = vmatpush.bf16.msra.mxu0 %v479
    %1272 = vmatmul.bf16.gmra.mxu0 %v1202
    %v1273 = vpop.f32.mrf.mxu0
    %v1274 = vadd.f32 0.0, %v1273
    %v1275 = vpop.f32.mrf.mxu0
    %1276 = vdwg.mxu0
    %1277 = vmatpush.bf16.msra.mxu0 %v569
    %1278 = vmatpush.bf16.msra.mxu0 %v563
    %1279 = vmatpush.bf16.msra.mxu0 %v557
    %1280 = vmatpush.bf16.msra.mxu0 %v551
    %1281 = vmatpush.bf16.msra.mxu0 %v545
    %1282 = vmatpush.bf16.msra.mxu0 %v539
    %1283 = vmatpush.bf16.msra.mxu0 %v533
    %1284 = vmatpush.bf16.msra.mxu0 %v527
    %1285 = vmatmul.bf16.gmra.mxu0 %v1205
    %v1286 = vpop.f32.mrf.mxu0
    %v1287 = vadd.f32 %v1274, %v1286
    %v1288 = vpop.f32.mrf.mxu0
    %1289 = vdwg.mxu0
    %1290 = vmatpush.bf16.msra.mxu0 %v522
    %1291 = vmatpush.bf16.msra.mxu0 %v516
    %1292 = vmatpush.bf16.msra.mxu0 %v510
    %1293 = vmatpush.bf16.msra.mxu0 %v504
    %1294 = vmatpush.bf16.msra.mxu0 %v498
    %1295 = vmatpush.bf16.msra.mxu0 %v492
    %1296 = vmatpush.bf16.msra.mxu0 %v486
    %1297 = vmatpush.bf16.msra.mxu0 %v480
    %1298 = vmatmul.bf16.gmra.mxu0 %v1202
    %v1299 = vpop.f32.mrf.mxu0
    %v1300 = vadd.f32 0.0, %v1299
    %v1301 = vpop.f32.mrf.mxu0
    %1302 = vdwg.mxu0
    %1303 = vmatpush.bf16.msra.mxu0 %v570
    %1304 = vmatpush.bf16.msra.mxu0 %v564
    %1305 = vmatpush.bf16.msra.mxu0 %v558
    %1306 = vmatpush.bf16.msra.mxu0 %v552
    %1307 = vmatpush.bf16.msra.mxu0 %v546
    %1308 = vmatpush.bf16.msra.mxu0 %v540
    %1309 = vmatpush.bf16.msra.mxu0 %v534
    %1310 = vmatpush.bf16.msra.mxu0 %v528
    %1311 = vmatmul.bf16.gmra.mxu0 %v1205
    %v1312 = vpop.f32.mrf.mxu0
    %v1313 = vadd.f32 %v1300, %v1312
    %v1314 = vpop.f32.mrf.mxu0
    %1315 = vdwg.mxu0
    %1316 = vmatpush.bf16.msra.mxu0 %v523
    %1317 = vmatpush.bf16.msra.mxu0 %v517
    %1318 = vmatpush.bf16.msra.mxu0 %v511
    %1319 = vmatpush.bf16.msra.mxu0 %v505
    %1320 = vmatpush.bf16.msra.mxu0 %v499
    %1321 = vmatpush.bf16.msra.mxu0 %v493
    %1322 = vmatpush.bf16.msra.mxu0 %v487
    %1323 = vmatpush.bf16.msra.mxu0 %v481
    %1324 = vmatmul.bf16.gmra.mxu0 %v1202
    %v1325 = vpop.f32.mrf.mxu0
    %v1326 = vadd.f32 0.0, %v1325
    %v1327 = vpop.f32.mrf.mxu0
    %1328 = vdwg.mxu0
    %1329 = vmatpush.bf16.msra.mxu0 %v571
    %1330 = vmatpush.bf16.msra.mxu0 %v565
    %1331 = vmatpush.bf16.msra.mxu0 %v559
    %1332 = vmatpush.bf16.msra.mxu0 %v553
    %1333 = vmatpush.bf16.msra.mxu0 %v547
    %1334 = vmatpush.bf16.msra.mxu0 %v541
    %1335 = vmatpush.bf16.msra.mxu0 %v535
    %1336 = vmatpush.bf16.msra.mxu0 %v529
    %1337 = vmatmul.bf16.gmra.mxu0 %v1205
    %v1338 = vpop.f32.mrf.mxu0
    %v1339 = vadd.f32 %v1326, %v1338
    %v1340 = vpop.f32.mrf.mxu0
    %1341 = vdwg.mxu0
    %1342 = vmatpush.bf16.msra.mxu0 %v524
    %1343 = vmatpush.bf16.msra.mxu0 %v518
    %1344 = vmatpush.bf16.msra.mxu0 %v512
    %1345 = vmatpush.bf16.msra.mxu0 %v506
    %1346 = vmatpush.bf16.msra.mxu0 %v500
    %1347 = vmatpush.bf16.msra.mxu0 %v494
    %1348 = vmatpush.bf16.msra.mxu0 %v488
    %1349 = vmatpush.bf16.msra.mxu0 %v482
    %1350 = vmatmul.bf16.gmra.mxu0 %v1202
    %v1351 = vpop.f32.mrf.mxu0
    %v1352 = vadd.f32 0.0, %v1351
    %v1353 = vpop.f32.mrf.mxu0
    %1354 = vdwg.mxu0
    %1355 = vmatpush.bf16.msra.mxu0 %v572
    %1356 = vmatpush.bf16.msra.mxu0 %v566
    %1357 = vmatpush.bf16.msra.mxu0 %v560
    %1358 = vmatpush.bf16.msra.mxu0 %v554
    %1359 = vmatpush.bf16.msra.mxu0 %v548
    %1360 = vmatpush.bf16.msra.mxu0 %v542
    %1361 = vmatpush.bf16.msra.mxu0 %v536
    %1362 = vmatpush.bf16.msra.mxu0 %v530
    %1363 = vmatmul.bf16.gmra.mxu0 %v1205
    %v1364 = vpop.f32.mrf.mxu0
    %v1365 = vadd.f32 %v1352, %v1364
    %v1366 = vpop.f32.mrf.mxu0
    %1367 = vdwg.mxu0
    %v1368 = vunpack.c.l.bf16 %v1209
    %v1369 = vadd.f32 %v1368, %v1235
    %v1370 = vxor.u32 %v1369, 2147483648
    %v1371 = vmul.f32 %v1370, 1.442695
    %v1372 = vpow.pop %v1371
    %v1373 = vadd.f32 %v1372, 1.0
    %v1374 = vrcp.pop %v1373
    %v1375 = vmul.f32 %v1373, %v1374
    %v1376 = vsub.f32 1.0, %v1375
    %v1377 = vmul.f32 %v1374, %v1376
    %v1378 = vadd.f32 %v1374, %v1377
    %vm1379 = vweird.f32 %v1373
    %vm1380 = vweird.f32 %v1374
    %vm1381 = vmor %vm1379, %vm1380
    %v1382 = vsel %vm1381, %v1374, %v1378
    %v1383 = vand.u32 2147483647, %v1373
    %vm1384 = vcmp.eq.f32.partialorder %v1383, 8.507059e+37
    %v1385 = vand.u32 %v1373, 2147483648
    %v1386 = vor.u32 1.1754944e-38, %v1385
    %v1387 = vsel %vm1384, %v1386, %v1382
    %v1388 = vmul.f32 1.0, %v1387
    %v1390 = vrot.slane %v1368, 2
    %v1392 = vadd.f32 %v1390, %v1261
    %v1393 = vxor.u32 %v1392, 2147483648
    %v1394 = vmul.f32 %v1393, 1.442695
    %v1395 = vpow.pop %v1394
    %v1396 = vadd.f32 %v1395, 1.0
    %v1397 = vrcp.pop %v1396
    %v1398 = vmul.f32 %v1396, %v1397
    %v1399 = vsub.f32 1.0, %v1398
    %v1400 = vmul.f32 %v1397, %v1399
    %v1401 = vadd.f32 %v1397, %v1400
    %vm1402 = vweird.f32 %v1396
    %vm1403 = vweird.f32 %v1397
    %vm1404 = vmor %vm1402, %vm1403
    %v1405 = vsel %vm1404, %v1397, %v1401
    %v1406 = vand.u32 2147483647, %v1396
    %vm1407 = vcmp.eq.f32.partialorder %v1406, 8.507059e+37
    %v1408 = vand.u32 %v1396, 2147483648
    %v1409 = vor.u32 1.1754944e-38, %v1408
    %v1410 = vsel %vm1407, %v1409, %v1405
    %v1411 = vmul.f32 1.0, %v1410
    %v1412 = vadd.f32 %v1287, %v176
    %v1413 = vmul.f32 %v1388, %v1412
    %v1414 = vrot.slane %v1368, 4
    %v1416 = vadd.f32 %v1414, %v1413
    %v1417 = vtanh.pop %v1416
    %v1418 = vsub.f32 %v1148, %v1417
    %v1419 = vmul.f32 %v1411, %v1418
    %v1420 = vadd.f32 %v1417, %v1419
    %v1421 = vunpack.c.l.bf16 %v1211
    %v1422 = vadd.f32 %v1421, %v1313
    %v1423 = vxor.u32 %v1422, 2147483648
    %v1424 = vmul.f32 %v1423, 1.442695
    %v1425 = vpow.pop %v1424
    %v1426 = vadd.f32 %v1425, 1.0
    %v1427 = vrcp.pop %v1426
    %v1428 = vmul.f32 %v1426, %v1427
    %v1429 = vsub.f32 1.0, %v1428
    %v1430 = vmul.f32 %v1427, %v1429
    %v1431 = vadd.f32 %v1427, %v1430
    %vm1432 = vweird.f32 %v1426
    %vm1433 = vweird.f32 %v1427
    %vm1434 = vmor %vm1432, %vm1433
    %v1435 = vsel %vm1434, %v1427, %v1431
    %v1436 = vand.u32 2147483647, %v1426
    %vm1437 = vcmp.eq.f32.partialorder %v1436, 8.507059e+37
    %v1438 = vand.u32 %v1426, 2147483648
    %v1439 = vor.u32 1.1754944e-38, %v1438
    %v1440 = vsel %vm1437, %v1439, %v1435
    %v1441 = vmul.f32 1.0, %v1440
    %v1443 = vrot.slane %v1421, 2
    %v1445 = vadd.f32 %v1443, %v1339
    %v1446 = vxor.u32 %v1445, 2147483648
    %v1447 = vmul.f32 %v1446, 1.442695
    %v1448 = vpow.pop %v1447
    %v1449 = vadd.f32 %v1448, 1.0
    %v1450 = vrcp.pop %v1449
    %v1451 = vmul.f32 %v1449, %v1450
    %v1452 = vsub.f32 1.0, %v1451
    %v1453 = vmul.f32 %v1450, %v1452
    %v1454 = vadd.f32 %v1450, %v1453
    %vm1455 = vweird.f32 %v1449
    %vm1456 = vweird.f32 %v1450
    %vm1457 = vmor %vm1455, %vm1456
    %v1458 = vsel %vm1457, %v1450, %v1454
    %v1459 = vand.u32 2147483647, %v1449
    %vm1460 = vcmp.eq.f32.partialorder %v1459, 8.507059e+37
    %v1461 = vand.u32 %v1449, 2147483648
    %v1462 = vor.u32 1.1754944e-38, %v1461
    %v1463 = vsel %vm1460, %v1462, %v1458
    %v1464 = vmul.f32 1.0, %v1463
    %v1465 = vadd.f32 %v1365, %v180
    %v1466 = vmul.f32 %v1441, %v1465
    %v1467 = vrot.slane %v1421, 4
    %v1469 = vadd.f32 %v1467, %v1466
    %v1470 = vtanh.pop %v1469
    %v1471 = vsub.f32 %v1201, %v1470
    %v1472 = vmul.f32 %v1464, %v1471
    %v1473 = vadd.f32 %v1470, %v1472
    %v1474 = vpack.c.bf16 %v1420, %v1420
    %s1475 = scalar_lea.vmem %s5, 2
    %1476 = vst [vmem:[%s1475] sm:$0x1] %v1474
    %v1477 = vpack.c.bf16 %v1473, %v1473
    %s1478 = scalar_lea.vmem %s69, 5
    %1479 = vst [vmem:[%s1478] sm:$0x1] %v1477
    %s1480 = scalar_lea.vmem %s0, 9
    %v1481 = vld [vmem:[%s1480] sm:$0x7]
    %s1482 = scalar_lea.vmem %s62, 12
    %v1483 = vld [vmem:[%s1482] sm:$0x7]
    %1484 = vmatpush.bf16.msra.mxu0 %v519
    %1485 = vmatpush.bf16.msra.mxu0 %v513
    %1486 = vmatpush.bf16.msra.mxu0 %v507
    %1487 = vmatpush.bf16.msra.mxu0 %v501
    %1488 = vmatpush.bf16.msra.mxu0 %v495
    %1489 = vmatpush.bf16.msra.mxu0 %v489
    %1490 = vmatpush.bf16.msra.mxu0 %v483
    %1491 = vmatpush.bf16.msra.mxu0 %v477
    %1492 = vmatmul.bf16.gmra.mxu0 %v1474
    %v1493 = vpop.f32.mrf.mxu0
    %v1494 = vadd.f32 0.0, %v1493
    %v1495 = vpop.f32.mrf.mxu0
    %1496 = vdwg.mxu0
    %1497 = vmatpush.bf16.msra.mxu0 %v567
    %1498 = vmatpush.bf16.msra.mxu0 %v561
    %1499 = vmatpush.bf16.msra.mxu0 %v555
    %1500 = vmatpush.bf16.msra.mxu0 %v549
    %1501 = vmatpush.bf16.msra.mxu0 %v543
    %1502 = vmatpush.bf16.msra.mxu0 %v537
    %1503 = vmatpush.bf16.msra.mxu0 %v531
    %1504 = vmatpush.bf16.msra.mxu0 %v525
    %1505 = vmatmul.bf16.gmra.mxu0 %v1477
    %v1506 = vpop.f32.mrf.mxu0
    %v1507 = vadd.f32 %v1494, %v1506
    %v1508 = vpop.f32.mrf.mxu0
    %1509 = vdwg.mxu0
    %1510 = vmatpush.bf16.msra.mxu0 %v520
    %1511 = vmatpush.bf16.msra.mxu0 %v514
    %1512 = vmatpush.bf16.msra.mxu0 %v508
    %1513 = vmatpush.bf16.msra.mxu0 %v502
    %1514 = vmatpush.bf16.msra.mxu0 %v496
    %1515 = vmatpush.bf16.msra.mxu0 %v490
    %1516 = vmatpush.bf16.msra.mxu0 %v484
    %1517 = vmatpush.bf16.msra.mxu0 %v478
    %1518 = vmatmul.bf16.gmra.mxu0 %v1474
    %v1519 = vpop.f32.mrf.mxu0
    %v1520 = vadd.f32 0.0, %v1519
    %v1521 = vpop.f32.mrf.mxu0
    %1522 = vdwg.mxu0
    %1523 = vmatpush.bf16.msra.mxu0 %v568
    %1524 = vmatpush.bf16.msra.mxu0 %v562
    %1525 = vmatpush.bf16.msra.mxu0 %v556
    %1526 = vmatpush.bf16.msra.mxu0 %v550
    %1527 = vmatpush.bf16.msra.mxu0 %v544
    %1528 = vmatpush.bf16.msra.mxu0 %v538
    %1529 = vmatpush.bf16.msra.mxu0 %v532
    %1530 = vmatpush.bf16.msra.mxu0 %v526
    %1531 = vmatmul.bf16.gmra.mxu0 %v1477
    %v1532 = vpop.f32.mrf.mxu0
    %v1533 = vadd.f32 %v1520, %v1532
    %v1534 = vpop.f32.mrf.mxu0
    %1535 = vdwg.mxu0
    %1536 = vmatpush.bf16.msra.mxu0 %v521
    %1537 = vmatpush.bf16.msra.mxu0 %v515
    %1538 = vmatpush.bf16.msra.mxu0 %v509
    %1539 = vmatpush.bf16.msra.mxu0 %v503
    %1540 = vmatpush.bf16.msra.mxu0 %v497
    %1541 = vmatpush.bf16.msra.mxu0 %v491
    %1542 = vmatpush.bf16.msra.mxu0 %v485
    %1543 = vmatpush.bf16.msra.mxu0 %v479
    %1544 = vmatmul.bf16.gmra.mxu0 %v1474
    %v1545 = vpop.f32.mrf.mxu0
    %v1546 = vadd.f32 0.0, %v1545
    %v1547 = vpop.f32.mrf.mxu0
    %1548 = vdwg.mxu0
    %1549 = vmatpush.bf16.msra.mxu0 %v569
    %1550 = vmatpush.bf16.msra.mxu0 %v563
    %1551 = vmatpush.bf16.msra.mxu0 %v557
    %1552 = vmatpush.bf16.msra.mxu0 %v551
    %1553 = vmatpush.bf16.msra.mxu0 %v545
    %1554 = vmatpush.bf16.msra.mxu0 %v539
    %1555 = vmatpush.bf16.msra.mxu0 %v533
    %1556 = vmatpush.bf16.msra.mxu0 %v527
    %1557 = vmatmul.bf16.gmra.mxu0 %v1477
    %v1558 = vpop.f32.mrf.mxu0
    %v1559 = vadd.f32 %v1546, %v1558
    %v1560 = vpop.f32.mrf.mxu0
    %1561 = vdwg.mxu0
    %1562 = vmatpush.bf16.msra.mxu0 %v522
    %1563 = vmatpush.bf16.msra.mxu0 %v516
    %1564 = vmatpush.bf16.msra.mxu0 %v510
    %1565 = vmatpush.bf16.msra.mxu0 %v504
    %1566 = vmatpush.bf16.msra.mxu0 %v498
    %1567 = vmatpush.bf16.msra.mxu0 %v492
    %1568 = vmatpush.bf16.msra.mxu0 %v486
    %1569 = vmatpush.bf16.msra.mxu0 %v480
    %1570 = vmatmul.bf16.gmra.mxu0 %v1474
    %v1571 = vpop.f32.mrf.mxu0
    %v1572 = vadd.f32 0.0, %v1571
    %v1573 = vpop.f32.mrf.mxu0
    %1574 = vdwg.mxu0
    %1575 = vmatpush.bf16.msra.mxu0 %v570
    %1576 = vmatpush.bf16.msra.mxu0 %v564
    %1577 = vmatpush.bf16.msra.mxu0 %v558
    %1578 = vmatpush.bf16.msra.mxu0 %v552
    %1579 = vmatpush.bf16.msra.mxu0 %v546
    %1580 = vmatpush.bf16.msra.mxu0 %v540
    %1581 = vmatpush.bf16.msra.mxu0 %v534
    %1582 = vmatpush.bf16.msra.mxu0 %v528
    %1583 = vmatmul.bf16.gmra.mxu0 %v1477
    %v1584 = vpop.f32.mrf.mxu0
    %v1585 = vadd.f32 %v1572, %v1584
    %v1586 = vpop.f32.mrf.mxu0
    %1587 = vdwg.mxu0
    %1588 = vmatpush.bf16.msra.mxu0 %v523
    %1589 = vmatpush.bf16.msra.mxu0 %v517
    %1590 = vmatpush.bf16.msra.mxu0 %v511
    %1591 = vmatpush.bf16.msra.mxu0 %v505
    %1592 = vmatpush.bf16.msra.mxu0 %v499
    %1593 = vmatpush.bf16.msra.mxu0 %v493
    %1594 = vmatpush.bf16.msra.mxu0 %v487
    %1595 = vmatpush.bf16.msra.mxu0 %v481
    %1596 = vmatmul.bf16.gmra.mxu0 %v1474
    %v1597 = vpop.f32.mrf.mxu0
    %v1598 = vadd.f32 0.0, %v1597
    %v1599 = vpop.f32.mrf.mxu0
    %1600 = vdwg.mxu0
    %1601 = vmatpush.bf16.msra.mxu0 %v571
    %1602 = vmatpush.bf16.msra.mxu0 %v565
    %1603 = vmatpush.bf16.msra.mxu0 %v559
    %1604 = vmatpush.bf16.msra.mxu0 %v553
    %1605 = vmatpush.bf16.msra.mxu0 %v547
    %1606 = vmatpush.bf16.msra.mxu0 %v541
    %1607 = vmatpush.bf16.msra.mxu0 %v535
    %1608 = vmatpush.bf16.msra.mxu0 %v529
    %1609 = vmatmul.bf16.gmra.mxu0 %v1477
    %v1610 = vpop.f32.mrf.mxu0
    %v1611 = vadd.f32 %v1598, %v1610
    %v1612 = vpop.f32.mrf.mxu0
    %1613 = vdwg.mxu0
    %1614 = vmatpush.bf16.msra.mxu0 %v524
    %1615 = vmatpush.bf16.msra.mxu0 %v518
    %1616 = vmatpush.bf16.msra.mxu0 %v512
    %1617 = vmatpush.bf16.msra.mxu0 %v506
    %1618 = vmatpush.bf16.msra.mxu0 %v500
    %1619 = vmatpush.bf16.msra.mxu0 %v494
    %1620 = vmatpush.bf16.msra.mxu0 %v488
    %1621 = vmatpush.bf16.msra.mxu0 %v482
    %1622 = vmatmul.bf16.gmra.mxu0 %v1474
    %v1623 = vpop.f32.mrf.mxu0
    %v1624 = vadd.f32 0.0, %v1623
    %v1625 = vpop.f32.mrf.mxu0
    %1626 = vdwg.mxu0
    %1627 = vmatpush.bf16.msra.mxu0 %v572
    %1628 = vmatpush.bf16.msra.mxu0 %v566
    %1629 = vmatpush.bf16.msra.mxu0 %v560
    %1630 = vmatpush.bf16.msra.mxu0 %v554
    %1631 = vmatpush.bf16.msra.mxu0 %v548
    %1632 = vmatpush.bf16.msra.mxu0 %v542
    %1633 = vmatpush.bf16.msra.mxu0 %v536
    %1634 = vmatpush.bf16.msra.mxu0 %v530
    %1635 = vmatmul.bf16.gmra.mxu0 %v1477
    %v1636 = vpop.f32.mrf.mxu0
    %v1637 = vadd.f32 %v1624, %v1636
    %v1638 = vpop.f32.mrf.mxu0
    %1639 = vdwg.mxu0
    %v1640 = vunpack.c.l.bf16 %v1481
    %v1641 = vadd.f32 %v1640, %v1507
    %v1642 = vxor.u32 %v1641, 2147483648
    %v1643 = vmul.f32 %v1642, 1.442695
    %v1644 = vpow.pop %v1643
    %v1645 = vadd.f32 %v1644, 1.0
    %v1646 = vrcp.pop %v1645
    %v1647 = vmul.f32 %v1645, %v1646
    %v1648 = vsub.f32 1.0, %v1647
    %v1649 = vmul.f32 %v1646, %v1648
    %v1650 = vadd.f32 %v1646, %v1649
    %vm1651 = vweird.f32 %v1645
    %vm1652 = vweird.f32 %v1646
    %vm1653 = vmor %vm1651, %vm1652
    %v1654 = vsel %vm1653, %v1646, %v1650
    %v1655 = vand.u32 2147483647, %v1645
    %vm1656 = vcmp.eq.f32.partialorder %v1655, 8.507059e+37
    %v1657 = vand.u32 %v1645, 2147483648
    %v1658 = vor.u32 1.1754944e-38, %v1657
    %v1659 = vsel %vm1656, %v1658, %v1654
    %v1660 = vmul.f32 1.0, %v1659
    %v1662 = vrot.slane %v1640, 2
    %v1664 = vadd.f32 %v1662, %v1533
    %v1665 = vxor.u32 %v1664, 2147483648
    %v1666 = vmul.f32 %v1665, 1.442695
    %v1667 = vpow.pop %v1666
    %v1668 = vadd.f32 %v1667, 1.0
    %v1669 = vrcp.pop %v1668
    %v1670 = vmul.f32 %v1668, %v1669
    %v1671 = vsub.f32 1.0, %v1670
    %v1672 = vmul.f32 %v1669, %v1671
    %v1673 = vadd.f32 %v1669, %v1672
    %vm1674 = vweird.f32 %v1668
    %vm1675 = vweird.f32 %v1669
    %vm1676 = vmor %vm1674, %vm1675
    %v1677 = vsel %vm1676, %v1669, %v1673
    %v1678 = vand.u32 2147483647, %v1668
    %vm1679 = vcmp.eq.f32.partialorder %v1678, 8.507059e+37
    %v1680 = vand.u32 %v1668, 2147483648
    %v1681 = vor.u32 1.1754944e-38, %v1680
    %v1682 = vsel %vm1679, %v1681, %v1677
    %v1683 = vmul.f32 1.0, %v1682
    %v1684 = vadd.f32 %v1559, %v176
    %v1685 = vmul.f32 %v1660, %v1684
    %v1686 = vrot.slane %v1640, 4
    %v1688 = vadd.f32 %v1686, %v1685
    %v1689 = vtanh.pop %v1688
    %v1690 = vsub.f32 %v1420, %v1689
    %v1691 = vmul.f32 %v1683, %v1690
    %v1692 = vadd.f32 %v1689, %v1691
    %v1693 = vunpack.c.l.bf16 %v1483
    %v1694 = vadd.f32 %v1693, %v1585
    %v1695 = vxor.u32 %v1694, 2147483648
    %v1696 = vmul.f32 %v1695, 1.442695
    %v1697 = vpow.pop %v1696
    %v1698 = vadd.f32 %v1697, 1.0
    %v1699 = vrcp.pop %v1698
    %v1700 = vmul.f32 %v1698, %v1699
    %v1701 = vsub.f32 1.0, %v1700
    %v1702 = vmul.f32 %v1699, %v1701
    %v1703 = vadd.f32 %v1699, %v1702
    %vm1704 = vweird.f32 %v1698
    %vm1705 = vweird.f32 %v1699
    %vm1706 = vmor %vm1704, %vm1705
    %v1707 = vsel %vm1706, %v1699, %v1703
    %v1708 = vand.u32 2147483647, %v1698
    %vm1709 = vcmp.eq.f32.partialorder %v1708, 8.507059e+37
    %v1710 = vand.u32 %v1698, 2147483648
    %v1711 = vor.u32 1.1754944e-38, %v1710
    %v1712 = vsel %vm1709, %v1711, %v1707
    %v1713 = vmul.f32 1.0, %v1712
    %v1715 = vrot.slane %v1693, 2
    %v1717 = vadd.f32 %v1715, %v1611
    %v1718 = vxor.u32 %v1717, 2147483648
    %v1719 = vmul.f32 %v1718, 1.442695
    %v1720 = vpow.pop %v1719
    %v1721 = vadd.f32 %v1720, 1.0
    %v1722 = vrcp.pop %v1721
    %v1723 = vmul.f32 %v1721, %v1722
    %v1724 = vsub.f32 1.0, %v1723
    %v1725 = vmul.f32 %v1722, %v1724
    %v1726 = vadd.f32 %v1722, %v1725
    %vm1727 = vweird.f32 %v1721
    %vm1728 = vweird.f32 %v1722
    %vm1729 = vmor %vm1727, %vm1728
    %v1730 = vsel %vm1729, %v1722, %v1726
    %v1731 = vand.u32 2147483647, %v1721
    %vm1732 = vcmp.eq.f32.partialorder %v1731, 8.507059e+37
    %v1733 = vand.u32 %v1721, 2147483648
    %v1734 = vor.u32 1.1754944e-38, %v1733
    %v1735 = vsel %vm1732, %v1734, %v1730
    %v1736 = vmul.f32 1.0, %v1735
    %v1737 = vadd.f32 %v1637, %v180
    %v1738 = vmul.f32 %v1713, %v1737
    %v1739 = vrot.slane %v1693, 4
    %v1741 = vadd.f32 %v1739, %v1738
    %v1742 = vtanh.pop %v1741
    %v1743 = vsub.f32 %v1473, %v1742
    %v1744 = vmul.f32 %v1736, %v1743
    %v1745 = vadd.f32 %v1742, %v1744
    %v1746 = vpack.c.bf16 %v1692, %v1692
    %s1747 = scalar_lea.vmem %s5, 3
    %1748 = vst [vmem:[%s1747] sm:$0x1] %v1746
    %v1749 = vpack.c.bf16 %v1745, %v1745
    %s1750 = scalar_lea.vmem %s69, 4
    %1751 = vst [vmem:[%s1750] sm:$0x1] %v1749
    %s1752 = scalar_lea.vmem %s0, 12
    %v1753 = vld [vmem:[%s1752] sm:$0x7]
    %s1754 = scalar_lea.vmem %s62, 9
    %v1755 = vld [vmem:[%s1754] sm:$0x7]
    %1756 = vmatpush.bf16.msra.mxu0 %v519
    %1757 = vmatpush.bf16.msra.mxu0 %v513
    %1758 = vmatpush.bf16.msra.mxu0 %v507
    %1759 = vmatpush.bf16.msra.mxu0 %v501
    %1760 = vmatpush.bf16.msra.mxu0 %v495
    %1761 = vmatpush.bf16.msra.mxu0 %v489
    %1762 = vmatpush.bf16.msra.mxu0 %v483
    %1763 = vmatpush.bf16.msra.mxu0 %v477
    %1764 = vmatmul.bf16.gmra.mxu0 %v1746
    %v1765 = vpop.f32.mrf.mxu0
    %v1766 = vadd.f32 0.0, %v1765
    %v1767 = vpop.f32.mrf.mxu0
    %1768 = vdwg.mxu0
    %1769 = vmatpush.bf16.msra.mxu0 %v567
    %1770 = vmatpush.bf16.msra.mxu0 %v561
    %1771 = vmatpush.bf16.msra.mxu0 %v555
    %1772 = vmatpush.bf16.msra.mxu0 %v549
    %1773 = vmatpush.bf16.msra.mxu0 %v543
    %1774 = vmatpush.bf16.msra.mxu0 %v537
    %1775 = vmatpush.bf16.msra.mxu0 %v531
    %1776 = vmatpush.bf16.msra.mxu0 %v525
    %1777 = vmatmul.bf16.gmra.mxu0 %v1749
    %v1778 = vpop.f32.mrf.mxu0
    %v1779 = vadd.f32 %v1766, %v1778
    %v1780 = vpop.f32.mrf.mxu0
    %1781 = vdwg.mxu0
    %1782 = vmatpush.bf16.msra.mxu0 %v520
    %1783 = vmatpush.bf16.msra.mxu0 %v514
    %1784 = vmatpush.bf16.msra.mxu0 %v508
    %1785 = vmatpush.bf16.msra.mxu0 %v502
    %1786 = vmatpush.bf16.msra.mxu0 %v496
    %1787 = vmatpush.bf16.msra.mxu0 %v490
    %1788 = vmatpush.bf16.msra.mxu0 %v484
    %1789 = vmatpush.bf16.msra.mxu0 %v478
    %1790 = vmatmul.bf16.gmra.mxu0 %v1746
    %v1791 = vpop.f32.mrf.mxu0
    %v1792 = vadd.f32 0.0, %v1791
    %v1793 = vpop.f32.mrf.mxu0
    %1794 = vdwg.mxu0
    %1795 = vmatpush.bf16.msra.mxu0 %v568
    %1796 = vmatpush.bf16.msra.mxu0 %v562
    %1797 = vmatpush.bf16.msra.mxu0 %v556
    %1798 = vmatpush.bf16.msra.mxu0 %v550
    %1799 = vmatpush.bf16.msra.mxu0 %v544
    %1800 = vmatpush.bf16.msra.mxu0 %v538
    %1801 = vmatpush.bf16.msra.mxu0 %v532
    %1802 = vmatpush.bf16.msra.mxu0 %v526
    %1803 = vmatmul.bf16.gmra.mxu0 %v1749
    %v1804 = vpop.f32.mrf.mxu0
    %v1805 = vadd.f32 %v1792, %v1804
    %v1806 = vpop.f32.mrf.mxu0
    %1807 = vdwg.mxu0
    %1808 = vmatpush.bf16.msra.mxu0 %v521
    %1809 = vmatpush.bf16.msra.mxu0 %v515
    %1810 = vmatpush.bf16.msra.mxu0 %v509
    %1811 = vmatpush.bf16.msra.mxu0 %v503
    %1812 = vmatpush.bf16.msra.mxu0 %v497
    %1813 = vmatpush.bf16.msra.mxu0 %v491
    %1814 = vmatpush.bf16.msra.mxu0 %v485
    %1815 = vmatpush.bf16.msra.mxu0 %v479
    %1816 = vmatmul.bf16.gmra.mxu0 %v1746
    %v1817 = vpop.f32.mrf.mxu0
    %v1818 = vadd.f32 0.0, %v1817
    %v1819 = vpop.f32.mrf.mxu0
    %1820 = vdwg.mxu0
    %1821 = vmatpush.bf16.msra.mxu0 %v569
    %1822 = vmatpush.bf16.msra.mxu0 %v563
    %1823 = vmatpush.bf16.msra.mxu0 %v557
    %1824 = vmatpush.bf16.msra.mxu0 %v551
    %1825 = vmatpush.bf16.msra.mxu0 %v545
    %1826 = vmatpush.bf16.msra.mxu0 %v539
    %1827 = vmatpush.bf16.msra.mxu0 %v533
    %1828 = vmatpush.bf16.msra.mxu0 %v527
    %1829 = vmatmul.bf16.gmra.mxu0 %v1749
    %v1830 = vpop.f32.mrf.mxu0
    %v1831 = vadd.f32 %v1818, %v1830
    %v1832 = vpop.f32.mrf.mxu0
    %1833 = vdwg.mxu0
    %1834 = vmatpush.bf16.msra.mxu0 %v522
    %1835 = vmatpush.bf16.msra.mxu0 %v516
    %1836 = vmatpush.bf16.msra.mxu0 %v510
    %1837 = vmatpush.bf16.msra.mxu0 %v504
    %1838 = vmatpush.bf16.msra.mxu0 %v498
    %1839 = vmatpush.bf16.msra.mxu0 %v492
    %1840 = vmatpush.bf16.msra.mxu0 %v486
    %1841 = vmatpush.bf16.msra.mxu0 %v480
    %1842 = vmatmul.bf16.gmra.mxu0 %v1746
    %v1843 = vpop.f32.mrf.mxu0
    %v1844 = vadd.f32 0.0, %v1843
    %v1845 = vpop.f32.mrf.mxu0
    %1846 = vdwg.mxu0
    %1847 = vmatpush.bf16.msra.mxu0 %v570
    %1848 = vmatpush.bf16.msra.mxu0 %v564
    %1849 = vmatpush.bf16.msra.mxu0 %v558
    %1850 = vmatpush.bf16.msra.mxu0 %v552
    %1851 = vmatpush.bf16.msra.mxu0 %v546
    %1852 = vmatpush.bf16.msra.mxu0 %v540
    %1853 = vmatpush.bf16.msra.mxu0 %v534
    %1854 = vmatpush.bf16.msra.mxu0 %v528
    %1855 = vmatmul.bf16.gmra.mxu0 %v1749
    %v1856 = vpop.f32.mrf.mxu0
    %v1857 = vadd.f32 %v1844, %v1856
    %v1858 = vpop.f32.mrf.mxu0
    %1859 = vdwg.mxu0
    %1860 = vmatpush.bf16.msra.mxu0 %v523
    %1861 = vmatpush.bf16.msra.mxu0 %v517
    %1862 = vmatpush.bf16.msra.mxu0 %v511
    %1863 = vmatpush.bf16.msra.mxu0 %v505
    %1864 = vmatpush.bf16.msra.mxu0 %v499
    %1865 = vmatpush.bf16.msra.mxu0 %v493
    %1866 = vmatpush.bf16.msra.mxu0 %v487
    %1867 = vmatpush.bf16.msra.mxu0 %v481
    %1868 = vmatmul.bf16.gmra.mxu0 %v1746
    %v1869 = vpop.f32.mrf.mxu0
    %v1870 = vadd.f32 0.0, %v1869
    %v1871 = vpop.f32.mrf.mxu0
    %1872 = vdwg.mxu0
    %1873 = vmatpush.bf16.msra.mxu0 %v571
    %1874 = vmatpush.bf16.msra.mxu0 %v565
    %1875 = vmatpush.bf16.msra.mxu0 %v559
    %1876 = vmatpush.bf16.msra.mxu0 %v553
    %1877 = vmatpush.bf16.msra.mxu0 %v547
    %1878 = vmatpush.bf16.msra.mxu0 %v541
    %1879 = vmatpush.bf16.msra.mxu0 %v535
    %1880 = vmatpush.bf16.msra.mxu0 %v529
    %1881 = vmatmul.bf16.gmra.mxu0 %v1749
    %v1882 = vpop.f32.mrf.mxu0
    %v1883 = vadd.f32 %v1870, %v1882
    %v1884 = vpop.f32.mrf.mxu0
    %1885 = vdwg.mxu0
    %1886 = vmatpush.bf16.msra.mxu0 %v524
    %1887 = vmatpush.bf16.msra.mxu0 %v518
    %1888 = vmatpush.bf16.msra.mxu0 %v512
    %1889 = vmatpush.bf16.msra.mxu0 %v506
    %1890 = vmatpush.bf16.msra.mxu0 %v500
    %1891 = vmatpush.bf16.msra.mxu0 %v494
    %1892 = vmatpush.bf16.msra.mxu0 %v488
    %1893 = vmatpush.bf16.msra.mxu0 %v482
    %1894 = vmatmul.bf16.gmra.mxu0 %v1746
    %v1895 = vpop.f32.mrf.mxu0
    %v1896 = vadd.f32 0.0, %v1895
    %v1897 = vpop.f32.mrf.mxu0
    %1898 = vdwg.mxu0
    %1899 = vmatpush.bf16.msra.mxu0 %v572
    %1900 = vmatpush.bf16.msra.mxu0 %v566
    %1901 = vmatpush.bf16.msra.mxu0 %v560
    %1902 = vmatpush.bf16.msra.mxu0 %v554
    %1903 = vmatpush.bf16.msra.mxu0 %v548
    %1904 = vmatpush.bf16.msra.mxu0 %v542
    %1905 = vmatpush.bf16.msra.mxu0 %v536
    %1906 = vmatpush.bf16.msra.mxu0 %v530
    %1907 = vmatmul.bf16.gmra.mxu0 %v1749
    %v1908 = vpop.f32.mrf.mxu0
    %v1909 = vadd.f32 %v1896, %v1908
    %v1910 = vpop.f32.mrf.mxu0
    %1911 = vdwg.mxu0
    %v1912 = vunpack.c.l.bf16 %v1753
    %v1913 = vadd.f32 %v1912, %v1779
    %v1914 = vxor.u32 %v1913, 2147483648
    %v1915 = vmul.f32 %v1914, 1.442695
    %v1916 = vpow.pop %v1915
    %v1917 = vadd.f32 %v1916, 1.0
    %v1918 = vrcp.pop %v1917
    %v1919 = vmul.f32 %v1917, %v1918
    %v1920 = vsub.f32 1.0, %v1919
    %v1921 = vmul.f32 %v1918, %v1920
    %v1922 = vadd.f32 %v1918, %v1921
    %vm1923 = vweird.f32 %v1917
    %vm1924 = vweird.f32 %v1918
    %vm1925 = vmor %vm1923, %vm1924
    %v1926 = vsel %vm1925, %v1918, %v1922
    %v1927 = vand.u32 2147483647, %v1917
    %vm1928 = vcmp.eq.f32.partialorder %v1927, 8.507059e+37
    %v1929 = vand.u32 %v1917, 2147483648
    %v1930 = vor.u32 1.1754944e-38, %v1929
    %v1931 = vsel %vm1928, %v1930, %v1926
    %v1932 = vmul.f32 1.0, %v1931
    %v1934 = vrot.slane %v1912, 2
    %v1936 = vadd.f32 %v1934, %v1805
    %v1937 = vxor.u32 %v1936, 2147483648
    %v1938 = vmul.f32 %v1937, 1.442695
    %v1939 = vpow.pop %v1938
    %v1940 = vadd.f32 %v1939, 1.0
    %v1941 = vrcp.pop %v1940
    %v1942 = vmul.f32 %v1940, %v1941
    %v1943 = vsub.f32 1.0, %v1942
    %v1944 = vmul.f32 %v1941, %v1943
    %v1945 = vadd.f32 %v1941, %v1944
    %vm1946 = vweird.f32 %v1940
    %vm1947 = vweird.f32 %v1941
    %vm1948 = vmor %vm1946, %vm1947
    %v1949 = vsel %vm1948, %v1941, %v1945
    %v1950 = vand.u32 2147483647, %v1940
    %vm1951 = vcmp.eq.f32.partialorder %v1950, 8.507059e+37
    %v1952 = vand.u32 %v1940, 2147483648
    %v1953 = vor.u32 1.1754944e-38, %v1952
    %v1954 = vsel %vm1951, %v1953, %v1949
    %v1955 = vmul.f32 1.0, %v1954
    %v1956 = vadd.f32 %v1831, %v176
    %v1957 = vmul.f32 %v1932, %v1956
    %v1958 = vrot.slane %v1912, 4
    %v1960 = vadd.f32 %v1958, %v1957
    %v1961 = vtanh.pop %v1960
    %v1962 = vsub.f32 %v1692, %v1961
    %v1963 = vmul.f32 %v1955, %v1962
    %v1964 = vadd.f32 %v1961, %v1963
    %v1965 = vunpack.c.l.bf16 %v1755
    %v1966 = vadd.f32 %v1965, %v1857
    %v1967 = vxor.u32 %v1966, 2147483648
    %v1968 = vmul.f32 %v1967, 1.442695
    %v1969 = vpow.pop %v1968
    %v1970 = vadd.f32 %v1969, 1.0
    %v1971 = vrcp.pop %v1970
    %v1972 = vmul.f32 %v1970, %v1971
    %v1973 = vsub.f32 1.0, %v1972
    %v1974 = vmul.f32 %v1971, %v1973
    %v1975 = vadd.f32 %v1971, %v1974
    %vm1976 = vweird.f32 %v1970
    %vm1977 = vweird.f32 %v1971
    %vm1978 = vmor %vm1976, %vm1977
    %v1979 = vsel %vm1978, %v1971, %v1975
    %v1980 = vand.u32 2147483647, %v1970
    %vm1981 = vcmp.eq.f32.partialorder %v1980, 8.507059e+37
    %v1982 = vand.u32 %v1970, 2147483648
    %v1983 = vor.u32 1.1754944e-38, %v1982
    %v1984 = vsel %vm1981, %v1983, %v1979
    %v1985 = vmul.f32 1.0, %v1984
    %v1987 = vrot.slane %v1965, 2
    %v1989 = vadd.f32 %v1987, %v1883
    %v1990 = vxor.u32 %v1989, 2147483648
    %v1991 = vmul.f32 %v1990, 1.442695
    %v1992 = vpow.pop %v1991
    %v1993 = vadd.f32 %v1992, 1.0
    %v1994 = vrcp.pop %v1993
    %v1995 = vmul.f32 %v1993, %v1994
    %v1996 = vsub.f32 1.0, %v1995
    %v1997 = vmul.f32 %v1994, %v1996
    %v1998 = vadd.f32 %v1994, %v1997
    %vm1999 = vweird.f32 %v1993
    %vm2000 = vweird.f32 %v1994
    %vm2001 = vmor %vm1999, %vm2000
    %v2002 = vsel %vm2001, %v1994, %v1998
    %v2003 = vand.u32 2147483647, %v1993
    %vm2004 = vcmp.eq.f32.partialorder %v2003, 8.507059e+37
    %v2005 = vand.u32 %v1993, 2147483648
    %v2006 = vor.u32 1.1754944e-38, %v2005
    %v2007 = vsel %vm2004, %v2006, %v2002
    %v2008 = vmul.f32 1.0, %v2007
    %v2009 = vadd.f32 %v1909, %v180
    %v2010 = vmul.f32 %v1985, %v2009
    %v2011 = vrot.slane %v1965, 4
    %v2013 = vadd.f32 %v2011, %v2010
    %v2014 = vtanh.pop %v2013
    %v2015 = vsub.f32 %v1745, %v2014
    %v2016 = vmul.f32 %v2008, %v2015
    %v2017 = vadd.f32 %v2014, %v2016
    %v2018 = vpack.c.bf16 %v1964, %v1964
    %s2019 = scalar_lea.vmem %s5, 4
    %2020 = vst [vmem:[%s2019] sm:$0x1] %v2018
    %v2021 = vpack.c.bf16 %v2017, %v2017
    %s2022 = scalar_lea.vmem %s69, 3
    %2023 = vst [vmem:[%s2022] sm:$0x1] %v2021
    %s2024 = scalar_lea.vmem %s0, 15
    %v2025 = vld [vmem:[%s2024] sm:$0x7]
    %s2026 = scalar_lea.vmem %s62, 6
    %v2027 = vld [vmem:[%s2026] sm:$0x7]
    %2028 = vmatpush.bf16.msra.mxu0 %v519
    %2029 = vmatpush.bf16.msra.mxu0 %v513
    %2030 = vmatpush.bf16.msra.mxu0 %v507
    %2031 = vmatpush.bf16.msra.mxu0 %v501
    %2032 = vmatpush.bf16.msra.mxu0 %v495
    %2033 = vmatpush.bf16.msra.mxu0 %v489
    %2034 = vmatpush.bf16.msra.mxu0 %v483
    %2035 = vmatpush.bf16.msra.mxu0 %v477
    %2036 = vmatmul.bf16.gmra.mxu0 %v2018
    %v2037 = vpop.f32.mrf.mxu0
    %v2038 = vadd.f32 0.0, %v2037
    %v2039 = vpop.f32.mrf.mxu0
    %2040 = vdwg.mxu0
    %2041 = vmatpush.bf16.msra.mxu0 %v567
    %2042 = vmatpush.bf16.msra.mxu0 %v561
    %2043 = vmatpush.bf16.msra.mxu0 %v555
    %2044 = vmatpush.bf16.msra.mxu0 %v549
    %2045 = vmatpush.bf16.msra.mxu0 %v543
    %2046 = vmatpush.bf16.msra.mxu0 %v537
    %2047 = vmatpush.bf16.msra.mxu0 %v531
    %2048 = vmatpush.bf16.msra.mxu0 %v525
    %2049 = vmatmul.bf16.gmra.mxu0 %v2021
    %v2050 = vpop.f32.mrf.mxu0
    %v2051 = vadd.f32 %v2038, %v2050
    %v2052 = vpop.f32.mrf.mxu0
    %2053 = vdwg.mxu0
    %2054 = vmatpush.bf16.msra.mxu0 %v520
    %2055 = vmatpush.bf16.msra.mxu0 %v514
    %2056 = vmatpush.bf16.msra.mxu0 %v508
    %2057 = vmatpush.bf16.msra.mxu0 %v502
    %2058 = vmatpush.bf16.msra.mxu0 %v496
    %2059 = vmatpush.bf16.msra.mxu0 %v490
    %2060 = vmatpush.bf16.msra.mxu0 %v484
    %2061 = vmatpush.bf16.msra.mxu0 %v478
    %2062 = vmatmul.bf16.gmra.mxu0 %v2018
    %v2063 = vpop.f32.mrf.mxu0
    %v2064 = vadd.f32 0.0, %v2063
    %v2065 = vpop.f32.mrf.mxu0
    %2066 = vdwg.mxu0
    %2067 = vmatpush.bf16.msra.mxu0 %v568
    %2068 = vmatpush.bf16.msra.mxu0 %v562
    %2069 = vmatpush.bf16.msra.mxu0 %v556
    %2070 = vmatpush.bf16.msra.mxu0 %v550
    %2071 = vmatpush.bf16.msra.mxu0 %v544
    %2072 = vmatpush.bf16.msra.mxu0 %v538
    %2073 = vmatpush.bf16.msra.mxu0 %v532
    %2074 = vmatpush.bf16.msra.mxu0 %v526
    %2075 = vmatmul.bf16.gmra.mxu0 %v2021
    %v2076 = vpop.f32.mrf.mxu0
    %v2077 = vadd.f32 %v2064, %v2076
    %v2078 = vpop.f32.mrf.mxu0
    %2079 = vdwg.mxu0
    %2080 = vmatpush.bf16.msra.mxu0 %v521
    %2081 = vmatpush.bf16.msra.mxu0 %v515
    %2082 = vmatpush.bf16.msra.mxu0 %v509
    %2083 = vmatpush.bf16.msra.mxu0 %v503
    %2084 = vmatpush.bf16.msra.mxu0 %v497
    %2085 = vmatpush.bf16.msra.mxu0 %v491
    %2086 = vmatpush.bf16.msra.mxu0 %v485
    %2087 = vmatpush.bf16.msra.mxu0 %v479
    %2088 = vmatmul.bf16.gmra.mxu0 %v2018
    %v2089 = vpop.f32.mrf.mxu0
    %v2090 = vadd.f32 0.0, %v2089
    %v2091 = vpop.f32.mrf.mxu0
    %2092 = vdwg.mxu0
    %2093 = vmatpush.bf16.msra.mxu0 %v569
    %2094 = vmatpush.bf16.msra.mxu0 %v563
    %2095 = vmatpush.bf16.msra.mxu0 %v557
    %2096 = vmatpush.bf16.msra.mxu0 %v551
    %2097 = vmatpush.bf16.msra.mxu0 %v545
    %2098 = vmatpush.bf16.msra.mxu0 %v539
    %2099 = vmatpush.bf16.msra.mxu0 %v533
    %2100 = vmatpush.bf16.msra.mxu0 %v527
    %2101 = vmatmul.bf16.gmra.mxu0 %v2021
    %v2102 = vpop.f32.mrf.mxu0
    %v2103 = vadd.f32 %v2090, %v2102
    %v2104 = vpop.f32.mrf.mxu0
    %2105 = vdwg.mxu0
    %2106 = vmatpush.bf16.msra.mxu0 %v522
    %2107 = vmatpush.bf16.msra.mxu0 %v516
    %2108 = vmatpush.bf16.msra.mxu0 %v510
    %2109 = vmatpush.bf16.msra.mxu0 %v504
    %2110 = vmatpush.bf16.msra.mxu0 %v498
    %2111 = vmatpush.bf16.msra.mxu0 %v492
    %2112 = vmatpush.bf16.msra.mxu0 %v486
    %2113 = vmatpush.bf16.msra.mxu0 %v480
    %2114 = vmatmul.bf16.gmra.mxu0 %v2018
    %v2115 = vpop.f32.mrf.mxu0
    %v2116 = vadd.f32 0.0, %v2115
    %v2117 = vpop.f32.mrf.mxu0
    %2118 = vdwg.mxu0
    %2119 = vmatpush.bf16.msra.mxu0 %v570
    %2120 = vmatpush.bf16.msra.mxu0 %v564
    %2121 = vmatpush.bf16.msra.mxu0 %v558
    %2122 = vmatpush.bf16.msra.mxu0 %v552
    %2123 = vmatpush.bf16.msra.mxu0 %v546
    %2124 = vmatpush.bf16.msra.mxu0 %v540
    %2125 = vmatpush.bf16.msra.mxu0 %v534
    %2126 = vmatpush.bf16.msra.mxu0 %v528
    %2127 = vmatmul.bf16.gmra.mxu0 %v2021
    %v2128 = vpop.f32.mrf.mxu0
    %v2129 = vadd.f32 %v2116, %v2128
    %v2130 = vpop.f32.mrf.mxu0
    %2131 = vdwg.mxu0
    %2132 = vmatpush.bf16.msra.mxu0 %v523
    %2133 = vmatpush.bf16.msra.mxu0 %v517
    %2134 = vmatpush.bf16.msra.mxu0 %v511
    %2135 = vmatpush.bf16.msra.mxu0 %v505
    %2136 = vmatpush.bf16.msra.mxu0 %v499
    %2137 = vmatpush.bf16.msra.mxu0 %v493
    %2138 = vmatpush.bf16.msra.mxu0 %v487
    %2139 = vmatpush.bf16.msra.mxu0 %v481
    %2140 = vmatmul.bf16.gmra.mxu0 %v2018
    %v2141 = vpop.f32.mrf.mxu0
    %v2142 = vadd.f32 0.0, %v2141
    %v2143 = vpop.f32.mrf.mxu0
    %2144 = vdwg.mxu0
    %2145 = vmatpush.bf16.msra.mxu0 %v571
    %2146 = vmatpush.bf16.msra.mxu0 %v565
    %2147 = vmatpush.bf16.msra.mxu0 %v559
    %2148 = vmatpush.bf16.msra.mxu0 %v553
    %2149 = vmatpush.bf16.msra.mxu0 %v547
    %2150 = vmatpush.bf16.msra.mxu0 %v541
    %2151 = vmatpush.bf16.msra.mxu0 %v535
    %2152 = vmatpush.bf16.msra.mxu0 %v529
    %2153 = vmatmul.bf16.gmra.mxu0 %v2021
    %v2154 = vpop.f32.mrf.mxu0
    %v2155 = vadd.f32 %v2142, %v2154
    %v2156 = vpop.f32.mrf.mxu0
    %2157 = vdwg.mxu0
    %2158 = vmatpush.bf16.msra.mxu0 %v524
    %2159 = vmatpush.bf16.msra.mxu0 %v518
    %2160 = vmatpush.bf16.msra.mxu0 %v512
    %2161 = vmatpush.bf16.msra.mxu0 %v506
    %2162 = vmatpush.bf16.msra.mxu0 %v500
    %2163 = vmatpush.bf16.msra.mxu0 %v494
    %2164 = vmatpush.bf16.msra.mxu0 %v488
    %2165 = vmatpush.bf16.msra.mxu0 %v482
    %2166 = vmatmul.bf16.gmra.mxu0 %v2018
    %v2167 = vpop.f32.mrf.mxu0
    %v2168 = vadd.f32 0.0, %v2167
    %v2169 = vpop.f32.mrf.mxu0
    %2170 = vdwg.mxu0
    %2171 = vmatpush.bf16.msra.mxu0 %v572
    %2172 = vmatpush.bf16.msra.mxu0 %v566
    %2173 = vmatpush.bf16.msra.mxu0 %v560
    %2174 = vmatpush.bf16.msra.mxu0 %v554
    %2175 = vmatpush.bf16.msra.mxu0 %v548
    %2176 = vmatpush.bf16.msra.mxu0 %v542
    %2177 = vmatpush.bf16.msra.mxu0 %v536
    %2178 = vmatpush.bf16.msra.mxu0 %v530
    %2179 = vmatmul.bf16.gmra.mxu0 %v2021
    %v2180 = vpop.f32.mrf.mxu0
    %v2181 = vadd.f32 %v2168, %v2180
    %v2182 = vpop.f32.mrf.mxu0
    %2183 = vdwg.mxu0
    %v2184 = vunpack.c.l.bf16 %v2025
    %v2185 = vadd.f32 %v2184, %v2051
    %v2186 = vxor.u32 %v2185, 2147483648
    %v2187 = vmul.f32 %v2186, 1.442695
    %v2188 = vpow.pop %v2187
    %v2189 = vadd.f32 %v2188, 1.0
    %v2190 = vrcp.pop %v2189
    %v2191 = vmul.f32 %v2189, %v2190
    %v2192 = vsub.f32 1.0, %v2191
    %v2193 = vmul.f32 %v2190, %v2192
    %v2194 = vadd.f32 %v2190, %v2193
    %vm2195 = vweird.f32 %v2189
    %vm2196 = vweird.f32 %v2190
    %vm2197 = vmor %vm2195, %vm2196
    %v2198 = vsel %vm2197, %v2190, %v2194
    %v2199 = vand.u32 2147483647, %v2189
    %vm2200 = vcmp.eq.f32.partialorder %v2199, 8.507059e+37
    %v2201 = vand.u32 %v2189, 2147483648
    %v2202 = vor.u32 1.1754944e-38, %v2201
    %v2203 = vsel %vm2200, %v2202, %v2198
    %v2204 = vmul.f32 1.0, %v2203
    %v2206 = vrot.slane %v2184, 2
    %v2208 = vadd.f32 %v2206, %v2077
    %v2209 = vxor.u32 %v2208, 2147483648
    %v2210 = vmul.f32 %v2209, 1.442695
    %v2211 = vpow.pop %v2210
    %v2212 = vadd.f32 %v2211, 1.0
    %v2213 = vrcp.pop %v2212
    %v2214 = vmul.f32 %v2212, %v2213
    %v2215 = vsub.f32 1.0, %v2214
    %v2216 = vmul.f32 %v2213, %v2215
    %v2217 = vadd.f32 %v2213, %v2216
    %vm2218 = vweird.f32 %v2212
    %vm2219 = vweird.f32 %v2213
    %vm2220 = vmor %vm2218, %vm2219
    %v2221 = vsel %vm2220, %v2213, %v2217
    %v2222 = vand.u32 2147483647, %v2212
    %vm2223 = vcmp.eq.f32.partialorder %v2222, 8.507059e+37
    %v2224 = vand.u32 %v2212, 2147483648
    %v2225 = vor.u32 1.1754944e-38, %v2224
    %v2226 = vsel %vm2223, %v2225, %v2221
    %v2227 = vmul.f32 1.0, %v2226
    %v2228 = vadd.f32 %v2103, %v176
    %v2229 = vmul.f32 %v2204, %v2228
    %v2230 = vrot.slane %v2184, 4
    %v2232 = vadd.f32 %v2230, %v2229
    %v2233 = vtanh.pop %v2232
    %v2234 = vsub.f32 %v1964, %v2233
    %v2235 = vmul.f32 %v2227, %v2234
    %v2236 = vadd.f32 %v2233, %v2235
    %v2237 = vunpack.c.l.bf16 %v2027
    %v2238 = vadd.f32 %v2237, %v2129
    %v2239 = vxor.u32 %v2238, 2147483648
    %v2240 = vmul.f32 %v2239, 1.442695
    %v2241 = vpow.pop %v2240
    %v2242 = vadd.f32 %v2241, 1.0
    %v2243 = vrcp.pop %v2242
    %v2244 = vmul.f32 %v2242, %v2243
    %v2245 = vsub.f32 1.0, %v2244
    %v2246 = vmul.f32 %v2243, %v2245
    %v2247 = vadd.f32 %v2243, %v2246
    %vm2248 = vweird.f32 %v2242
    %vm2249 = vweird.f32 %v2243
    %vm2250 = vmor %vm2248, %vm2249
    %v2251 = vsel %vm2250, %v2243, %v2247
    %v2252 = vand.u32 2147483647, %v2242
    %vm2253 = vcmp.eq.f32.partialorder %v2252, 8.507059e+37
    %v2254 = vand.u32 %v2242, 2147483648
    %v2255 = vor.u32 1.1754944e-38, %v2254
    %v2256 = vsel %vm2253, %v2255, %v2251
    %v2257 = vmul.f32 1.0, %v2256
    %v2259 = vrot.slane %v2237, 2
    %v2261 = vadd.f32 %v2259, %v2155
    %v2262 = vxor.u32 %v2261, 2147483648
    %v2263 = vmul.f32 %v2262, 1.442695
    %v2264 = vpow.pop %v2263
    %v2265 = vadd.f32 %v2264, 1.0
    %v2266 = vrcp.pop %v2265
    %v2267 = vmul.f32 %v2265, %v2266
    %v2268 = vsub.f32 1.0, %v2267
    %v2269 = vmul.f32 %v2266, %v2268
    %v2270 = vadd.f32 %v2266, %v2269
    %vm2271 = vweird.f32 %v2265
    %vm2272 = vweird.f32 %v2266
    %vm2273 = vmor %vm2271, %vm2272
    %v2274 = vsel %vm2273, %v2266, %v2270
    %v2275 = vand.u32 2147483647, %v2265
    %vm2276 = vcmp.eq.f32.partialorder %v2275, 8.507059e+37
    %v2277 = vand.u32 %v2265, 2147483648
    %v2278 = vor.u32 1.1754944e-38, %v2277
    %v2279 = vsel %vm2276, %v2278, %v2274
    %v2280 = vmul.f32 1.0, %v2279
    %v2281 = vadd.f32 %v2181, %v180
    %v2282 = vmul.f32 %v2257, %v2281
    %v2283 = vrot.slane %v2237, 4
    %v2285 = vadd.f32 %v2283, %v2282
    %v2286 = vtanh.pop %v2285
    %v2287 = vsub.f32 %v2017, %v2286
    %v2288 = vmul.f32 %v2280, %v2287
    %v2289 = vadd.f32 %v2286, %v2288
    %v2290 = vpack.c.bf16 %v2236, %v2236
    %s2291 = scalar_lea.vmem %s5, 5
    %2292 = vst [vmem:[%s2291] sm:$0x1] %v2290
    %v2293 = vpack.c.bf16 %v2289, %v2289
    %s2294 = scalar_lea.vmem %s69, 2
    %2295 = vst [vmem:[%s2294] sm:$0x1] %v2293
    %s2296 = scalar_lea.vmem %s0, 18
    %v2297 = vld [vmem:[%s2296] sm:$0x7]
    %s2298 = scalar_lea.vmem %s62, 3
    %v2299 = vld [vmem:[%s2298] sm:$0x7]
    %2300 = vmatpush.bf16.msra.mxu0 %v519
    %2301 = vmatpush.bf16.msra.mxu0 %v513
    %2302 = vmatpush.bf16.msra.mxu0 %v507
    %2303 = vmatpush.bf16.msra.mxu0 %v501
    %2304 = vmatpush.bf16.msra.mxu0 %v495
    %2305 = vmatpush.bf16.msra.mxu0 %v489
    %2306 = vmatpush.bf16.msra.mxu0 %v483
    %2307 = vmatpush.bf16.msra.mxu0 %v477
    %2308 = vmatmul.bf16.gmra.mxu0 %v2290
    %v2309 = vpop.f32.mrf.mxu0
    %v2310 = vadd.f32 0.0, %v2309
    %v2311 = vpop.f32.mrf.mxu0
    %2312 = vdwg.mxu0
    %2313 = vmatpush.bf16.msra.mxu0 %v567
    %2314 = vmatpush.bf16.msra.mxu0 %v561
    %2315 = vmatpush.bf16.msra.mxu0 %v555
    %2316 = vmatpush.bf16.msra.mxu0 %v549
    %2317 = vmatpush.bf16.msra.mxu0 %v543
    %2318 = vmatpush.bf16.msra.mxu0 %v537
    %2319 = vmatpush.bf16.msra.mxu0 %v531
    %2320 = vmatpush.bf16.msra.mxu0 %v525
    %2321 = vmatmul.bf16.gmra.mxu0 %v2293
    %v2322 = vpop.f32.mrf.mxu0
    %v2323 = vadd.f32 %v2310, %v2322
    %v2324 = vpop.f32.mrf.mxu0
    %2325 = vdwg.mxu0
    %2326 = vmatpush.bf16.msra.mxu0 %v520
    %2327 = vmatpush.bf16.msra.mxu0 %v514
    %2328 = vmatpush.bf16.msra.mxu0 %v508
    %2329 = vmatpush.bf16.msra.mxu0 %v502
    %2330 = vmatpush.bf16.msra.mxu0 %v496
    %2331 = vmatpush.bf16.msra.mxu0 %v490
    %2332 = vmatpush.bf16.msra.mxu0 %v484
    %2333 = vmatpush.bf16.msra.mxu0 %v478
    %2334 = vmatmul.bf16.gmra.mxu0 %v2290
    %v2335 = vpop.f32.mrf.mxu0
    %v2336 = vadd.f32 0.0, %v2335
    %v2337 = vpop.f32.mrf.mxu0
    %2338 = vdwg.mxu0
    %2339 = vmatpush.bf16.msra.mxu0 %v568
    %2340 = vmatpush.bf16.msra.mxu0 %v562
    %2341 = vmatpush.bf16.msra.mxu0 %v556
    %2342 = vmatpush.bf16.msra.mxu0 %v550
    %2343 = vmatpush.bf16.msra.mxu0 %v544
    %2344 = vmatpush.bf16.msra.mxu0 %v538
    %2345 = vmatpush.bf16.msra.mxu0 %v532
    %2346 = vmatpush.bf16.msra.mxu0 %v526
    %2347 = vmatmul.bf16.gmra.mxu0 %v2293
    %v2348 = vpop.f32.mrf.mxu0
    %v2349 = vadd.f32 %v2336, %v2348
    %v2350 = vpop.f32.mrf.mxu0
    %2351 = vdwg.mxu0
    %2352 = vmatpush.bf16.msra.mxu0 %v521
    %2353 = vmatpush.bf16.msra.mxu0 %v515
    %2354 = vmatpush.bf16.msra.mxu0 %v509
    %2355 = vmatpush.bf16.msra.mxu0 %v503
    %2356 = vmatpush.bf16.msra.mxu0 %v497
    %2357 = vmatpush.bf16.msra.mxu0 %v491
    %2358 = vmatpush.bf16.msra.mxu0 %v485
    %2359 = vmatpush.bf16.msra.mxu0 %v479
    %2360 = vmatmul.bf16.gmra.mxu0 %v2290
    %v2361 = vpop.f32.mrf.mxu0
    %v2362 = vadd.f32 0.0, %v2361
    %v2363 = vpop.f32.mrf.mxu0
    %2364 = vdwg.mxu0
    %2365 = vmatpush.bf16.msra.mxu0 %v569
    %2366 = vmatpush.bf16.msra.mxu0 %v563
    %2367 = vmatpush.bf16.msra.mxu0 %v557
    %2368 = vmatpush.bf16.msra.mxu0 %v551
    %2369 = vmatpush.bf16.msra.mxu0 %v545
    %2370 = vmatpush.bf16.msra.mxu0 %v539
    %2371 = vmatpush.bf16.msra.mxu0 %v533
    %2372 = vmatpush.bf16.msra.mxu0 %v527
    %2373 = vmatmul.bf16.gmra.mxu0 %v2293
    %v2374 = vpop.f32.mrf.mxu0
    %v2375 = vadd.f32 %v2362, %v2374
    %v2376 = vpop.f32.mrf.mxu0
    %2377 = vdwg.mxu0
    %2378 = vmatpush.bf16.msra.mxu0 %v522
    %2379 = vmatpush.bf16.msra.mxu0 %v516
    %2380 = vmatpush.bf16.msra.mxu0 %v510
    %2381 = vmatpush.bf16.msra.mxu0 %v504
    %2382 = vmatpush.bf16.msra.mxu0 %v498
    %2383 = vmatpush.bf16.msra.mxu0 %v492
    %2384 = vmatpush.bf16.msra.mxu0 %v486
    %2385 = vmatpush.bf16.msra.mxu0 %v480
    %2386 = vmatmul.bf16.gmra.mxu0 %v2290
    %v2387 = vpop.f32.mrf.mxu0
    %v2388 = vadd.f32 0.0, %v2387
    %v2389 = vpop.f32.mrf.mxu0
    %2390 = vdwg.mxu0
    %2391 = vmatpush.bf16.msra.mxu0 %v570
    %2392 = vmatpush.bf16.msra.mxu0 %v564
    %2393 = vmatpush.bf16.msra.mxu0 %v558
    %2394 = vmatpush.bf16.msra.mxu0 %v552
    %2395 = vmatpush.bf16.msra.mxu0 %v546
    %2396 = vmatpush.bf16.msra.mxu0 %v540
    %2397 = vmatpush.bf16.msra.mxu0 %v534
    %2398 = vmatpush.bf16.msra.mxu0 %v528
    %2399 = vmatmul.bf16.gmra.mxu0 %v2293
    %v2400 = vpop.f32.mrf.mxu0
    %v2401 = vadd.f32 %v2388, %v2400
    %v2402 = vpop.f32.mrf.mxu0
    %2403 = vdwg.mxu0
    %2404 = vmatpush.bf16.msra.mxu0 %v523
    %2405 = vmatpush.bf16.msra.mxu0 %v517
    %2406 = vmatpush.bf16.msra.mxu0 %v511
    %2407 = vmatpush.bf16.msra.mxu0 %v505
    %2408 = vmatpush.bf16.msra.mxu0 %v499
    %2409 = vmatpush.bf16.msra.mxu0 %v493
    %2410 = vmatpush.bf16.msra.mxu0 %v487
    %2411 = vmatpush.bf16.msra.mxu0 %v481
    %2412 = vmatmul.bf16.gmra.mxu0 %v2290
    %v2413 = vpop.f32.mrf.mxu0
    %v2414 = vadd.f32 0.0, %v2413
    %v2415 = vpop.f32.mrf.mxu0
    %2416 = vdwg.mxu0
    %2417 = vmatpush.bf16.msra.mxu0 %v571
    %2418 = vmatpush.bf16.msra.mxu0 %v565
    %2419 = vmatpush.bf16.msra.mxu0 %v559
    %2420 = vmatpush.bf16.msra.mxu0 %v553
    %2421 = vmatpush.bf16.msra.mxu0 %v547
    %2422 = vmatpush.bf16.msra.mxu0 %v541
    %2423 = vmatpush.bf16.msra.mxu0 %v535
    %2424 = vmatpush.bf16.msra.mxu0 %v529
    %2425 = vmatmul.bf16.gmra.mxu0 %v2293
    %v2426 = vpop.f32.mrf.mxu0
    %v2427 = vadd.f32 %v2414, %v2426
    %v2428 = vpop.f32.mrf.mxu0
    %2429 = vdwg.mxu0
    %2430 = vmatpush.bf16.msra.mxu0 %v524
    %2431 = vmatpush.bf16.msra.mxu0 %v518
    %2432 = vmatpush.bf16.msra.mxu0 %v512
    %2433 = vmatpush.bf16.msra.mxu0 %v506
    %2434 = vmatpush.bf16.msra.mxu0 %v500
    %2435 = vmatpush.bf16.msra.mxu0 %v494
    %2436 = vmatpush.bf16.msra.mxu0 %v488
    %2437 = vmatpush.bf16.msra.mxu0 %v482
    %2438 = vmatmul.bf16.gmra.mxu0 %v2290
    %v2439 = vpop.f32.mrf.mxu0
    %v2440 = vadd.f32 0.0, %v2439
    %v2441 = vpop.f32.mrf.mxu0
    %2442 = vdwg.mxu0
    %2443 = vmatpush.bf16.msra.mxu0 %v572
    %2444 = vmatpush.bf16.msra.mxu0 %v566
    %2445 = vmatpush.bf16.msra.mxu0 %v560
    %2446 = vmatpush.bf16.msra.mxu0 %v554
    %2447 = vmatpush.bf16.msra.mxu0 %v548
    %2448 = vmatpush.bf16.msra.mxu0 %v542
    %2449 = vmatpush.bf16.msra.mxu0 %v536
    %2450 = vmatpush.bf16.msra.mxu0 %v530
    %2451 = vmatmul.bf16.gmra.mxu0 %v2293
    %v2452 = vpop.f32.mrf.mxu0
    %v2453 = vadd.f32 %v2440, %v2452
    %v2454 = vpop.f32.mrf.mxu0
    %2455 = vdwg.mxu0
    %v2456 = vunpack.c.l.bf16 %v2297
    %v2457 = vadd.f32 %v2456, %v2323
    %v2458 = vxor.u32 %v2457, 2147483648
    %v2459 = vmul.f32 %v2458, 1.442695
    %v2460 = vpow.pop %v2459
    %v2461 = vadd.f32 %v2460, 1.0
    %v2462 = vrcp.pop %v2461
    %v2463 = vmul.f32 %v2461, %v2462
    %v2464 = vsub.f32 1.0, %v2463
    %v2465 = vmul.f32 %v2462, %v2464
    %v2466 = vadd.f32 %v2462, %v2465
    %vm2467 = vweird.f32 %v2461
    %vm2468 = vweird.f32 %v2462
    %vm2469 = vmor %vm2467, %vm2468
    %v2470 = vsel %vm2469, %v2462, %v2466
    %v2471 = vand.u32 2147483647, %v2461
    %vm2472 = vcmp.eq.f32.partialorder %v2471, 8.507059e+37
    %v2473 = vand.u32 %v2461, 2147483648
    %v2474 = vor.u32 1.1754944e-38, %v2473
    %v2475 = vsel %vm2472, %v2474, %v2470
    %v2476 = vmul.f32 1.0, %v2475
    %v2478 = vrot.slane %v2456, 2
    %v2480 = vadd.f32 %v2478, %v2349
    %v2481 = vxor.u32 %v2480, 2147483648
    %v2482 = vmul.f32 %v2481, 1.442695
    %v2483 = vpow.pop %v2482
    %v2484 = vadd.f32 %v2483, 1.0
    %v2485 = vrcp.pop %v2484
    %v2486 = vmul.f32 %v2484, %v2485
    %v2487 = vsub.f32 1.0, %v2486
    %v2488 = vmul.f32 %v2485, %v2487
    %v2489 = vadd.f32 %v2485, %v2488
    %vm2490 = vweird.f32 %v2484
    %vm2491 = vweird.f32 %v2485
    %vm2492 = vmor %vm2490, %vm2491
    %v2493 = vsel %vm2492, %v2485, %v2489
    %v2494 = vand.u32 2147483647, %v2484
    %vm2495 = vcmp.eq.f32.partialorder %v2494, 8.507059e+37
    %v2496 = vand.u32 %v2484, 2147483648
    %v2497 = vor.u32 1.1754944e-38, %v2496
    %v2498 = vsel %vm2495, %v2497, %v2493
    %v2499 = vmul.f32 1.0, %v2498
    %v2500 = vadd.f32 %v2375, %v176
    %v2501 = vmul.f32 %v2476, %v2500
    %v2502 = vrot.slane %v2456, 4
    %v2504 = vadd.f32 %v2502, %v2501
    %v2505 = vtanh.pop %v2504
    %v2506 = vsub.f32 %v2236, %v2505
    %v2507 = vmul.f32 %v2499, %v2506
    %v2508 = vadd.f32 %v2505, %v2507
    %v2509 = vunpack.c.l.bf16 %v2299
    %v2510 = vadd.f32 %v2509, %v2401
    %v2511 = vxor.u32 %v2510, 2147483648
    %v2512 = vmul.f32 %v2511, 1.442695
    %v2513 = vpow.pop %v2512
    %v2514 = vadd.f32 %v2513, 1.0
    %v2515 = vrcp.pop %v2514
    %v2516 = vmul.f32 %v2514, %v2515
    %v2517 = vsub.f32 1.0, %v2516
    %v2518 = vmul.f32 %v2515, %v2517
    %v2519 = vadd.f32 %v2515, %v2518
    %vm2520 = vweird.f32 %v2514
    %vm2521 = vweird.f32 %v2515
    %vm2522 = vmor %vm2520, %vm2521
    %v2523 = vsel %vm2522, %v2515, %v2519
    %v2524 = vand.u32 2147483647, %v2514
    %vm2525 = vcmp.eq.f32.partialorder %v2524, 8.507059e+37
    %v2526 = vand.u32 %v2514, 2147483648
    %v2527 = vor.u32 1.1754944e-38, %v2526
    %v2528 = vsel %vm2525, %v2527, %v2523
    %v2529 = vmul.f32 1.0, %v2528
    %v2531 = vrot.slane %v2509, 2
    %v2533 = vadd.f32 %v2531, %v2427
    %v2534 = vxor.u32 %v2533, 2147483648
    %v2535 = vmul.f32 %v2534, 1.442695
    %v2536 = vpow.pop %v2535
    %v2537 = vadd.f32 %v2536, 1.0
    %v2538 = vrcp.pop %v2537
    %v2539 = vmul.f32 %v2537, %v2538
    %v2540 = vsub.f32 1.0, %v2539
    %v2541 = vmul.f32 %v2538, %v2540
    %v2542 = vadd.f32 %v2538, %v2541
    %vm2543 = vweird.f32 %v2537
    %vm2544 = vweird.f32 %v2538
    %vm2545 = vmor %vm2543, %vm2544
    %v2546 = vsel %vm2545, %v2538, %v2542
    %v2547 = vand.u32 2147483647, %v2537
    %vm2548 = vcmp.eq.f32.partialorder %v2547, 8.507059e+37
    %v2549 = vand.u32 %v2537, 2147483648
    %v2550 = vor.u32 1.1754944e-38, %v2549
    %v2551 = vsel %vm2548, %v2550, %v2546
    %v2552 = vmul.f32 1.0, %v2551
    %v2553 = vadd.f32 %v2453, %v180
    %v2554 = vmul.f32 %v2529, %v2553
    %v2555 = vrot.slane %v2509, 4
    %v2557 = vadd.f32 %v2555, %v2554
    %v2558 = vtanh.pop %v2557
    %v2559 = vsub.f32 %v2289, %v2558
    %v2560 = vmul.f32 %v2552, %v2559
    %v2561 = vadd.f32 %v2558, %v2560
    %v2562 = vpack.c.bf16 %v2508, %v2508
    %s2563 = scalar_lea.vmem %s5, 6
    %2564 = vst [vmem:[%s2563] sm:$0x1] %v2562
    %v2565 = vpack.c.bf16 %v2561, %v2561
    %s2566 = scalar_lea.vmem %s69, 1
    %2567 = vst [vmem:[%s2566] sm:$0x1] %v2565
    %s2568 = scalar_lea.vmem %s0, 21
    %v2569 = vld [vmem:[%s2568] sm:$0x7]
    %v2570 = vld [vmem:[%s62] sm:$0x7]
    %2571 = vmatpush.bf16.msra.mxu0 %v519
    %2572 = vmatpush.bf16.msra.mxu0 %v513
    %2573 = vmatpush.bf16.msra.mxu0 %v507
    %2574 = vmatpush.bf16.msra.mxu0 %v501
    %2575 = vmatpush.bf16.msra.mxu0 %v495
    %2576 = vmatpush.bf16.msra.mxu0 %v489
    %2577 = vmatpush.bf16.msra.mxu0 %v483
    %2578 = vmatpush.bf16.msra.mxu0 %v477
    %2579 = vmatmul.bf16.gmra.mxu0 %v2562
    %v2580 = vpop.f32.mrf.mxu0
    %v2581 = vadd.f32 0.0, %v2580
    %v2582 = vpop.f32.mrf.mxu0
    %2583 = vdwg.mxu0
    %2584 = vmatpush.bf16.msra.mxu0 %v567
    %2585 = vmatpush.bf16.msra.mxu0 %v561
    %2586 = vmatpush.bf16.msra.mxu0 %v555
    %2587 = vmatpush.bf16.msra.mxu0 %v549
    %2588 = vmatpush.bf16.msra.mxu0 %v543
    %2589 = vmatpush.bf16.msra.mxu0 %v537
    %2590 = vmatpush.bf16.msra.mxu0 %v531
    %2591 = vmatpush.bf16.msra.mxu0 %v525
    %2592 = vmatmul.bf16.gmra.mxu0 %v2565
    %v2593 = vpop.f32.mrf.mxu0
    %v2594 = vadd.f32 %v2581, %v2593
    %v2595 = vpop.f32.mrf.mxu0
    %2596 = vdwg.mxu0
    %2597 = vmatpush.bf16.msra.mxu0 %v520
    %2598 = vmatpush.bf16.msra.mxu0 %v514
    %2599 = vmatpush.bf16.msra.mxu0 %v508
    %2600 = vmatpush.bf16.msra.mxu0 %v502
    %2601 = vmatpush.bf16.msra.mxu0 %v496
    %2602 = vmatpush.bf16.msra.mxu0 %v490
    %2603 = vmatpush.bf16.msra.mxu0 %v484
    %2604 = vmatpush.bf16.msra.mxu0 %v478
    %2605 = vmatmul.bf16.gmra.mxu0 %v2562
    %v2606 = vpop.f32.mrf.mxu0
    %v2607 = vadd.f32 0.0, %v2606
    %v2608 = vpop.f32.mrf.mxu0
    %2609 = vdwg.mxu0
    %2610 = vmatpush.bf16.msra.mxu0 %v568
    %2611 = vmatpush.bf16.msra.mxu0 %v562
    %2612 = vmatpush.bf16.msra.mxu0 %v556
    %2613 = vmatpush.bf16.msra.mxu0 %v550
    %2614 = vmatpush.bf16.msra.mxu0 %v544
    %2615 = vmatpush.bf16.msra.mxu0 %v538
    %2616 = vmatpush.bf16.msra.mxu0 %v532
    %2617 = vmatpush.bf16.msra.mxu0 %v526
    %2618 = vmatmul.bf16.gmra.mxu0 %v2565
    %v2619 = vpop.f32.mrf.mxu0
    %v2620 = vadd.f32 %v2607, %v2619
    %v2621 = vpop.f32.mrf.mxu0
    %2622 = vdwg.mxu0
    %2623 = vmatpush.bf16.msra.mxu0 %v521
    %2624 = vmatpush.bf16.msra.mxu0 %v515
    %2625 = vmatpush.bf16.msra.mxu0 %v509
    %2626 = vmatpush.bf16.msra.mxu0 %v503
    %2627 = vmatpush.bf16.msra.mxu0 %v497
    %2628 = vmatpush.bf16.msra.mxu0 %v491
    %2629 = vmatpush.bf16.msra.mxu0 %v485
    %2630 = vmatpush.bf16.msra.mxu0 %v479
    %2631 = vmatmul.bf16.gmra.mxu0 %v2562
    %v2632 = vpop.f32.mrf.mxu0
    %v2633 = vadd.f32 0.0, %v2632
    %v2634 = vpop.f32.mrf.mxu0
    %2635 = vdwg.mxu0
    %2636 = vmatpush.bf16.msra.mxu0 %v569
    %2637 = vmatpush.bf16.msra.mxu0 %v563
    %2638 = vmatpush.bf16.msra.mxu0 %v557
    %2639 = vmatpush.bf16.msra.mxu0 %v551
    %2640 = vmatpush.bf16.msra.mxu0 %v545
    %2641 = vmatpush.bf16.msra.mxu0 %v539
    %2642 = vmatpush.bf16.msra.mxu0 %v533
    %2643 = vmatpush.bf16.msra.mxu0 %v527
    %2644 = vmatmul.bf16.gmra.mxu0 %v2565
    %v2645 = vpop.f32.mrf.mxu0
    %v2646 = vadd.f32 %v2633, %v2645
    %v2647 = vpop.f32.mrf.mxu0
    %2648 = vdwg.mxu0
    %2649 = vmatpush.bf16.msra.mxu0 %v522
    %2650 = vmatpush.bf16.msra.mxu0 %v516
    %2651 = vmatpush.bf16.msra.mxu0 %v510
    %2652 = vmatpush.bf16.msra.mxu0 %v504
    %2653 = vmatpush.bf16.msra.mxu0 %v498
    %2654 = vmatpush.bf16.msra.mxu0 %v492
    %2655 = vmatpush.bf16.msra.mxu0 %v486
    %2656 = vmatpush.bf16.msra.mxu0 %v480
    %2657 = vmatmul.bf16.gmra.mxu0 %v2562
    %v2658 = vpop.f32.mrf.mxu0
    %v2659 = vadd.f32 0.0, %v2658
    %v2660 = vpop.f32.mrf.mxu0
    %2661 = vdwg.mxu0
    %2662 = vmatpush.bf16.msra.mxu0 %v570
    %2663 = vmatpush.bf16.msra.mxu0 %v564
    %2664 = vmatpush.bf16.msra.mxu0 %v558
    %2665 = vmatpush.bf16.msra.mxu0 %v552
    %2666 = vmatpush.bf16.msra.mxu0 %v546
    %2667 = vmatpush.bf16.msra.mxu0 %v540
    %2668 = vmatpush.bf16.msra.mxu0 %v534
    %2669 = vmatpush.bf16.msra.mxu0 %v528
    %2670 = vmatmul.bf16.gmra.mxu0 %v2565
    %v2671 = vpop.f32.mrf.mxu0
    %v2672 = vadd.f32 %v2659, %v2671
    %v2673 = vpop.f32.mrf.mxu0
    %2674 = vdwg.mxu0
    %2675 = vmatpush.bf16.msra.mxu0 %v523
    %2676 = vmatpush.bf16.msra.mxu0 %v517
    %2677 = vmatpush.bf16.msra.mxu0 %v511
    %2678 = vmatpush.bf16.msra.mxu0 %v505
    %2679 = vmatpush.bf16.msra.mxu0 %v499
    %2680 = vmatpush.bf16.msra.mxu0 %v493
    %2681 = vmatpush.bf16.msra.mxu0 %v487
    %2682 = vmatpush.bf16.msra.mxu0 %v481
    %2683 = vmatmul.bf16.gmra.mxu0 %v2562
    %v2684 = vpop.f32.mrf.mxu0
    %v2685 = vadd.f32 0.0, %v2684
    %v2686 = vpop.f32.mrf.mxu0
    %2687 = vdwg.mxu0
    %2688 = vmatpush.bf16.msra.mxu0 %v571
    %2689 = vmatpush.bf16.msra.mxu0 %v565
    %2690 = vmatpush.bf16.msra.mxu0 %v559
    %2691 = vmatpush.bf16.msra.mxu0 %v553
    %2692 = vmatpush.bf16.msra.mxu0 %v547
    %2693 = vmatpush.bf16.msra.mxu0 %v541
    %2694 = vmatpush.bf16.msra.mxu0 %v535
    %2695 = vmatpush.bf16.msra.mxu0 %v529
    %2696 = vmatmul.bf16.gmra.mxu0 %v2565
    %v2697 = vpop.f32.mrf.mxu0
    %v2698 = vadd.f32 %v2685, %v2697
    %v2699 = vpop.f32.mrf.mxu0
    %2700 = vdwg.mxu0
    %2701 = vmatpush.bf16.msra.mxu0 %v524
    %2702 = vmatpush.bf16.msra.mxu0 %v518
    %2703 = vmatpush.bf16.msra.mxu0 %v512
    %2704 = vmatpush.bf16.msra.mxu0 %v506
    %2705 = vmatpush.bf16.msra.mxu0 %v500
    %2706 = vmatpush.bf16.msra.mxu0 %v494
    %2707 = vmatpush.bf16.msra.mxu0 %v488
    %2708 = vmatpush.bf16.msra.mxu0 %v482
    %2709 = vmatmul.bf16.gmra.mxu0 %v2562
    %v2710 = vpop.f32.mrf.mxu0
    %v2711 = vadd.f32 0.0, %v2710
    %v2712 = vpop.f32.mrf.mxu0
    %2713 = vdwg.mxu0
    %2714 = vmatpush.bf16.msra.mxu0 %v572
    %2715 = vmatpush.bf16.msra.mxu0 %v566
    %2716 = vmatpush.bf16.msra.mxu0 %v560
    %2717 = vmatpush.bf16.msra.mxu0 %v554
    %2718 = vmatpush.bf16.msra.mxu0 %v548
    %2719 = vmatpush.bf16.msra.mxu0 %v542
    %2720 = vmatpush.bf16.msra.mxu0 %v536
    %2721 = vmatpush.bf16.msra.mxu0 %v530
    %2722 = vmatmul.bf16.gmra.mxu0 %v2565
    %v2723 = vpop.f32.mrf.mxu0
    %v2724 = vadd.f32 %v2711, %v2723
    %v2725 = vpop.f32.mrf.mxu0
    %2726 = vdwg.mxu0
    %v2727 = vunpack.c.l.bf16 %v2569
    %v2728 = vadd.f32 %v2727, %v2594
    %v2729 = vxor.u32 %v2728, 2147483648
    %v2730 = vmul.f32 %v2729, 1.442695
    %v2731 = vpow.pop %v2730
    %v2732 = vadd.f32 %v2731, 1.0
    %v2733 = vrcp.pop %v2732
    %v2734 = vmul.f32 %v2732, %v2733
    %v2735 = vsub.f32 1.0, %v2734
    %v2736 = vmul.f32 %v2733, %v2735
    %v2737 = vadd.f32 %v2733, %v2736
    %vm2738 = vweird.f32 %v2732
    %vm2739 = vweird.f32 %v2733
    %vm2740 = vmor %vm2738, %vm2739
    %v2741 = vsel %vm2740, %v2733, %v2737
    %v2742 = vand.u32 2147483647, %v2732
    %vm2743 = vcmp.eq.f32.partialorder %v2742, 8.507059e+37
    %v2744 = vand.u32 %v2732, 2147483648
    %v2745 = vor.u32 1.1754944e-38, %v2744
    %v2746 = vsel %vm2743, %v2745, %v2741
    %v2747 = vmul.f32 1.0, %v2746
    %v2749 = vrot.slane %v2727, 2
    %v2751 = vadd.f32 %v2749, %v2620
    %v2752 = vxor.u32 %v2751, 2147483648
    %v2753 = vmul.f32 %v2752, 1.442695
    %v2754 = vpow.pop %v2753
    %v2755 = vadd.f32 %v2754, 1.0
    %v2756 = vrcp.pop %v2755
    %v2757 = vmul.f32 %v2755, %v2756
    %v2758 = vsub.f32 1.0, %v2757
    %v2759 = vmul.f32 %v2756, %v2758
    %v2760 = vadd.f32 %v2756, %v2759
    %vm2761 = vweird.f32 %v2755
    %vm2762 = vweird.f32 %v2756
    %vm2763 = vmor %vm2761, %vm2762
    %v2764 = vsel %vm2763, %v2756, %v2760
    %v2765 = vand.u32 2147483647, %v2755
    %vm2766 = vcmp.eq.f32.partialorder %v2765, 8.507059e+37
    %v2767 = vand.u32 %v2755, 2147483648
    %v2768 = vor.u32 1.1754944e-38, %v2767
    %v2769 = vsel %vm2766, %v2768, %v2764
    %v2770 = vmul.f32 1.0, %v2769
    %v2771 = vadd.f32 %v2646, %v176
    %v2772 = vmul.f32 %v2747, %v2771
    %v2773 = vrot.slane %v2727, 4
    %v2775 = vadd.f32 %v2773, %v2772
    %v2776 = vtanh.pop %v2775
    %v2777 = vsub.f32 %v2508, %v2776
    %v2778 = vmul.f32 %v2770, %v2777
    %v2779 = vadd.f32 %v2776, %v2778
    %v2780 = vunpack.c.l.bf16 %v2570
    %v2781 = vadd.f32 %v2780, %v2672
    %v2782 = vxor.u32 %v2781, 2147483648
    %v2783 = vmul.f32 %v2782, 1.442695
    %v2784 = vpow.pop %v2783
    %v2785 = vadd.f32 %v2784, 1.0
    %v2786 = vrcp.pop %v2785
    %v2787 = vmul.f32 %v2785, %v2786
    %v2788 = vsub.f32 1.0, %v2787
    %v2789 = vmul.f32 %v2786, %v2788
    %v2790 = vadd.f32 %v2786, %v2789
    %vm2791 = vweird.f32 %v2785
    %vm2792 = vweird.f32 %v2786
    %vm2793 = vmor %vm2791, %vm2792
    %v2794 = vsel %vm2793, %v2786, %v2790
    %v2795 = vand.u32 2147483647, %v2785
    %vm2796 = vcmp.eq.f32.partialorder %v2795, 8.507059e+37
    %v2797 = vand.u32 %v2785, 2147483648
    %v2798 = vor.u32 1.1754944e-38, %v2797
    %v2799 = vsel %vm2796, %v2798, %v2794
    %v2800 = vmul.f32 1.0, %v2799
    %v2802 = vrot.slane %v2780, 2
    %v2804 = vadd.f32 %v2802, %v2698
    %v2805 = vxor.u32 %v2804, 2147483648
    %v2806 = vmul.f32 %v2805, 1.442695
    %v2807 = vpow.pop %v2806
    %v2808 = vadd.f32 %v2807, 1.0
    %v2809 = vrcp.pop %v2808
    %v2810 = vmul.f32 %v2808, %v2809
    %v2811 = vsub.f32 1.0, %v2810
    %v2812 = vmul.f32 %v2809, %v2811
    %v2813 = vadd.f32 %v2809, %v2812
    %vm2814 = vweird.f32 %v2808
    %vm2815 = vweird.f32 %v2809
    %vm2816 = vmor %vm2814, %vm2815
    %v2817 = vsel %vm2816, %v2809, %v2813
    %v2818 = vand.u32 2147483647, %v2808
    %vm2819 = vcmp.eq.f32.partialorder %v2818, 8.507059e+37
    %v2820 = vand.u32 %v2808, 2147483648
    %v2821 = vor.u32 1.1754944e-38, %v2820
    %v2822 = vsel %vm2819, %v2821, %v2817
    %v2823 = vmul.f32 1.0, %v2822
    %v2824 = vadd.f32 %v2724, %v180
    %v2825 = vmul.f32 %v2800, %v2824
    %v2826 = vrot.slane %v2780, 4
    %v2828 = vadd.f32 %v2826, %v2825
    %v2829 = vtanh.pop %v2828
    %v2830 = vsub.f32 %v2561, %v2829
    %v2831 = vmul.f32 %v2823, %v2830
    %v2832 = vadd.f32 %v2829, %v2831
    %v2833 = vpack.c.bf16 %v2779, %v2779
    %s2834 = scalar_lea.vmem %s5, 7
    %2835 = vst [vmem:[%s2834] sm:$0x1] %v2833
    %v2836 = vpack.c.bf16 %v2832, %v2832
    %2837 = vst [vmem:[%s69] sm:$0x1] %v2836
    %2838 = vst [vmem:[#allocation2] sm:$0x3] %v2779
    %2839 = vst [vmem:[#allocation3] sm:$0x3] %v2832
    %s2840 = ssub.s32 0, 0
    %s2841 = smul.u32 8, %s2840
    %p2842 = scmp.lt.s32.totalorder %s2841, 7
    %s2843 = scalar_select %p2842, %s2841, 7
    %s2844 = scalar_lea.vmem %s6, %s2843
    // Predicated region
    $region30: #{stackedbigru_forward.10} parent=1 // pred_check
      _
    $region31: #{stackedbigru_forward.10} parent=1 // pred_check_branch
      %2846 = sbr.rel (0) target = $region33
    $region32: #{stackedbigru_forward.10} parent=1 // pred_region
      _
    $region33: #{stackedbigru_forward.10} parent=1 // pred_fallthru
      _
    // Predicated region
    $region34: #{stackedbigru_forward.10} parent=1 // pred_check
      _
    $region35: #{stackedbigru_forward.10} parent=1 // pred_check_branch
      %2848 = sbr.rel (0) target = $region37
    $region36: #{stackedbigru_forward.10} parent=1 // pred_region
      %s2849 = ssub.s32 0, 0
      %s2850 = smul.u32 8, %s2849
    $region37: #{stackedbigru_forward.10} parent=1 // pred_fallthru
      _
    // Predicated region
    $region38: #{stackedbigru_forward.10} parent=1 // pred_check
      _
    $region39: #{stackedbigru_forward.10} parent=1 // pred_check_branch
      %2852 = sbr.rel (0) target = $region41
    $region40: #{stackedbigru_forward.10} parent=1 // pred_region
      _
    $region41: #{stackedbigru_forward.10} parent=1 // pred_fallthru
      _
    // Predicated region
    $region42: #{stackedbigru_forward.10} parent=1 // pred_check
      _
    $region43: #{stackedbigru_forward.10} parent=1 // pred_check_branch
      %2854 = sbr.rel (0) target = $region45
    $region44: #{stackedbigru_forward.10} parent=1 // pred_region
      %s2855 = ssub.s32 0, 0
      %s2856 = smul.u32 8, %s2855
      %p2857 = scmp.lt.s32.totalorder %s2856, 7
      %s2858 = scalar_select %p2857, %s2856, 7
      %s2859 = scalar_lea.vmem %s6, %s2858
    $region45: #{stackedbigru_forward.10} parent=1 // pred_fallthru
      _
    %2860 = vsyncpa [#allocation5], 1

</llo_original>
